<compile_context>
chip_gen: v6e
topology: v6e:2x2x1
jax: 0.10.0
libtpu: 0.0.40
codegen_flags: <defaults>
</compile_context>

<pallas_src>
import math

import numpy as np
import jax
import jax.numpy as jnp
from jax.experimental import pallas as pl
from jax.experimental.pallas import tpu as pltpu


# ----------------------------- VMEM budget -----------------------------------

def _vmem_budget():
    """85% of the chip's VMEM capacity (falls back to v7x's 64 MiB)."""
    cap = None
    try:
        info = pltpu.get_tpu_info()
        cap = getattr(info, "vmem_capacity_bytes", None)
    except Exception:
        cap = None
    if not cap or cap <= 0:
        cap = 64 * 1024 * 1024
    return int(cap * 0.85)


# ----------------------------- tile selection ---------------------------------

def _divisor_tile(n, target, quantum):
    """Largest multiple of `quantum` <= target dividing n, else n (full dim)."""
    if n <= target or n % quantum:
        return n
    t = (min(target, n) // quantum) * quantum
    while t >= quantum:
        if n % t == 0:
            return t
        t -= quantum
    return n


def _pick_token_tile(seq, batch, dim_model, vmem_budget):
    target = 512
    # keep the three f32 q/k/v accumulators + a few (ts, D) temporaries modest
    per_row_bytes = 8 * dim_model * 4
    cap = int(0.25 * vmem_budget / max(per_row_bytes, 1)) // 8 * 8
    target = min(target, max(8, cap))
    if batch == 1 and seq >= 16:
        # v7x has 2 TensorCores: make sure a parallel grid axis has >= 2 steps
        target = min(target, max(8, (seq // 2) // 8 * 8))
    return _divisor_tile(seq, target, 8)


def _pick_weight_k_tile(dim_model, itemsize, vmem_budget, forced=None):
    """Full-D resident weights if they fit comfortably, else stream K panels."""
    if forced is not None:
        assert dim_model % forced == 0
        return forced
    if 3 * dim_model * dim_model * itemsize <= 0.4 * vmem_budget:
        return dim_model
    target = max(128,
                 int(0.3 * vmem_budget / (6 * dim_model * itemsize)) // 128 * 128)
    # TODO(synk): if dim_model is not a multiple of 128 this falls back to the
    #             full (possibly oversized) panel.
    return _divisor_tile(dim_model, target, 128)


# ------------------- fused QKV projection + head attention --------------------

def _make_fused_kernel(num_heads, dim_qkv, has_mask, shared_qkv):
    H, Dq = num_heads, dim_qkv

    def kernel(*refs):
        accq, acck, accv = refs[-3], refs[-2], refs[-1]
        o_ref = refs[-4]
        in_refs = refs[:-4]
        if has_mask:
            m_ref = in_refs[-1]
            in_refs = in_refs[:-1]
        n_x = 1 if shared_qkv else 3
        x_refs = in_refs[:n_x]
        w_ref, b_ref = in_refs[n_x], in_refs[n_x + 1]
        seg_ref, segT_ref, fold_ref = in_refs[n_x + 2:n_x + 5]
        cdt = w_ref.dtype  # MXU operand dtype (bf16 or f32)

        kk = pl.program_id(2)

        @pl.when(kk == 0)
        def _init():
            # bias-initialize the f32 accumulators (the 1/sqrt(Dq) scale is
            # already folded into w_q / b_q on the host).
            accq[...] = jnp.broadcast_to(b_ref[0:1, :], accq.shape)
            acck[...] = jnp.broadcast_to(b_ref[1:2, :], acck.shape)
            accv[...] = jnp.broadcast_to(b_ref[2:3, :], accv.shape)

        if shared_qkv:
            xq = xk = xv = x_refs[0][0].astype(cdt)           # (ts, tk)
        else:
            xq = x_refs[0][0].astype(cdt)
            xk = x_refs[1][0].astype(cdt)
            xv = x_refs[2][0].astype(cdt)

        # one K-panel of the QKV projections: (ts, tk) x (tk, D) on the MXU,
        # f32 accumulation (weights pre-transposed on the host: no in-kernel .T)
        accq[...] += jnp.dot(xq, w_ref[0], preferred_element_type=jnp.float32)
        acck[...] += jnp.dot(xk, w_ref[1], preferred_element_type=jnp.float32)
        accv[...] += jnp.dot(xv, w_ref[2], preferred_element_type=jnp.float32)

        @pl.when(kk == pl.num_programs(2) - 1)
        def _attend():
            q = accq[...]                                     # (ts, D) f32
            k = acck[...]
            v = accv[...]
            seg = seg_ref[...]                                # (D, H) one-hot
            segT = segT_ref[...]                              # (H, D)
            fold = fold_ref[...]                              # (D, Dq)
            if has_mask:
                keep = m_ref[0] != 0.0                        # (ts, 1) bool

            ctx = []
            for h in range(H):
                q_h = q[:, h * Dq:(h + 1) * Dq]               # (ts, Dq)
                q_rep = jnp.concatenate([q_h] * H, axis=-1)   # (ts, D)
                # head-segment reduction on the MXU instead of H^2 narrow
                # cross-lane (XLU) reductions:
                s_h = jnp.dot(q_rep * k, seg,
                              preferred_element_type=jnp.float32)   # (ts, H)
                if has_mask:
                    # reference masked_fill semantics: a fully-masked token row
                    # softmaxes to uniform 1/H (NOT an additive-bias no-op).
                    s_h = jnp.where(keep, s_h, -1000000000.0)
                # softmax over the head axis (f32, EUP exp + approx reciprocal)
                s_h = s_h - jnp.max(s_h, axis=-1, keepdims=True)
                e_h = jnp.exp(s_h)
                p_h = e_h * pl.reciprocal(
                    jnp.sum(e_h, axis=-1, keepdims=True), approx=True)
                # expand p over each head's Dq lanes and fold back: MXU again
                p_exp = jnp.dot(p_h, segT,
                                preferred_element_type=jnp.float32)  # (ts, D)
                ctx.append(jnp.dot(p_exp * v, fold,
                                   preferred_element_type=jnp.float32))

            # single store in (B, H, S, Dq) layout: this IS the reference's
            # x.transpose(1, 2).contiguous(); the later .view() is a free
            # host-side reshape.
            o_ref[0] = jnp.stack(ctx, axis=0).astype(o_ref.dtype)

    return kernel


def fused_qkv_head_attention(query, key_in, value, wT_qkv, b_qkv, seg, segT,
                             fold, mask3, num_heads, out_dtype, vmem_budget,
                             weight_k_tile=None):
    """query/key/value: (B, S, D); wT_qkv: (3, D, D) pre-transposed (compute
    dtype, 1/sqrt(Dq) folded into q); b_qkv: (3, D) f32; seg/segT/fold: one-hot
    head-segment matrices; mask3: (B, S, 1) f32 or None.
    Returns the attention output in (B, H, S, Dq) layout, dtype `out_dtype`."""
    B, S, D = query.shape
    H = num_heads
    Dq = D // H
    ts = _pick_token_tile(S, B, D, vmem_budget)
    w_bytes = int(wT_qkv.dtype.itemsize)
    tk = _pick_weight_k_tile(D, w_bytes, vmem_budget, forced=weight_k_tile)
    n_k = D // tk
    shared = (key_in is query) and (value is query)
    has_mask = mask3 is not None
    n_x = 1 if shared else 3

    kernel = _make_fused_kernel(H, Dq, has_mask, shared)

    x_bytes = int(query.dtype.itemsize)
    o_bytes = int(np.dtype(out_dtype).itemsize)
    flops = int(6 * B * S * D * D + 2 * B * S * H * D * (2 * H + Dq))
    bytes_accessed = int(n_x * B * S * D * x_bytes
                         + 3 * D * D * w_bytes
                         + B * S * D * o_bytes
                         + (B * S * 4 if has_mask else 0))

    def build(single_buffer):
        def resident(shape, imap):
            # constant-index blocks do not need double buffering
            if single_buffer:
                return pl.BlockSpec(shape, imap, pipeline_mode=pl.Buffered(1))
            return pl.BlockSpec(shape, imap)

        x_spec = pl.BlockSpec((1, ts, tk), lambda b, s, kk: (b, s, kk))
        in_specs = [x_spec] * n_x
        if n_k == 1:
            w_spec = resident((3, D, D), lambda b, s, kk: (0, 0, 0))
        else:
            # stream (tk, D) weight panels over the arbitrary K axis
            w_spec = pl.BlockSpec((3, tk, D), lambda b, s, kk: (0, kk, 0))
        in_specs += [w_spec,
                     resident((3, D), lambda b, s, kk: (0, 0)),
                     resident((D, H), lambda b, s, kk: (0, 0)),
                     resident((H, D), lambda b, s, kk: (0, 0)),
                     resident((D, Dq), lambda b, s, kk: (0, 0))]
        if has_mask:
            in_specs.append(pl.BlockSpec((1, ts, 1), lambda b, s, kk: (b, s, 0)))

        return pl.pallas_call(
            kernel,
            out_shape=jax.ShapeDtypeStruct((B, H, S, Dq), out_dtype),
            grid=(B, S // ts, n_k),
            in_specs=in_specs,
            out_specs=pl.BlockSpec((1, H, ts, Dq), lambda b, s, kk: (b, 0, s, 0)),
            scratch_shapes=[pltpu.VMEM((ts, D), jnp.float32)] * 3,
            compiler_params=pltpu.CompilerParams(
                dimension_semantics=("parallel", "parallel", "arbitrary"),
                vmem_limit_bytes=int(vmem_budget)),
            cost_estimate=pl.CostEstimate(flops=flops,
                                          transcendentals=int(B * S * H * H),
                                          bytes_accessed=bytes_accessed),
        )

    args = ([query] if shared else [query, key_in, value])
    args += [wT_qkv, b_qkv, seg, segT, fold]
    if has_mask:
        args.append(mask3)

    try:
        return build(single_buffer=True)(*args)
    except Exception:
        # TODO(synk): fallback if this Pallas build rejects pl.Buffered(1).
        return build(single_buffer=False)(*args)


# ------------------------ tiled output projection -----------------------------

def _linear_kernel(x_ref, wT_ref, o_ref, acc_ref):
    @pl.when(pl.program_id(2) == 0)
    def _():
        acc_ref[...] = jnp.zeros_like(acc_ref)

    acc_ref[...] += jnp.dot(x_ref[...], wT_ref[...],
                            preferred_element_type=jnp.float32)

    @pl.when(pl.program_id(2) == pl.num_programs(2) - 1)
    def _():
        o_ref[...] = acc_ref[...].astype(o_ref.dtype)


def pallas_linear_nt(x2d, wT, vmem_budget):
    """x2d: (R, Din); wT: (Din, Dout) pre-transposed weight (compute dtype).
    Returns x2d @ wT in f32, tiled + pipelined with an f32 VMEM accumulator."""
    R, Din = x2d.shape
    Dout = wT.shape[1]
    x_bytes = int(x2d.dtype.itemsize)
    w_bytes = int(wT.dtype.itemsize)
    tm = _divisor_tile(R, 512, 8)
    tk = _divisor_tile(Din, 512, 128)
    # collapse the N axis when the (tm, Dout) f32 accumulator + panels fit:
    # the (R, Din) intermediate then streams from HBM exactly once.
    footprint = (tm * Dout * 4 + 2 * tm * Dout * 4
                 + 2 * tk * Dout * w_bytes + 2 * tm * tk * x_bytes)
    if footprint <= 0.7 * vmem_budget:
        tn = Dout
    else:
        tn = _divisor_tile(Dout, 512, 128)
    grid = (R // tm, Dout // tn, Din // tk)

    return pl.pallas_call(
        _linear_kernel,
        out_shape=jax.ShapeDtypeStruct((R, Dout), jnp.float32),
        grid=grid,
        in_specs=[pl.BlockSpec((tm, tk), lambda i, j, kk: (i, kk)),
                  pl.BlockSpec((tk, tn), lambda i, j, kk: (kk, j))],
        out_specs=pl.BlockSpec((tm, tn), lambda i, j, kk: (i, j)),
        scratch_shapes=[pltpu.VMEM((tm, tn), jnp.float32)],
        compiler_params=pltpu.CompilerParams(
            dimension_semantics=("parallel", "parallel", "arbitrary"),
            vmem_limit_bytes=int(vmem_budget)),
        cost_estimate=pl.CostEstimate(
            flops=int(2 * R * Din * Dout),
            transcendentals=0,
            bytes_accessed=int(R * Din * x_bytes + Din * Dout * w_bytes
                               + R * Dout * 4)),
    )(x2d, wT)


# ------------------------------- module ---------------------------------------

class MultiHeadedAttentionPallas:
    """Mirrors MultiHeadedAttention.forward (eval mode, deterministic init)."""

    def __init__(self, num_heads, dim_model, key, dropout=0.1,
                 compute_dtype=jnp.bfloat16, weight_k_tile=None):
        assert dim_model % num_heads == 0
        self.num_h = num_heads
        self.dim_model = dim_model
        self.dim_qkv = dim_model // num_heads
        self.compute_dtype = compute_dtype
        self.weight_k_tile = weight_k_tile
        self.vmem_budget = _vmem_budget()

        ks = jax.random.split(key, 7)
        bound = 1.0 / math.sqrt(dim_model)
        w = lambda k: jax.random.uniform(k, (dim_model, dim_model), jnp.float32,
                                         -bound, bound)
        b = lambda k: jax.random.uniform(k, (dim_model,), jnp.float32,
                                         -bound, bound)
        # f32 master parameters (PyTorch nn.Linear layout: [out, in])
        self.w_q, self.b_q = w(ks[0]), b(ks[1])
        self.w_k, self.b_k = w(ks[2]), b(ks[3])
        self.w_v, self.b_v = w(ks[4]), b(ks[5])
        self.w_o = w(ks[6])

        # Kernel-side copies: pre-transposed once, 1/sqrt(Dq) folded into the
        # Q weight/bias, cast once to the MXU operand dtype.
        scale = 1.0 / math.sqrt(self.dim_qkv)
        self.wT_qkv = jnp.stack([self.w_q.T * scale, self.w_k.T, self.w_v.T]
                                ).astype(compute_dtype)
        self.b_qkv = jnp.stack([self.b_q * scale, self.b_k, self.b_v])  # f32
        self.wT_o = self.w_o.T.astype(compute_dtype)

        D, H, Dq = dim_model, num_heads, self.dim_qkv
        # one-hot head-segment matrices: keep the per-token head attention's
        # reductions on the MXU instead of H^2 narrow XLU reductions.
        self.seg = jnp.repeat(jnp.eye(H, dtype=jnp.float32), Dq, axis=0)  # (D,H)
        self.segT = jnp.asarray(np.asarray(self.seg).T)                   # (H,D)
        self.fold = jnp.tile(jnp.eye(Dq, dtype=jnp.float32), (H, 1))      # (D,Dq)

    def __call__(self, query, key_in, value, mask=None):
        B, S, D = query.shape
        H = self.num_h

        mask3 = None
        if mask is not None:
            # (B, S) mask kept tiny; broadcast happens inside the kernel.
            # TODO(synk): assumes the mask's sequence length equals S.
            mask3 = mask.reshape(B, mask.shape[1], 1).astype(jnp.float32)

        # fused QKV projection + per-token head-axis attention; the bf16 path
        # also carries the inter-kernel intermediate in bf16 (HBM traffic).
        x4 = fused_qkv_head_attention(query, key_in, value, self.wT_qkv,
                                      self.b_qkv, self.seg, self.segT,
                                      self.fold, mask3, H, self.compute_dtype,
                                      self.vmem_budget,
                                      weight_k_tile=self.weight_k_tile)
        # (B, H, S, Dq) -> (B, S, D): exactly the reference's
        # transpose(1,2).contiguous().view(B, -1, H*Dq), but as a free reshape.
        x2d = x4.reshape(B * S, D)

        out = pallas_linear_nt(x2d, self.wT_o, self.vmem_budget)
        return out.reshape(B, S, D)


# --------------------------- pure-JAX reference --------------------------------

def _reference_forward(m, query, key_in, value, mask=None):
    """f32 mirror of the PyTorch forward (incl. the missing-transpose quirk)."""
    B, S, D = query.shape
    H, Dq = m.num_h, m.dim_qkv
    q = (query @ m.w_q.T + m.b_q).reshape(B, S, H, Dq)
    k = (key_in @ m.w_k.T + m.b_k).reshape(B, S, H, Dq)
    v = (value @ m.w_v.T + m.b_v).reshape(B, S, H, Dq)
    scores = jnp.einsum("bshd,bsgd->bshg", q, k) / math.sqrt(Dq)
    if mask is not None:
        m4 = jnp.broadcast_to(mask.reshape(B, S, 1, 1).astype(jnp.float32),
                              (B, S, H, H))
        scores = jnp.where(m4 == 0, -1000000000.0, scores)
    attn = jax.nn.softmax(scores, axis=-1)
    x = jnp.einsum("bshg,bsgd->bshd", attn, v)
    x = jnp.transpose(x, (0, 2, 1, 3)).reshape(B, S, D)
    return x @ m.w_o.T


if __name__ == "__main__":
    B, S, D, H = 2, 8, 32, 4
    root = jax.random.PRNGKey(0)
    k_mod, k_q, k_k, k_v, k_m, k_mod2, k_q2 = jax.random.split(root, 7)

    query = jax.random.normal(k_q, (B, S, D), jnp.float32)
    key_in = jax.random.normal(k_k, (B, S, D), jnp.float32)
    value = jax.random.normal(k_v, (B, S, D), jnp.float32)
    mask = (jax.random.uniform(k_m, (B, S)) > 0.25).astype(jnp.float32)

    # f32 compute path (tolerance covers the EUP approx-reciprocal softmax
    # denominator; semantic bugs would show O(1) errors).
    mha32 = MultiHeadedAttentionPallas(H, D, k_mod, compute_dtype=jnp.float32)

    out = jax.block_until_ready(mha32(query, key_in, value, mask=None))
    assert out.shape == (B, S, D)
    ref = _reference_forward(mha32, query, key_in, value, mask=None)
    np.testing.assert_allclose(np.asarray(out), np.asarray(ref),
                               rtol=2e-2, atol=2e-2)

    out_m = jax.block_until_ready(mha32(query, key_in, value, mask=mask))
    ref_m = _reference_forward(mha32, query, key_in, value, mask=mask)
    np.testing.assert_allclose(np.asarray(out_m), np.asarray(ref_m),
                               rtol=2e-2, atol=2e-2)

    # Shared-input (self-attention) fast path: activation read from HBM once.
    out_s = jax.block_until_ready(mha32(query, query, query, mask=None))
    ref_s = _reference_forward(mha32, query, query, query, mask=None)
    np.testing.assert_allclose(np.asarray(out_s), np.asarray(ref_s),
                               rtol=2e-2, atol=2e-2)

    # bf16 MXU-operand path (v6e/v7x): bf16 weights + bf16 inter-kernel
    # intermediate, f32 accumulation and f32 softmax.
    mha_bf16 = MultiHeadedAttentionPallas(H, D, k_mod,
                                          compute_dtype=jnp.bfloat16)
    out_b = jax.block_until_ready(mha_bf16(query, key_in, value, mask=None))
    np.testing.assert_allclose(np.asarray(out_b), np.asarray(ref),
                               rtol=5e-2, atol=5e-2)

    # K-tiled projection path (streams (tk, D) weight panels and accumulates
    # q/k/v in VMEM scratch -- the large-dim_model / v7x path), forced at a
    # small shape to exercise it.
    D2 = 256
    mha_kt = MultiHeadedAttentionPallas(H, D2, k_mod2,
                                        compute_dtype=jnp.float32,
                                        weight_k_tile=128)
    q2 = jax.random.normal(k_q2, (B, S, D2), jnp.float32)
    out_k = jax.block_until_ready(mha_kt(q2, q2, q2, mask=mask))
    ref_k = _reference_forward(mha_kt, q2, q2, q2, mask=mask)
    np.testing.assert_allclose(np.asarray(out_k), np.asarray(ref_k),
                               rtol=2e-2, atol=2e-2)

    print("KERNEL_OK")
</pallas_src>

<mosaic_0001>
module attributes {stable_mosaic.version = 11 : i64} {
  func.func @kernel(%arg0: i32, %arg1: i32, %arg2: i32, %arg3: memref<1x8x32xf32, #tpu.memory_space<vmem>>, %arg4: memref<1x8x32xf32, #tpu.memory_space<vmem>>, %arg5: memref<1x8x32xf32, #tpu.memory_space<vmem>>, %arg6: memref<3x32x32xf32, #tpu.memory_space<vmem>>, %arg7: memref<3x32xf32, #tpu.memory_space<vmem>>, %arg8: memref<32x4xf32, #tpu.memory_space<vmem>>, %arg9: memref<4x32xf32, #tpu.memory_space<vmem>>, %arg10: memref<32x8xf32, #tpu.memory_space<vmem>>, %arg11: memref<1x4x8x8xf32, #tpu.memory_space<vmem>>, %arg12: memref<8x32xf32, #tpu.memory_space<vmem>>, %arg13: memref<8x32xf32, #tpu.memory_space<vmem>>, %arg14: memref<8x32xf32, #tpu.memory_space<vmem>>) attributes {dimension_semantics = [#tpu.dimension_semantics<parallel>, #tpu.dimension_semantics<parallel>, #tpu.dimension_semantics<arbitrary>], iteration_bounds = array<i64: 2, 1, 1>, scalar_prefetch = 0 : i64, scratch_operands = 3 : i64, tpu.core_type = #tpu.core_type<tc>, window_params = [{transform_indices = @transform_0, window_bounds = array<i64: 1, 8, 32>}, {transform_indices = @transform_1, window_bounds = array<i64: 1, 8, 32>}, {transform_indices = @transform_2, window_bounds = array<i64: 1, 8, 32>}, {pipeline_mode = #tpu.pipeline_mode<synchronous>, transform_indices = @transform_3, window_bounds = array<i64: 3, 32, 32>}, {pipeline_mode = #tpu.pipeline_mode<synchronous>, transform_indices = @transform_4, window_bounds = array<i64: 3, 32>}, {pipeline_mode = #tpu.pipeline_mode<synchronous>, transform_indices = @transform_5, window_bounds = array<i64: 32, 4>}, {pipeline_mode = #tpu.pipeline_mode<synchronous>, transform_indices = @transform_6, window_bounds = array<i64: 4, 32>}, {pipeline_mode = #tpu.pipeline_mode<synchronous>, transform_indices = @transform_7, window_bounds = array<i64: 32, 8>}, {transform_indices = @transform_8, window_bounds = array<i64: 1, 4, 8, 8>}]} {
    %c0_i32 = arith.constant 0 : i32
    %0 = arith.cmpi eq, %arg2, %c0_i32 : i32
    %1 = arith.extui %0 : i1 to i32
    %c0_i32_0 = arith.constant 0 : i32
    %2 = arith.cmpi ne, %1, %c0_i32_0 : i32
    scf.if %2 {
      %c0_32 = arith.constant 0 : index
      %c0_33 = arith.constant 0 : index
      %30 = vector.load %arg7[%c0_32, %c0_33] : memref<3x32xf32, #tpu.memory_space<vmem>>, vector<1x32xf32>
      %31 = vector.shape_cast %30 : vector<1x32xf32> to vector<1x32xf32>
      %32 = vector.broadcast %31 : vector<1x32xf32> to vector<8x32xf32>
      %c0_34 = arith.constant 0 : index
      %c0_35 = arith.constant 0 : index
      %33 = vector.load %arg12[%c0_34, %c0_35] : memref<8x32xf32, #tpu.memory_space<vmem>>, vector<8x32xf32>
      tpu.vector_store %arg12[%c0_34, %c0_35], %32 {strides = array<i32>} : memref<8x32xf32, #tpu.memory_space<vmem>>, vector<8x32xf32>,
      %c1_36 = arith.constant 1 : index
      %c0_37 = arith.constant 0 : index
      %34 = vector.load %arg7[%c1_36, %c0_37] : memref<3x32xf32, #tpu.memory_space<vmem>>, vector<1x32xf32>
      %35 = vector.shape_cast %34 : vector<1x32xf32> to vector<1x32xf32>
      %36 = vector.broadcast %35 : vector<1x32xf32> to vector<8x32xf32>
      %c0_38 = arith.constant 0 : index
      %c0_39 = arith.constant 0 : index
      %37 = vector.load %arg13[%c0_38, %c0_39] : memref<8x32xf32, #tpu.memory_space<vmem>>, vector<8x32xf32>
      tpu.vector_store %arg13[%c0_38, %c0_39], %36 {strides = array<i32>} : memref<8x32xf32, #tpu.memory_space<vmem>>, vector<8x32xf32>,
      %c2_40 = arith.constant 2 : index
      %c0_41 = arith.constant 0 : index
      %38 = vector.load %arg7[%c2_40, %c0_41] : memref<3x32xf32, #tpu.memory_space<vmem>>, vector<1x32xf32>
      %39 = vector.shape_cast %38 : vector<1x32xf32> to vector<1x32xf32>
      %40 = vector.broadcast %39 : vector<1x32xf32> to vector<8x32xf32>
      %c0_42 = arith.constant 0 : index
      %c0_43 = arith.constant 0 : index
      %41 = vector.load %arg14[%c0_42, %c0_43] : memref<8x32xf32, #tpu.memory_space<vmem>>, vector<8x32xf32>
      tpu.vector_store %arg14[%c0_42, %c0_43], %40 {strides = array<i32>} : memref<8x32xf32, #tpu.memory_space<vmem>>, vector<8x32xf32>,
    } else {
    }
    %c0 = arith.constant 0 : index
    %c0_1 = arith.constant 0 : index
    %c0_2 = arith.constant 0 : index
    %3 = vector.load %arg3[%c0, %c0_1, %c0_2] : memref<1x8x32xf32, #tpu.memory_space<vmem>>, vector<1x8x32xf32>
    %4 = vector.shape_cast %3 : vector<1x8x32xf32> to vector<8x32xf32>
    %c0_3 = arith.constant 0 : index
    %c0_4 = arith.constant 0 : index
    %c0_5 = arith.constant 0 : index
    %5 = vector.load %arg4[%c0_3, %c0_4, %c0_5] : memref<1x8x32xf32, #tpu.memory_space<vmem>>, vector<1x8x32xf32>
    %6 = vector.shape_cast %5 : vector<1x8x32xf32> to vector<8x32xf32>
    %c0_6 = arith.constant 0 : index
    %c0_7 = arith.constant 0 : index
    %c0_8 = arith.constant 0 : index
    %7 = vector.load %arg5[%c0_6, %c0_7, %c0_8] : memref<1x8x32xf32, #tpu.memory_space<vmem>>, vector<1x8x32xf32>
    %8 = vector.shape_cast %7 : vector<1x8x32xf32> to vector<8x32xf32>
    %c0_9 = arith.constant 0 : index
    %c0_10 = arith.constant 0 : index
    %9 = vector.load %arg12[%c0_9, %c0_10] : memref<8x32xf32, #tpu.memory_space<vmem>>, vector<8x32xf32>
    %c0_11 = arith.constant 0 : index
    %c0_12 = arith.constant 0 : index
    %c0_13 = arith.constant 0 : index
    %10 = vector.load %arg6[%c0_11, %c0_12, %c0_13] : memref<3x32x32xf32, #tpu.memory_space<vmem>>, vector<1x32x32xf32>
    %11 = vector.shape_cast %10 : vector<1x32x32xf32> to vector<32x32xf32>
    %cst = arith.constant dense<0.000000e+00> : vector<8x32xf32>
    %12 = tpu.matmul %4, %11, %cst {dimension_numbers = #tpu.dot_dimension_numbers<[1], [0], [0], [1], [0, 0, 1, 1], [], []>} : vector<8x32xf32>, vector<32x32xf32>, vector<8x32xf32> -> vector<8x32xf32>
    %13 = arith.addf %9, %12 : vector<8x32xf32>
    %c0_14 = arith.constant 0 : index
    %c0_15 = arith.constant 0 : index
    %14 = vector.load %arg12[%c0_14, %c0_15] : memref<8x32xf32, #tpu.memory_space<vmem>>, vector<8x32xf32>
    tpu.vector_store %arg12[%c0_14, %c0_15], %13 {strides = array<i32>} : memref<8x32xf32, #tpu.memory_space<vmem>>, vector<8x32xf32>,
    %c0_16 = arith.constant 0 : index
    %c0_17 = arith.constant 0 : index
    %15 = vector.load %arg13[%c0_16, %c0_17] : memref<8x32xf32, #tpu.memory_space<vmem>>, vector<8x32xf32>
    %c1 = arith.constant 1 : index
    %c0_18 = arith.constant 0 : index
    %c0_19 = arith.constant 0 : index
    %16 = vector.load %arg6[%c1, %c0_18, %c0_19] : memref<3x32x32xf32, #tpu.memory_space<vmem>>, vector<1x32x32xf32>
    %17 = vector.shape_cast %16 : vector<1x32x32xf32> to vector<32x32xf32>
    %cst_20 = arith.constant dense<0.000000e+00> : vector<8x32xf32>
    %18 = tpu.matmul %6, %17, %cst_20 {dimension_numbers = #tpu.dot_dimension_numbers<[1], [0], [0], [1], [0, 0, 1, 1], [], []>} : vector<8x32xf32>, vector<32x32xf32>, vector<8x32xf32> -> vector<8x32xf32>
    %19 = arith.addf %15, %18 : vector<8x32xf32>
    %c0_21 = arith.constant 0 : index
    %c0_22 = arith.constant 0 : index
    %20 = vector.load %arg13[%c0_21, %c0_22] : memref<8x32xf32, #tpu.memory_space<vmem>>, vector<8x32xf32>
    tpu.vector_store %arg13[%c0_21, %c0_22], %19 {strides = array<i32>} : memref<8x32xf32, #tpu.memory_space<vmem>>, vector<8x32xf32>,
    %c0_23 = arith.constant 0 : index
    %c0_24 = arith.constant 0 : index
    %21 = vector.load %arg14[%c0_23, %c0_24] : memref<8x32xf32, #tpu.memory_space<vmem>>, vector<8x32xf32>
    %c2 = arith.constant 2 : index
    %c0_25 = arith.constant 0 : index
    %c0_26 = arith.constant 0 : index
    %22 = vector.load %arg6[%c2, %c0_25, %c0_26] : memref<3x32x32xf32, #tpu.memory_space<vmem>>, vector<1x32x32xf32>
    %23 = vector.shape_cast %22 : vector<1x32x32xf32> to vector<32x32xf32>
    %cst_27 = arith.constant dense<0.000000e+00> : vector<8x32xf32>
    %24 = tpu.matmul %8, %23, %cst_27 {dimension_numbers = #tpu.dot_dimension_numbers<[1], [0], [0], [1], [0, 0, 1, 1], [], []>} : vector<8x32xf32>, vector<32x32xf32>, vector<8x32xf32> -> vector<8x32xf32>
    %25 = arith.addf %21, %24 : vector<8x32xf32>
    %c0_28 = arith.constant 0 : index
    %c0_29 = arith.constant 0 : index
    %26 = vector.load %arg14[%c0_28, %c0_29] : memref<8x32xf32, #tpu.memory_space<vmem>>, vector<8x32xf32>
    tpu.vector_store %arg14[%c0_28, %c0_29], %25 {strides = array<i32>} : memref<8x32xf32, #tpu.memory_space<vmem>>, vector<8x32xf32>,
    %c0_i32_30 = arith.constant 0 : i32
    %27 = arith.cmpi eq, %arg2, %c0_i32_30 : i32
    %28 = arith.extui %27 : i1 to i32
    %c0_i32_31 = arith.constant 0 : i32
    %29 = arith.cmpi ne, %28, %c0_i32_31 : i32
    scf.if %29 {
      %c0_32 = arith.constant 0 : index
      %c0_33 = arith.constant 0 : index
      %30 = vector.load %arg12[%c0_32, %c0_33] : memref<8x32xf32, #tpu.memory_space<vmem>>, vector<8x32xf32>
      %c0_34 = arith.constant 0 : index
      %c0_35 = arith.constant 0 : index
      %31 = vector.load %arg13[%c0_34, %c0_35] : memref<8x32xf32, #tpu.memory_space<vmem>>, vector<8x32xf32>
      %c0_36 = arith.constant 0 : index
      %c0_37 = arith.constant 0 : index
      %32 = vector.load %arg14[%c0_36, %c0_37] : memref<8x32xf32, #tpu.memory_space<vmem>>, vector<8x32xf32>
      %c0_38 = arith.constant 0 : index
      %c0_39 = arith.constant 0 : index
      %33 = vector.load %arg8[%c0_38, %c0_39] : memref<32x4xf32, #tpu.memory_space<vmem>>, vector<32x4xf32>
      %c0_40 = arith.constant 0 : index
      %c0_41 = arith.constant 0 : index
      %34 = vector.load %arg9[%c0_40, %c0_41] : memref<4x32xf32, #tpu.memory_space<vmem>>, vector<4x32xf32>
      %c0_42 = arith.constant 0 : index
      %c0_43 = arith.constant 0 : index
      %35 = vector.load %arg10[%c0_42, %c0_43] : memref<32x8xf32, #tpu.memory_space<vmem>>, vector<32x8xf32>
      %36 = vector.extract_strided_slice %30 {offsets = [0, 0], sizes = [8, 8], strides = [1, 1]} : vector<8x32xf32> to vector<8x8xf32>
      %37 = tpu.concatenate %36, %36, %36, %36 in 1 : vector<8x8xf32>, vector<8x8xf32>, vector<8x8xf32>, vector<8x8xf32> -> vector<8x32xf32>
      %38 = arith.mulf %37, %31 : vector<8x32xf32>
      %cst_44 = arith.constant dense<0.000000e+00> : vector<8x4xf32>
      %39 = tpu.matmul %38, %33, %cst_44 {dimension_numbers = #tpu.dot_dimension_numbers<[1], [0], [0], [1], [0, 0, 1, 1], [], []>} : vector<8x32xf32>, vector<32x4xf32>, vector<8x4xf32> -> vector<8x4xf32>
      %cst_45 = arith.constant dense<0xFF800000> : vector<8xf32>
      %40 = vector.multi_reduction <maximumf>, %39, %cst_45 [1] : vector<8x4xf32> to vector<8xf32>
      %41 = vector.shape_cast %40 : vector<8xf32> to vector<8x1xf32>
      %42 = vector.broadcast %41 : vector<8x1xf32> to vector<8x4xf32>
      %43 = arith.subf %39, %42 : vector<8x4xf32>
      %44 = math.exp %43 : vector<8x4xf32>
      %cst_46 = arith.constant dense<0.000000e+00> : vector<8xf32>
      %45 = vector.multi_reduction <add>, %44, %cst_46 [1] : vector<8x4xf32> to vector<8xf32>
      %46 = vector.shape_cast %45 : vector<8xf32> to vector<8x1xf32>
      %47 = tpu.reciprocal %46 {approx = true} : vector<8x1xf32> -> vector<8x1xf32>
      %48 = vector.broadcast %47 : vector<8x1xf32> to vector<8x4xf32>
      %49 = arith.mulf %44, %48 : vector<8x4xf32>
      %cst_47 = arith.constant dense<0.000000e+00> : vector<8x32xf32>
      %50 = tpu.matmul %49, %34, %cst_47 {dimension_numbers = #tpu.dot_dimension_numbers<[1], [0], [0], [1], [0, 0, 1, 1], [], []>} : vector<8x4xf32>, vector<4x32xf32>, vector<8x32xf32> -> vector<8x32xf32>
      %51 = arith.mulf %50, %32 : vector<8x32xf32>
      %cst_48 = arith.constant dense<0.000000e+00> : vector<8x8xf32>
      %52 = tpu.matmul %51, %35, %cst_48 {dimension_numbers = #tpu.dot_dimension_numbers<[1], [0], [0], [1], [0, 0, 1, 1], [], []>} : vector<8x32xf32>, vector<32x8xf32>, vector<8x8xf32> -> vector<8x8xf32>
      %53 = vector.extract_strided_slice %30 {offsets = [0, 8], sizes = [8, 8], strides = [1, 1]} : vector<8x32xf32> to vector<8x8xf32>
      %54 = tpu.concatenate %53, %53, %53, %53 in 1 : vector<8x8xf32>, vector<8x8xf32>, vector<8x8xf32>, vector<8x8xf32> -> vector<8x32xf32>
      %55 = arith.mulf %54, %31 : vector<8x32xf32>
      %cst_49 = arith.constant dense<0.000000e+00> : vector<8x4xf32>
      %56 = tpu.matmul %55, %33, %cst_49 {dimension_numbers = #tpu.dot_dimension_numbers<[1], [0], [0], [1], [0, 0, 1, 1], [], []>} : vector<8x32xf32>, vector<32x4xf32>, vector<8x4xf32> -> vector<8x4xf32>
      %cst_50 = arith.constant dense<0xFF800000> : vector<8xf32>
      %57 = vector.multi_reduction <maximumf>, %56, %cst_50 [1] : vector<8x4xf32> to vector<8xf32>
      %58 = vector.shape_cast %57 : vector<8xf32> to vector<8x1xf32>
      %59 = vector.broadcast %58 : vector<8x1xf32> to vector<8x4xf32>
      %60 = arith.subf %56, %59 : vector<8x4xf32>
      %61 = math.exp %60 : vector<8x4xf32>
      %cst_51 = arith.constant dense<0.000000e+00> : vector<8xf32>
      %62 = vector.multi_reduction <add>, %61, %cst_51 [1] : vector<8x4xf32> to vector<8xf32>
      %63 = vector.shape_cast %62 : vector<8xf32> to vector<8x1xf32>
      %64 = tpu.reciprocal %63 {approx = true} : vector<8x1xf32> -> vector<8x1xf32>
      %65 = vector.broadcast %64 : vector<8x1xf32> to vector<8x4xf32>
      %66 = arith.mulf %61, %65 : vector<8x4xf32>
      %cst_52 = arith.constant dense<0.000000e+00> : vector<8x32xf32>
      %67 = tpu.matmul %66, %34, %cst_52 {dimension_numbers = #tpu.dot_dimension_numbers<[1], [0], [0], [1], [0, 0, 1, 1], [], []>} : vector<8x4xf32>, vector<4x32xf32>, vector<8x32xf32> -> vector<8x32xf32>
      %68 = arith.mulf %67, %32 : vector<8x32xf32>
      %cst_53 = arith.constant dense<0.000000e+00> : vector<8x8xf32>
      %69 = tpu.matmul %68, %35, %cst_53 {dimension_numbers = #tpu.dot_dimension_numbers<[1], [0], [0], [1], [0, 0, 1, 1], [], []>} : vector<8x32xf32>, vector<32x8xf32>, vector<8x8xf32> -> vector<8x8xf32>
      %70 = vector.extract_strided_slice %30 {offsets = [0, 16], sizes = [8, 8], strides = [1, 1]} : vector<8x32xf32> to vector<8x8xf32>
      %71 = tpu.concatenate %70, %70, %70, %70 in 1 : vector<8x8xf32>, vector<8x8xf32>, vector<8x8xf32>, vector<8x8xf32> -> vector<8x32xf32>
      %72 = arith.mulf %71, %31 : vector<8x32xf32>
      %cst_54 = arith.constant dense<0.000000e+00> : vector<8x4xf32>
      %73 = tpu.matmul %72, %33, %cst_54 {dimension_numbers = #tpu.dot_dimension_numbers<[1], [0], [0], [1], [0, 0, 1, 1], [], []>} : vector<8x32xf32>, vector<32x4xf32>, vector<8x4xf32> -> vector<8x4xf32>
      %cst_55 = arith.constant dense<0xFF800000> : vector<8xf32>
      %74 = vector.multi_reduction <maximumf>, %73, %cst_55 [1] : vector<8x4xf32> to vector<8xf32>
      %75 = vector.shape_cast %74 : vector<8xf32> to vector<8x1xf32>
      %76 = vector.broadcast %75 : vector<8x1xf32> to vector<8x4xf32>
      %77 = arith.subf %73, %76 : vector<8x4xf32>
      %78 = math.exp %77 : vector<8x4xf32>
      %cst_56 = arith.constant dense<0.000000e+00> : vector<8xf32>
      %79 = vector.multi_reduction <add>, %78, %cst_56 [1] : vector<8x4xf32> to vector<8xf32>
      %80 = vector.shape_cast %79 : vector<8xf32> to vector<8x1xf32>
      %81 = tpu.reciprocal %80 {approx = true} : vector<8x1xf32> -> vector<8x1xf32>
      %82 = vector.broadcast %81 : vector<8x1xf32> to vector<8x4xf32>
      %83 = arith.mulf %78, %82 : vector<8x4xf32>
      %cst_57 = arith.constant dense<0.000000e+00> : vector<8x32xf32>
      %84 = tpu.matmul %83, %34, %cst_57 {dimension_numbers = #tpu.dot_dimension_numbers<[1], [0], [0], [1], [0, 0, 1, 1], [], []>} : vector<8x4xf32>, vector<4x32xf32>, vector<8x32xf32> -> vector<8x32xf32>
      %85 = arith.mulf %84, %32 : vector<8x32xf32>
      %cst_58 = arith.constant dense<0.000000e+00> : vector<8x8xf32>
      %86 = tpu.matmul %85, %35, %cst_58 {dimension_numbers = #tpu.dot_dimension_numbers<[1], [0], [0], [1], [0, 0, 1, 1], [], []>} : vector<8x32xf32>, vector<32x8xf32>, vector<8x8xf32> -> vector<8x8xf32>
      %87 = vector.extract_strided_slice %30 {offsets = [0, 24], sizes = [8, 8], strides = [1, 1]} : vector<8x32xf32> to vector<8x8xf32>
      %88 = tpu.concatenate %87, %87, %87, %87 in 1 : vector<8x8xf32>, vector<8x8xf32>, vector<8x8xf32>, vector<8x8xf32> -> vector<8x32xf32>
      %89 = arith.mulf %88, %31 : vector<8x32xf32>
      %cst_59 = arith.constant dense<0.000000e+00> : vector<8x4xf32>
      %90 = tpu.matmul %89, %33, %cst_59 {dimension_numbers = #tpu.dot_dimension_numbers<[1], [0], [0], [1], [0, 0, 1, 1], [], []>} : vector<8x32xf32>, vector<32x4xf32>, vector<8x4xf32> -> vector<8x4xf32>
      %cst_60 = arith.constant dense<0xFF800000> : vector<8xf32>
      %91 = vector.multi_reduction <maximumf>, %90, %cst_60 [1] : vector<8x4xf32> to vector<8xf32>
      %92 = vector.shape_cast %91 : vector<8xf32> to vector<8x1xf32>
      %93 = vector.broadcast %92 : vector<8x1xf32> to vector<8x4xf32>
      %94 = arith.subf %90, %93 : vector<8x4xf32>
      %95 = math.exp %94 : vector<8x4xf32>
      %cst_61 = arith.constant dense<0.000000e+00> : vector<8xf32>
      %96 = vector.multi_reduction <add>, %95, %cst_61 [1] : vector<8x4xf32> to vector<8xf32>
      %97 = vector.shape_cast %96 : vector<8xf32> to vector<8x1xf32>
      %98 = tpu.reciprocal %97 {approx = true} : vector<8x1xf32> -> vector<8x1xf32>
      %99 = vector.broadcast %98 : vector<8x1xf32> to vector<8x4xf32>
      %100 = arith.mulf %95, %99 : vector<8x4xf32>
      %cst_62 = arith.constant dense<0.000000e+00> : vector<8x32xf32>
      %101 = tpu.matmul %100, %34, %cst_62 {dimension_numbers = #tpu.dot_dimension_numbers<[1], [0], [0], [1], [0, 0, 1, 1], [], []>} : vector<8x4xf32>, vector<4x32xf32>, vector<8x32xf32> -> vector<8x32xf32>
      %102 = arith.mulf %101, %32 : vector<8x32xf32>
      %cst_63 = arith.constant dense<0.000000e+00> : vector<8x8xf32>
      %103 = tpu.matmul %102, %35, %cst_63 {dimension_numbers = #tpu.dot_dimension_numbers<[1], [0], [0], [1], [0, 0, 1, 1], [], []>} : vector<8x32xf32>, vector<32x8xf32>, vector<8x8xf32> -> vector<8x8xf32>
      %104 = vector.shape_cast %52 : vector<8x8xf32> to vector<1x8x8xf32>
      %105 = vector.shape_cast %69 : vector<8x8xf32> to vector<1x8x8xf32>
      %106 = vector.shape_cast %86 : vector<8x8xf32> to vector<1x8x8xf32>
      %107 = vector.shape_cast %103 : vector<8x8xf32> to vector<1x8x8xf32>
      %108 = tpu.concatenate %104, %105, %106, %107 in 0 : vector<1x8x8xf32>, vector<1x8x8xf32>, vector<1x8x8xf32>, vector<1x8x8xf32> -> vector<4x8x8xf32>
      %c0_64 = arith.constant 0 : index
      %c0_65 = arith.constant 0 : index
      %c0_66 = arith.constant 0 : index
      %c0_67 = arith.constant 0 : index
      %109 = vector.load %arg11[%c0_64, %c0_65, %c0_66, %c0_67] : memref<1x4x8x8xf32, #tpu.memory_space<vmem>>, vector<1x4x8x8xf32>
      %110 = vector.shape_cast %109 : vector<1x4x8x8xf32> to vector<4x8x8xf32>
      %111 = vector.shape_cast %108 : vector<4x8x8xf32> to vector<1x4x8x8xf32>
      tpu.vector_store %arg11[%c0_64, %c0_65, %c0_66, %c0_67], %111 {strides = array<i32>} : memref<1x4x8x8xf32, #tpu.memory_space<vmem>>, vector<1x4x8x8xf32>,
    } else {
    }
    return
  }
  func.func @transform_0(%arg0: i32, %arg1: i32, %arg2: i32) -> (i32, i32, i32) {
    %c0_i32 = arith.constant 0 : i32
    return %arg0, %arg1, %arg2 : i32, i32, i32
  }
  func.func @transform_1(%arg0: i32, %arg1: i32, %arg2: i32) -> (i32, i32, i32) {
    %c0_i32 = arith.constant 0 : i32
    return %arg0, %arg1, %arg2 : i32, i32, i32
  }
  func.func @transform_2(%arg0: i32, %arg1: i32, %arg2: i32) -> (i32, i32, i32) {
    %c0_i32 = arith.constant 0 : i32
    return %arg0, %arg1, %arg2 : i32, i32, i32
  }
  func.func @transform_3(%arg0: i32, %arg1: i32, %arg2: i32) -> (i32, i32, i32) {
    %c0_i32 = arith.constant 0 : i32
    %c0_i32_0 = arith.constant 0 : i32
    %c0_i32_1 = arith.constant 0 : i32
    %c0_i32_2 = arith.constant 0 : i32
    return %c0_i32, %c0_i32_0, %c0_i32_1 : i32, i32, i32
  }
  func.func @transform_4(%arg0: i32, %arg1: i32, %arg2: i32) -> (i32, i32) {
    %c0_i32 = arith.constant 0 : i32
    %c0_i32_0 = arith.constant 0 : i32
    %c0_i32_1 = arith.constant 0 : i32
    return %c0_i32, %c0_i32_0 : i32, i32
  }
  func.func @transform_5(%arg0: i32, %arg1: i32, %arg2: i32) -> (i32, i32) {
    %c0_i32 = arith.constant 0 : i32
    %c0_i32_0 = arith.constant 0 : i32
    %c0_i32_1 = arith.constant 0 : i32
    return %c0_i32, %c0_i32_0 : i32, i32
  }
  func.func @transform_6(%arg0: i32, %arg1: i32, %arg2: i32) -> (i32, i32) {
    %c0_i32 = arith.constant 0 : i32
    %c0_i32_0 = arith.constant 0 : i32
    %c0_i32_1 = arith.constant 0 : i32
    return %c0_i32, %c0_i32_0 : i32, i32
  }
  func.func @transform_7(%arg0: i32, %arg1: i32, %arg2: i32) -> (i32, i32) {
    %c0_i32 = arith.constant 0 : i32
    %c0_i32_0 = arith.constant 0 : i32
    %c0_i32_1 = arith.constant 0 : i32
    return %c0_i32, %c0_i32_0 : i32, i32
  }
  func.func @transform_8(%arg0: i32, %arg1: i32, %arg2: i32) -> (i32, i32, i32, i32) {
    %c0_i32 = arith.constant 0 : i32
    %c0_i32_0 = arith.constant 0 : i32
    %c0_i32_1 = arith.constant 0 : i32
    return %arg0, %c0_i32, %arg1, %c0_i32_0 : i32, i32, i32, i32
  }
}

module attributes {stable_mosaic.version = 11 : i64} {
  func.func @kernel(%arg0: i32, %arg1: i32, %arg2: i32, %arg3: memref<1x8x32xf32, #tpu.memory_space<vmem>>, %arg4: memref<1x8x32xf32, #tpu.memory_space<vmem>>, %arg5: memref<1x8x32xf32, #tpu.memory_space<vmem>>, %arg6: memref<3x32x32xf32, #tpu.memory_space<vmem>>, %arg7: memref<3x32xf32, #tpu.memory_space<vmem>>, %arg8: memref<32x4xf32, #tpu.memory_space<vmem>>, %arg9: memref<4x32xf32, #tpu.memory_space<vmem>>, %arg10: memref<32x8xf32, #tpu.memory_space<vmem>>, %arg11: memref<1x4x8x8xf32, #tpu.memory_space<vmem>>, %arg12: memref<8x32xf32, #tpu.memory_space<vmem>>, %arg13: memref<8x32xf32, #tpu.memory_space<vmem>>, %arg14: memref<8x32xf32, #tpu.memory_space<vmem>>) attributes {dimension_semantics = [#tpu.dimension_semantics<parallel>, #tpu.dimension_semantics<parallel>, #tpu.dimension_semantics<arbitrary>], iteration_bounds = array<i64: 2, 1, 1>, scalar_prefetch = 0 : i64, scratch_operands = 3 : i64, tpu.core_type = #tpu.core_type<tc>, window_params = [{transform_indices = @transform_0, window_bounds = array<i64: 1, 8, 32>}, {transform_indices = @transform_1, window_bounds = array<i64: 1, 8, 32>}, {transform_indices = @transform_2, window_bounds = array<i64: 1, 8, 32>}, {pipeline_mode = #tpu.pipeline_mode<synchronous>, transform_indices = @transform_3, window_bounds = array<i64: 3, 32, 32>}, {pipeline_mode = #tpu.pipeline_mode<synchronous>, transform_indices = @transform_4, window_bounds = array<i64: 3, 32>}, {pipeline_mode = #tpu.pipeline_mode<synchronous>, transform_indices = @transform_5, window_bounds = array<i64: 32, 4>}, {pipeline_mode = #tpu.pipeline_mode<synchronous>, transform_indices = @transform_6, window_bounds = array<i64: 4, 32>}, {pipeline_mode = #tpu.pipeline_mode<synchronous>, transform_indices = @transform_7, window_bounds = array<i64: 32, 8>}, {transform_indices = @transform_8, window_bounds = array<i64: 1, 4, 8, 8>}]} {
    %c0_i32 = arith.constant 0 : i32
    %0 = arith.cmpi eq, %arg2, %c0_i32 : i32
    %1 = arith.extui %0 : i1 to i32
    %c0_i32_0 = arith.constant 0 : i32
    %2 = arith.cmpi ne, %1, %c0_i32_0 : i32
    scf.if %2 {
      %c0_32 = arith.constant 0 : index
      %c0_33 = arith.constant 0 : index
      %30 = vector.load %arg7[%c0_32, %c0_33] : memref<3x32xf32, #tpu.memory_space<vmem>>, vector<1x32xf32>
      %31 = vector.shape_cast %30 : vector<1x32xf32> to vector<1x32xf32>
      %32 = vector.broadcast %31 : vector<1x32xf32> to vector<8x32xf32>
      %c0_34 = arith.constant 0 : index
      %c0_35 = arith.constant 0 : index
      %33 = vector.load %arg12[%c0_34, %c0_35] : memref<8x32xf32, #tpu.memory_space<vmem>>, vector<8x32xf32>
      tpu.vector_store %arg12[%c0_34, %c0_35], %32 {strides = array<i32>} : memref<8x32xf32, #tpu.memory_space<vmem>>, vector<8x32xf32>,
      %c1_36 = arith.constant 1 : index
      %c0_37 = arith.constant 0 : index
      %34 = vector.load %arg7[%c1_36, %c0_37] : memref<3x32xf32, #tpu.memory_space<vmem>>, vector<1x32xf32>
      %35 = vector.shape_cast %34 : vector<1x32xf32> to vector<1x32xf32>
      %36 = vector.broadcast %35 : vector<1x32xf32> to vector<8x32xf32>
      %c0_38 = arith.constant 0 : index
      %c0_39 = arith.constant 0 : index
      %37 = vector.load %arg13[%c0_38, %c0_39] : memref<8x32xf32, #tpu.memory_space<vmem>>, vector<8x32xf32>
      tpu.vector_store %arg13[%c0_38, %c0_39], %36 {strides = array<i32>} : memref<8x32xf32, #tpu.memory_space<vmem>>, vector<8x32xf32>,
      %c2_40 = arith.constant 2 : index
      %c0_41 = arith.constant 0 : index
      %38 = vector.load %arg7[%c2_40, %c0_41] : memref<3x32xf32, #tpu.memory_space<vmem>>, vector<1x32xf32>
      %39 = vector.shape_cast %38 : vector<1x32xf32> to vector<1x32xf32>
      %40 = vector.broadcast %39 : vector<1x32xf32> to vector<8x32xf32>
      %c0_42 = arith.constant 0 : index
      %c0_43 = arith.constant 0 : index
      %41 = vector.load %arg14[%c0_42, %c0_43] : memref<8x32xf32, #tpu.memory_space<vmem>>, vector<8x32xf32>
      tpu.vector_store %arg14[%c0_42, %c0_43], %40 {strides = array<i32>} : memref<8x32xf32, #tpu.memory_space<vmem>>, vector<8x32xf32>,
    } else {
    }
    %c0 = arith.constant 0 : index
    %c0_1 = arith.constant 0 : index
    %c0_2 = arith.constant 0 : index
    %3 = vector.load %arg3[%c0, %c0_1, %c0_2] : memref<1x8x32xf32, #tpu.memory_space<vmem>>, vector<1x8x32xf32>
    %4 = vector.shape_cast %3 : vector<1x8x32xf32> to vector<8x32xf32>
    %c0_3 = arith.constant 0 : index
    %c0_4 = arith.constant 0 : index
    %c0_5 = arith.constant 0 : index
    %5 = vector.load %arg4[%c0_3, %c0_4, %c0_5] : memref<1x8x32xf32, #tpu.memory_space<vmem>>, vector<1x8x32xf32>
    %6 = vector.shape_cast %5 : vector<1x8x32xf32> to vector<8x32xf32>
    %c0_6 = arith.constant 0 : index
    %c0_7 = arith.constant 0 : index
    %c0_8 = arith.constant 0 : index
    %7 = vector.load %arg5[%c0_6, %c0_7, %c0_8] : memref<1x8x32xf32, #tpu.memory_space<vmem>>, vector<1x8x32xf32>
    %8 = vector.shape_cast %7 : vector<1x8x32xf32> to vector<8x32xf32>
    %c0_9 = arith.constant 0 : index
    %c0_10 = arith.constant 0 : index
    %9 = vector.load %arg12[%c0_9, %c0_10] : memref<8x32xf32, #tpu.memory_space<vmem>>, vector<8x32xf32>
    %c0_11 = arith.constant 0 : index
    %c0_12 = arith.constant 0 : index
    %c0_13 = arith.constant 0 : index
    %10 = vector.load %arg6[%c0_11, %c0_12, %c0_13] : memref<3x32x32xf32, #tpu.memory_space<vmem>>, vector<1x32x32xf32>
    %11 = vector.shape_cast %10 : vector<1x32x32xf32> to vector<32x32xf32>
    %cst = arith.constant dense<0.000000e+00> : vector<8x32xf32>
    %12 = tpu.matmul %4, %11, %cst {dimension_numbers = #tpu.dot_dimension_numbers<[1], [0], [0], [1], [0, 0, 1, 1], [], []>} : vector<8x32xf32>, vector<32x32xf32>, vector<8x32xf32> -> vector<8x32xf32>
    %13 = arith.addf %9, %12 : vector<8x32xf32>
    %c0_14 = arith.constant 0 : index
    %c0_15 = arith.constant 0 : index
    %14 = vector.load %arg12[%c0_14, %c0_15] : memref<8x32xf32, #tpu.memory_space<vmem>>, vector<8x32xf32>
    tpu.vector_store %arg12[%c0_14, %c0_15], %13 {strides = array<i32>} : memref<8x32xf32, #tpu.memory_space<vmem>>, vector<8x32xf32>,
    %c0_16 = arith.constant 0 : index
    %c0_17 = arith.constant 0 : index
    %15 = vector.load %arg13[%c0_16, %c0_17] : memref<8x32xf32, #tpu.memory_space<vmem>>, vector<8x32xf32>
    %c1 = arith.constant 1 : index
    %c0_18 = arith.constant 0 : index
    %c0_19 = arith.constant 0 : index
    %16 = vector.load %arg6[%c1, %c0_18, %c0_19] : memref<3x32x32xf32, #tpu.memory_space<vmem>>, vector<1x32x32xf32>
    %17 = vector.shape_cast %16 : vector<1x32x32xf32> to vector<32x32xf32>
    %cst_20 = arith.constant dense<0.000000e+00> : vector<8x32xf32>
    %18 = tpu.matmul %6, %17, %cst_20 {dimension_numbers = #tpu.dot_dimension_numbers<[1], [0], [0], [1], [0, 0, 1, 1], [], []>} : vector<8x32xf32>, vector<32x32xf32>, vector<8x32xf32> -> vector<8x32xf32>
    %19 = arith.addf %15, %18 : vector<8x32xf32>
    %c0_21 = arith.constant 0 : index
    %c0_22 = arith.constant 0 : index
    %20 = vector.load %arg13[%c0_21, %c0_22] : memref<8x32xf32, #tpu.memory_space<vmem>>, vector<8x32xf32>
    tpu.vector_store %arg13[%c0_21, %c0_22], %19 {strides = array<i32>} : memref<8x32xf32, #tpu.memory_space<vmem>>, vector<8x32xf32>,
    %c0_23 = arith.constant 0 : index
    %c0_24 = arith.constant 0 : index
    %21 = vector.load %arg14[%c0_23, %c0_24] : memref<8x32xf32, #tpu.memory_space<vmem>>, vector<8x32xf32>
    %c2 = arith.constant 2 : index
    %c0_25 = arith.constant 0 : index
    %c0_26 = arith.constant 0 : index
    %22 = vector.load %arg6[%c2, %c0_25, %c0_26] : memref<3x32x32xf32, #tpu.memory_space<vmem>>, vector<1x32x32xf32>
    %23 = vector.shape_cast %22 : vector<1x32x32xf32> to vector<32x32xf32>
    %cst_27 = arith.constant dense<0.000000e+00> : vector<8x32xf32>
    %24 = tpu.matmul %8, %23, %cst_27 {dimension_numbers = #tpu.dot_dimension_numbers<[1], [0], [0], [1], [0, 0, 1, 1], [], []>} : vector<8x32xf32>, vector<32x32xf32>, vector<8x32xf32> -> vector<8x32xf32>
    %25 = arith.addf %21, %24 : vector<8x32xf32>
    %c0_28 = arith.constant 0 : index
    %c0_29 = arith.constant 0 : index
    %26 = vector.load %arg14[%c0_28, %c0_29] : memref<8x32xf32, #tpu.memory_space<vmem>>, vector<8x32xf32>
    tpu.vector_store %arg14[%c0_28, %c0_29], %25 {strides = array<i32>} : memref<8x32xf32, #tpu.memory_space<vmem>>, vector<8x32xf32>,
    %c0_i32_30 = arith.constant 0 : i32
    %27 = arith.cmpi eq, %arg2, %c0_i32_30 : i32
    %28 = arith.extui %27 : i1 to i32
    %c0_i32_31 = arith.constant 0 : i32
    %29 = arith.cmpi ne, %28, %c0_i32_31 : i32
    scf.if %29 {
      %c0_32 = arith.constant 0 : index
      %c0_33 = arith.constant 0 : index
      %30 = vector.load %arg12[%c0_32, %c0_33] : memref<8x32xf32, #tpu.memory_space<vmem>>, vector<8x32xf32>
      %c0_34 = arith.constant 0 : index
      %c0_35 = arith.constant 0 : index
      %31 = vector.load %arg13[%c0_34, %c0_35] : memref<8x32xf32, #tpu.memory_space<vmem>>, vector<8x32xf32>
      %c0_36 = arith.constant 0 : index
      %c0_37 = arith.constant 0 : index
      %32 = vector.load %arg14[%c0_36, %c0_37] : memref<8x32xf32, #tpu.memory_space<vmem>>, vector<8x32xf32>
      %c0_38 = arith.constant 0 : index
      %c0_39 = arith.constant 0 : index
      %33 = vector.load %arg8[%c0_38, %c0_39] : memref<32x4xf32, #tpu.memory_space<vmem>>, vector<32x4xf32>
      %c0_40 = arith.constant 0 : index
      %c0_41 = arith.constant 0 : index
      %34 = vector.load %arg9[%c0_40, %c0_41] : memref<4x32xf32, #tpu.memory_space<vmem>>, vector<4x32xf32>
      %c0_42 = arith.constant 0 : index
      %c0_43 = arith.constant 0 : index
      %35 = vector.load %arg10[%c0_42, %c0_43] : memref<32x8xf32, #tpu.memory_space<vmem>>, vector<32x8xf32>
      %36 = vector.extract_strided_slice %30 {offsets = [0, 0], sizes = [8, 8], strides = [1, 1]} : vector<8x32xf32> to vector<8x8xf32>
      %37 = tpu.concatenate %36, %36, %36, %36 in 1 : vector<8x8xf32>, vector<8x8xf32>, vector<8x8xf32>, vector<8x8xf32> -> vector<8x32xf32>
      %38 = arith.mulf %37, %31 : vector<8x32xf32>
      %cst_44 = arith.constant dense<0.000000e+00> : vector<8x4xf32>
      %39 = tpu.matmul %38, %33, %cst_44 {dimension_numbers = #tpu.dot_dimension_numbers<[1], [0], [0], [1], [0, 0, 1, 1], [], []>} : vector<8x32xf32>, vector<32x4xf32>, vector<8x4xf32> -> vector<8x4xf32>
      %cst_45 = arith.constant dense<0xFF800000> : vector<8xf32>
      %40 = vector.multi_reduction <maximumf>, %39, %cst_45 [1] : vector<8x4xf32> to vector<8xf32>
      %41 = vector.shape_cast %40 : vector<8xf32> to vector<8x1xf32>
      %42 = vector.broadcast %41 : vector<8x1xf32> to vector<8x4xf32>
      %43 = arith.subf %39, %42 : vector<8x4xf32>
      %44 = math.exp %43 : vector<8x4xf32>
      %cst_46 = arith.constant dense<0.000000e+00> : vector<8xf32>
      %45 = vector.multi_reduction <add>, %44, %cst_46 [1] : vector<8x4xf32> to vector<8xf32>
      %46 = vector.shape_cast %45 : vector<8xf32> to vector<8x1xf32>
      %47 = tpu.reciprocal %46 {approx = true} : vector<8x1xf32> -> vector<8x1xf32>
      %48 = vector.broadcast %47 : vector<8x1xf32> to vector<8x4xf32>
      %49 = arith.mulf %44, %48 : vector<8x4xf32>
      %cst_47 = arith.constant dense<0.000000e+00> : vector<8x32xf32>
      %50 = tpu.matmul %49, %34, %cst_47 {dimension_numbers = #tpu.dot_dimension_numbers<[1], [0], [0], [1], [0, 0, 1, 1], [], []>} : vector<8x4xf32>, vector<4x32xf32>, vector<8x32xf32> -> vector<8x32xf32>
      %51 = arith.mulf %50, %32 : vector<8x32xf32>
      %cst_48 = arith.constant dense<0.000000e+00> : vector<8x8xf32>
      %52 = tpu.matmul %51, %35, %cst_48 {dimension_numbers = #tpu.dot_dimension_numbers<[1], [0], [0], [1], [0, 0, 1, 1], [], []>} : vector<8x32xf32>, vector<32x8xf32>, vector<8x8xf32> -> vector<8x8xf32>
      %53 = vector.extract_strided_slice %30 {offsets = [0, 8], sizes = [8, 8], strides = [1, 1]} : vector<8x32xf32> to vector<8x8xf32>
      %54 = tpu.concatenate %53, %53, %53, %53 in 1 : vector<8x8xf32>, vector<8x8xf32>, vector<8x8xf32>, vector<8x8xf32> -> vector<8x32xf32>
      %55 = arith.mulf %54, %31 : vector<8x32xf32>
      %cst_49 = arith.constant dense<0.000000e+00> : vector<8x4xf32>
      %56 = tpu.matmul %55, %33, %cst_49 {dimension_numbers = #tpu.dot_dimension_numbers<[1], [0], [0], [1], [0, 0, 1, 1], [], []>} : vector<8x32xf32>, vector<32x4xf32>, vector<8x4xf32> -> vector<8x4xf32>
      %cst_50 = arith.constant dense<0xFF800000> : vector<8xf32>
      %57 = vector.multi_reduction <maximumf>, %56, %cst_50 [1] : vector<8x4xf32> to vector<8xf32>
      %58 = vector.shape_cast %57 : vector<8xf32> to vector<8x1xf32>
      %59 = vector.broadcast %58 : vector<8x1xf32> to vector<8x4xf32>
      %60 = arith.subf %56, %59 : vector<8x4xf32>
      %61 = math.exp %60 : vector<8x4xf32>
      %cst_51 = arith.constant dense<0.000000e+00> : vector<8xf32>
      %62 = vector.multi_reduction <add>, %61, %cst_51 [1] : vector<8x4xf32> to vector<8xf32>
      %63 = vector.shape_cast %62 : vector<8xf32> to vector<8x1xf32>
      %64 = tpu.reciprocal %63 {approx = true} : vector<8x1xf32> -> vector<8x1xf32>
      %65 = vector.broadcast %64 : vector<8x1xf32> to vector<8x4xf32>
      %66 = arith.mulf %61, %65 : vector<8x4xf32>
      %cst_52 = arith.constant dense<0.000000e+00> : vector<8x32xf32>
      %67 = tpu.matmul %66, %34, %cst_52 {dimension_numbers = #tpu.dot_dimension_numbers<[1], [0], [0], [1], [0, 0, 1, 1], [], []>} : vector<8x4xf32>, vector<4x32xf32>, vector<8x32xf32> -> vector<8x32xf32>
      %68 = arith.mulf %67, %32 : vector<8x32xf32>
      %cst_53 = arith.constant dense<0.000000e+00> : vector<8x8xf32>
      %69 = tpu.matmul %68, %35, %cst_53 {dimension_numbers = #tpu.dot_dimension_numbers<[1], [0], [0], [1], [0, 0, 1, 1], [], []>} : vector<8x32xf32>, vector<32x8xf32>, vector<8x8xf32> -> vector<8x8xf32>
      %70 = vector.extract_strided_slice %30 {offsets = [0, 16], sizes = [8, 8], strides = [1, 1]} : vector<8x32xf32> to vector<8x8xf32>
      %71 = tpu.concatenate %70, %70, %70, %70 in 1 : vector<8x8xf32>, vector<8x8xf32>, vector<8x8xf32>, vector<8x8xf32> -> vector<8x32xf32>
      %72 = arith.mulf %71, %31 : vector<8x32xf32>
      %cst_54 = arith.constant dense<0.000000e+00> : vector<8x4xf32>
      %73 = tpu.matmul %72, %33, %cst_54 {dimension_numbers = #tpu.dot_dimension_numbers<[1], [0], [0], [1], [0, 0, 1, 1], [], []>} : vector<8x32xf32>, vector<32x4xf32>, vector<8x4xf32> -> vector<8x4xf32>
      %cst_55 = arith.constant dense<0xFF800000> : vector<8xf32>
      %74 = vector.multi_reduction <maximumf>, %73, %cst_55 [1] : vector<8x4xf32> to vector<8xf32>
      %75 = vector.shape_cast %74 : vector<8xf32> to vector<8x1xf32>
      %76 = vector.broadcast %75 : vector<8x1xf32> to vector<8x4xf32>
      %77 = arith.subf %73, %76 : vector<8x4xf32>
      %78 = math.exp %77 : vector<8x4xf32>
      %cst_56 = arith.constant dense<0.000000e+00> : vector<8xf32>
      %79 = vector.multi_reduction <add>, %78, %cst_56 [1] : vector<8x4xf32> to vector<8xf32>
      %80 = vector.shape_cast %79 : vector<8xf32> to vector<8x1xf32>
      %81 = tpu.reciprocal %80 {approx = true} : vector<8x1xf32> -> vector<8x1xf32>
      %82 = vector.broadcast %81 : vector<8x1xf32> to vector<8x4xf32>
      %83 = arith.mulf %78, %82 : vector<8x4xf32>
      %cst_57 = arith.constant dense<0.000000e+00> : vector<8x32xf32>
      %84 = tpu.matmul %83, %34, %cst_57 {dimension_numbers = #tpu.dot_dimension_numbers<[1], [0], [0], [1], [0, 0, 1, 1], [], []>} : vector<8x4xf32>, vector<4x32xf32>, vector<8x32xf32> -> vector<8x32xf32>
      %85 = arith.mulf %84, %32 : vector<8x32xf32>
      %cst_58 = arith.constant dense<0.000000e+00> : vector<8x8xf32>
      %86 = tpu.matmul %85, %35, %cst_58 {dimension_numbers = #tpu.dot_dimension_numbers<[1], [0], [0], [1], [0, 0, 1, 1], [], []>} : vector<8x32xf32>, vector<32x8xf32>, vector<8x8xf32> -> vector<8x8xf32>
      %87 = vector.extract_strided_slice %30 {offsets = [0, 24], sizes = [8, 8], strides = [1, 1]} : vector<8x32xf32> to vector<8x8xf32>
      %88 = tpu.concatenate %87, %87, %87, %87 in 1 : vector<8x8xf32>, vector<8x8xf32>, vector<8x8xf32>, vector<8x8xf32> -> vector<8x32xf32>
      %89 = arith.mulf %88, %31 : vector<8x32xf32>
      %cst_59 = arith.constant dense<0.000000e+00> : vector<8x4xf32>
      %90 = tpu.matmul %89, %33, %cst_59 {dimension_numbers = #tpu.dot_dimension_numbers<[1], [0], [0], [1], [0, 0, 1, 1], [], []>} : vector<8x32xf32>, vector<32x4xf32>, vector<8x4xf32> -> vector<8x4xf32>
      %cst_60 = arith.constant dense<0xFF800000> : vector<8xf32>
      %91 = vector.multi_reduction <maximumf>, %90, %cst_60 [1] : vector<8x4xf32> to vector<8xf32>
      %92 = vector.shape_cast %91 : vector<8xf32> to vector<8x1xf32>
      %93 = vector.broadcast %92 : vector<8x1xf32> to vector<8x4xf32>
      %94 = arith.subf %90, %93 : vector<8x4xf32>
      %95 = math.exp %94 : vector<8x4xf32>
      %cst_61 = arith.constant dense<0.000000e+00> : vector<8xf32>
      %96 = vector.multi_reduction <add>, %95, %cst_61 [1] : vector<8x4xf32> to vector<8xf32>
      %97 = vector.shape_cast %96 : vector<8xf32> to vector<8x1xf32>
      %98 = tpu.reciprocal %97 {approx = true} : vector<8x1xf32> -> vector<8x1xf32>
      %99 = vector.broadcast %98 : vector<8x1xf32> to vector<8x4xf32>
      %100 = arith.mulf %95, %99 : vector<8x4xf32>
      %cst_62 = arith.constant dense<0.000000e+00> : vector<8x32xf32>
      %101 = tpu.matmul %100, %34, %cst_62 {dimension_numbers = #tpu.dot_dimension_numbers<[1], [0], [0], [1], [0, 0, 1, 1], [], []>} : vector<8x4xf32>, vector<4x32xf32>, vector<8x32xf32> -> vector<8x32xf32>
      %102 = arith.mulf %101, %32 : vector<8x32xf32>
      %cst_63 = arith.constant dense<0.000000e+00> : vector<8x8xf32>
      %103 = tpu.matmul %102, %35, %cst_63 {dimension_numbers = #tpu.dot_dimension_numbers<[1], [0], [0], [1], [0, 0, 1, 1], [], []>} : vector<8x32xf32>, vector<32x8xf32>, vector<8x8xf32> -> vector<8x8xf32>
      %104 = vector.shape_cast %52 : vector<8x8xf32> to vector<1x8x8xf32>
      %105 = vector.shape_cast %69 : vector<8x8xf32> to vector<1x8x8xf32>
      %106 = vector.shape_cast %86 : vector<8x8xf32> to vector<1x8x8xf32>
      %107 = vector.shape_cast %103 : vector<8x8xf32> to vector<1x8x8xf32>
      %108 = tpu.concatenate %104, %105, %106, %107 in 0 : vector<1x8x8xf32>, vector<1x8x8xf32>, vector<1x8x8xf32>, vector<1x8x8xf32> -> vector<4x8x8xf32>
      %c0_64 = arith.constant 0 : index
      %c0_65 = arith.constant 0 : index
      %c0_66 = arith.constant 0 : index
      %c0_67 = arith.constant 0 : index
      %109 = vector.load %arg11[%c0_64, %c0_65, %c0_66, %c0_67] : memref<1x4x8x8xf32, #tpu.memory_space<vmem>>, vector<1x4x8x8xf32>
      %110 = vector.shape_cast %109 : vector<1x4x8x8xf32> to vector<4x8x8xf32>
      %111 = vector.shape_cast %108 : vector<4x8x8xf32> to vector<1x4x8x8xf32>
      tpu.vector_store %arg11[%c0_64, %c0_65, %c0_66, %c0_67], %111 {strides = array<i32>} : memref<1x4x8x8xf32, #tpu.memory_space<vmem>>, vector<1x4x8x8xf32>,
    } else {
    }
    return
  }
  func.func @transform_0(%arg0: i32, %arg1: i32, %arg2: i32) -> (i32, i32, i32) {
    %c0_i32 = arith.constant 0 : i32
    return %arg0, %arg1, %arg2 : i32, i32, i32
  }
  func.func @transform_1(%arg0: i32, %arg1: i32, %arg2: i32) -> (i32, i32, i32) {
    %c0_i32 = arith.constant 0 : i32
    return %arg0, %arg1, %arg2 : i32, i32, i32
  }
  func.func @transform_2(%arg0: i32, %arg1: i32, %arg2: i32) -> (i32, i32, i32) {
    %c0_i32 = arith.constant 0 : i32
    return %arg0, %arg1, %arg2 : i32, i32, i32
  }
  func.func @transform_3(%arg0: i32, %arg1: i32, %arg2: i32) -> (i32, i32, i32) {
    %c0_i32 = arith.constant 0 : i32
    %c0_i32_0 = arith.constant 0 : i32
    %c0_i32_1 = arith.constant 0 : i32
    %c0_i32_2 = arith.constant 0 : i32
    return %c0_i32, %c0_i32_0, %c0_i32_1 : i32, i32, i32
  }
  func.func @transform_4(%arg0: i32, %arg1: i32, %arg2: i32) -> (i32, i32) {
    %c0_i32 = arith.constant 0 : i32
    %c0_i32_0 = arith.constant 0 : i32
    %c0_i32_1 = arith.constant 0 : i32
    return %c0_i32, %c0_i32_0 : i32, i32
  }
  func.func @transform_5(%arg0: i32, %arg1: i32, %arg2: i32) -> (i32, i32) {
    %c0_i32 = arith.constant 0 : i32
    %c0_i32_0 = arith.constant 0 : i32
    %c0_i32_1 = arith.constant 0 : i32
    return %c0_i32, %c0_i32_0 : i32, i32
  }
  func.func @transform_6(%arg0: i32, %arg1: i32, %arg2: i32) -> (i32, i32) {
    %c0_i32 = arith.constant 0 : i32
    %c0_i32_0 = arith.constant 0 : i32
    %c0_i32_1 = arith.constant 0 : i32
    return %c0_i32, %c0_i32_0 : i32, i32
  }
  func.func @transform_7(%arg0: i32, %arg1: i32, %arg2: i32) -> (i32, i32) {
    %c0_i32 = arith.constant 0 : i32
    %c0_i32_0 = arith.constant 0 : i32
    %c0_i32_1 = arith.constant 0 : i32
    return %c0_i32, %c0_i32_0 : i32, i32
  }
  func.func @transform_8(%arg0: i32, %arg1: i32, %arg2: i32) -> (i32, i32, i32, i32) {
    %c0_i32 = arith.constant 0 : i32
    %c0_i32_0 = arith.constant 0 : i32
    %c0_i32_1 = arith.constant 0 : i32
    return %arg0, %c0_i32, %arg1, %c0_i32_0 : i32, i32, i32, i32
  }
}

</mosaic_0001>

<llo_original>
// kernel: tpu_custom_call.1
$region0: #{tpu_custom_call.1}
  #allocation0 [shape = 'u32[]', space=smem, size = 0x4, offset = 0x4, fixed_abs, tag = 'smem constant byte address 0x4 - core index']
  #allocation1 [shape = 'u32[144,128]{1,0:T(1,128)}', space=vmem, size = 0x12000, scoped, tag = 'internal scratch']
  #allocation2 [shape = 'f32[8,32]{1,0:T(8,128)}', space=vmem, size = 0x1000, scoped, tag = 'scratch operand']
  #allocation3 [shape = 'f32[8,32]{1,0:T(8,128)}', space=vmem, size = 0x1000, scoped, tag = 'scratch operand']
  #allocation4 [shape = 'f32[8,32]{1,0:T(8,128)}', space=vmem, size = 0x1000, scoped, tag = 'scratch operand']
  %s0 = inlined_call_operand.vmem [shape: f32[2,8,32], index: 0, kind: input, shape index: {}]
  %s1 = inlined_call_operand.vmem [shape: f32[2,8,32], index: 1, kind: input, shape index: {}]
  %s2 = inlined_call_operand.vmem [shape: f32[2,8,32], index: 2, kind: input, shape index: {}]
  %s3 = inlined_call_operand.hbm [shape: f32[3,32,32], index: 3, kind: input, shape index: {}]
  %s4 = inlined_call_operand.vmem [shape: f32[3,32], index: 4, kind: input, shape index: {}]
  %s5 = inlined_call_operand.vmem [shape: f32[32,4], index: 5, kind: input, shape index: {}]
  %s6 = inlined_call_operand.vmem [shape: f32[4,32], index: 6, kind: input, shape index: {}]
  %s7 = inlined_call_operand.vmem [shape: f32[32,8], index: 7, kind: input, shape index: {}]
  %s8 = inlined_call_operand.hbm [shape: f32[2,4,8,8], index: 8, kind: output, shape index: {}]
  %s9 = sld [smem:[#allocation0]]
  $region77: #{tpu_custom_call.1} parent=0
    _
  %s11 = ssub.s32 1, %s9
  %s12 = scalar_select 0, %s11, %s9
  $region1: #{tpu_custom_call.1} parent=0
    #allocation5 [shape = 'u8[49152]{0}', space=vmem, size = 0xc000, scoped, tag = 'input window, operand 3, single buffered']
    #allocation6 [shape = 's32[2]{0}', space=sflag, size = 0x8, scoped, tag = 'scoped memory for tpu_custom_call.1']
    #allocation7 [shape = 's32[2]{0}', space=sflag, size = 0x8, scoped, tag = 'scoped memory for tpu_custom_call.1']
    #allocation8 [shape = 'u8[32768]{0}', space=vmem, size = 0x8000, scoped, tag = 'output window, operand 0']
    %13 = vsyncpa [#allocation6], 0
    %14 = vsyncpa [#allocation7], 0
    %s15 = scalar_lea.sflag [#allocation7], 1
    %16 = vsyncpa %s15, 0
    loop: start=0, step=1, limit=4
    $region2: #{tpu_custom_call.1} parent=1 // loop_pre_header
      _
    $region3: #{tpu_custom_call.1} parent=1 // loop_header
      %s18 = sphi 0, %s22
      %p19 = scmp.ge.s32.totalorder %s18, 4
      %s25 = sphi 0, %s44
      %s26 = sphi 0, %s40
      %s27 = sphi 0, %s36
      %s28 = sphi 0, %s25
      %s29 = sphi 0, %s26
      %s30 = sphi 0, %s27
      %s31 = sphi 0, %s28
      %s32 = sphi 0, %s29
      %s33 = sphi 0, %s30
      %s51 = sphi 0, %s53
      %s54 = sphi 0, %s51
      %s55 = sphi 0, %s54
      %s71 = sphi 0, %s55
      %s81 = sphi 0, %s83
      %s84 = sphi 0, %s81
      %s85 = sphi 0, %s84
      %s101 = sphi 0, %s85
      %s111 = sphi 0, %s113
      %s114 = sphi 0, %s111
      %s115 = sphi 0, %s114
      %s131 = sphi 0, %s115
      %s135 = sphi 0, %s135
      %s137 = sphi 0, %s135
      %s138 = sphi 0, %s137
      %s152 = sphi 0, %s138
      %s156 = sphi 0, %s156
      %s158 = sphi 0, %s156
      %s159 = sphi 0, %s158
      %s173 = sphi 0, %s159
      %s177 = sphi 0, %s177
      %s179 = sphi 0, %s177
      %s180 = sphi 0, %s179
      %s194 = sphi 0, %s180
      %s198 = sphi 0, %s198
      %s200 = sphi 0, %s198
      %s201 = sphi 0, %s200
      %s215 = sphi 0, %s201
      %s219 = sphi 0, %s219
      %s221 = sphi 0, %s219
      %s222 = sphi 0, %s221
      %s236 = sphi 0, %s222
      %s244 = sphi 0, %s246
      %s247 = sphi 0, %s244
      %s248 = sphi 0, %s247
      %s264 = sphi 0, %s248
    $region4: #{tpu_custom_call.1} parent=1 // loop_header_branch
      %21 = sbr.rel (%p19) target = $region8
    $region5: #{tpu_custom_call.1} parent=1 // loop_body
      %s23 = ssub.s32 %s18, 1
      %s24 = ssub.s32 %s18, 2
      %s34 = sadd.s32 1, %s27
      %p35 = scmp.ge.s32.totalorder %s34, 1
      %s36 = scalar_select %p35, 0, %s34
      %s37 = sadd.s32 1, %s26
      %s38 = scalar_select %p35, %s37, %s26
      %p39 = scmp.ge.s32.totalorder %s38, 1
      %s40 = scalar_select %p39, 0, %s38
      %s41 = sadd.s32 1, %s25
      %s42 = scalar_select %p39, %s41, %s25
      %p43 = scmp.ge.s32.totalorder %s42, 2
      %s44 = scalar_select %p43, 0, %s42
      %s45 = ssub.s32 %s25, %s44
      %s46 = ssub.s32 %s26, %s40
      %s47 = sor.u32 %s45, %s46
      %s48 = ssub.s32 %s27, %s36
      %s49 = sor.u32 %s47, %s48
      %p50 = scmp.eq.s32.totalorder %s49, 0
      %s52 = sadd.s32 %s51, 1
      %s53 = scalar_select %p50, %s51, %s52
      %p56 = pneg %p50
      %p57 = scmp.eq.s32.totalorder %s18, 1
      %p58 = por %p56, %p57
      %p59 = scmp.ne.s32.totalorder %s51, %s54
      %p60 = scmp.eq.s32.totalorder %s18, 0
      %p61 = por %p59, %p60
      %p62 = scmp.ne.s32.totalorder %s51, %s54
      %p63 = scmp.eq.s32.totalorder %s23, 1
      %p64 = por %p62, %p63
      %p65 = scmp.ne.s32.totalorder %s54, %s55
      %p66 = scmp.eq.s32.totalorder %s23, 0
      %p67 = por %p65, %p66
      %p68 = scmp.ne.s32.totalorder %s54, %s55
      %p69 = scmp.eq.s32.totalorder %s24, 1
      %p70 = por %p68, %p69
      %p72 = scmp.ne.s32.totalorder %s55, %s71
      %p73 = scmp.eq.s32.totalorder %s24, 0
      %p74 = por %p72, %p73
      %s75 = ssub.s32 %s25, %s44
      %s76 = ssub.s32 %s26, %s40
      %s77 = sor.u32 %s75, %s76
      %s78 = ssub.s32 %s27, %s36
      %s79 = sor.u32 %s77, %s78
      %p80 = scmp.eq.s32.totalorder %s79, 0
      %s82 = sadd.s32 %s81, 1
      %s83 = scalar_select %p80, %s81, %s82
      %p86 = pneg %p80
      %p87 = scmp.eq.s32.totalorder %s18, 1
      %p88 = por %p86, %p87
      %p89 = scmp.ne.s32.totalorder %s81, %s84
      %p90 = scmp.eq.s32.totalorder %s18, 0
      %p91 = por %p89, %p90
      %p92 = scmp.ne.s32.totalorder %s81, %s84
      %p93 = scmp.eq.s32.totalorder %s23, 1
      %p94 = por %p92, %p93
      %p95 = scmp.ne.s32.totalorder %s84, %s85
      %p96 = scmp.eq.s32.totalorder %s23, 0
      %p97 = por %p95, %p96
      %p98 = scmp.ne.s32.totalorder %s84, %s85
      %p99 = scmp.eq.s32.totalorder %s24, 1
      %p100 = por %p98, %p99
      %p102 = scmp.ne.s32.totalorder %s85, %s101
      %p103 = scmp.eq.s32.totalorder %s24, 0
      %p104 = por %p102, %p103
      %s105 = ssub.s32 %s25, %s44
      %s106 = ssub.s32 %s26, %s40
      %s107 = sor.u32 %s105, %s106
      %s108 = ssub.s32 %s27, %s36
      %s109 = sor.u32 %s107, %s108
      %p110 = scmp.eq.s32.totalorder %s109, 0
      %s112 = sadd.s32 %s111, 1
      %s113 = scalar_select %p110, %s111, %s112
      %p116 = pneg %p110
      %p117 = scmp.eq.s32.totalorder %s18, 1
      %p118 = por %p116, %p117
      %p119 = scmp.ne.s32.totalorder %s111, %s114
      %p120 = scmp.eq.s32.totalorder %s18, 0
      %p121 = por %p119, %p120
      %p122 = scmp.ne.s32.totalorder %s111, %s114
      %p123 = scmp.eq.s32.totalorder %s23, 1
      %p124 = por %p122, %p123
      %p125 = scmp.ne.s32.totalorder %s114, %s115
      %p126 = scmp.eq.s32.totalorder %s23, 0
      %p127 = por %p125, %p126
      %p128 = scmp.ne.s32.totalorder %s114, %s115
      %p129 = scmp.eq.s32.totalorder %s24, 1
      %p130 = por %p128, %p129
      %p132 = scmp.ne.s32.totalorder %s115, %s131
      %p133 = scmp.eq.s32.totalorder %s24, 0
      %p134 = por %p132, %p133
      %s136 = sadd.s32 %s135, 1
      %p139 = scmp.eq.s32.totalorder %s18, 1
      %p140 = scmp.ne.s32.totalorder %s135, %s137
      %p141 = scmp.eq.s32.totalorder %s18, 0
      %p142 = por %p140, %p141
      %p143 = scmp.ne.s32.totalorder %s135, %s137
      %p144 = scmp.eq.s32.totalorder %s23, 1
      %p145 = por %p143, %p144
      %p146 = scmp.ne.s32.totalorder %s137, %s138
      %p147 = scmp.eq.s32.totalorder %s23, 0
      %p148 = por %p146, %p147
      %p149 = scmp.ne.s32.totalorder %s137, %s138
      %p150 = scmp.eq.s32.totalorder %s24, 1
      %p151 = por %p149, %p150
      %p153 = scmp.ne.s32.totalorder %s138, %s152
      %p154 = scmp.eq.s32.totalorder %s24, 0
      %p155 = por %p153, %p154
      %s157 = sadd.s32 %s156, 1
      %p160 = scmp.eq.s32.totalorder %s18, 1
      %p161 = scmp.ne.s32.totalorder %s156, %s158
      %p162 = scmp.eq.s32.totalorder %s18, 0
      %p163 = por %p161, %p162
      %p164 = scmp.ne.s32.totalorder %s156, %s158
      %p165 = scmp.eq.s32.totalorder %s23, 1
      %p166 = por %p164, %p165
      %p167 = scmp.ne.s32.totalorder %s158, %s159
      %p168 = scmp.eq.s32.totalorder %s23, 0
      %p169 = por %p167, %p168
      %p170 = scmp.ne.s32.totalorder %s158, %s159
      %p171 = scmp.eq.s32.totalorder %s24, 1
      %p172 = por %p170, %p171
      %p174 = scmp.ne.s32.totalorder %s159, %s173
      %p175 = scmp.eq.s32.totalorder %s24, 0
      %p176 = por %p174, %p175
      %s178 = sadd.s32 %s177, 1
      %p181 = scmp.eq.s32.totalorder %s18, 1
      %p182 = scmp.ne.s32.totalorder %s177, %s179
      %p183 = scmp.eq.s32.totalorder %s18, 0
      %p184 = por %p182, %p183
      %p185 = scmp.ne.s32.totalorder %s177, %s179
      %p186 = scmp.eq.s32.totalorder %s23, 1
      %p187 = por %p185, %p186
      %p188 = scmp.ne.s32.totalorder %s179, %s180
      %p189 = scmp.eq.s32.totalorder %s23, 0
      %p190 = por %p188, %p189
      %p191 = scmp.ne.s32.totalorder %s179, %s180
      %p192 = scmp.eq.s32.totalorder %s24, 1
      %p193 = por %p191, %p192
      %p195 = scmp.ne.s32.totalorder %s180, %s194
      %p196 = scmp.eq.s32.totalorder %s24, 0
      %p197 = por %p195, %p196
      %s199 = sadd.s32 %s198, 1
      %p202 = scmp.eq.s32.totalorder %s18, 1
      %p203 = scmp.ne.s32.totalorder %s198, %s200
      %p204 = scmp.eq.s32.totalorder %s18, 0
      %p205 = por %p203, %p204
      %p206 = scmp.ne.s32.totalorder %s198, %s200
      %p207 = scmp.eq.s32.totalorder %s23, 1
      %p208 = por %p206, %p207
      %p209 = scmp.ne.s32.totalorder %s200, %s201
      %p210 = scmp.eq.s32.totalorder %s23, 0
      %p211 = por %p209, %p210
      %p212 = scmp.ne.s32.totalorder %s200, %s201
      %p213 = scmp.eq.s32.totalorder %s24, 1
      %p214 = por %p212, %p213
      %p216 = scmp.ne.s32.totalorder %s201, %s215
      %p217 = scmp.eq.s32.totalorder %s24, 0
      %p218 = por %p216, %p217
      %s220 = sadd.s32 %s219, 1
      %p223 = scmp.eq.s32.totalorder %s18, 1
      %p224 = scmp.ne.s32.totalorder %s219, %s221
      %p225 = scmp.eq.s32.totalorder %s18, 0
      %p226 = por %p224, %p225
      %p227 = scmp.ne.s32.totalorder %s219, %s221
      %p228 = scmp.eq.s32.totalorder %s23, 1
      %p229 = por %p227, %p228
      %p230 = scmp.ne.s32.totalorder %s221, %s222
      %p231 = scmp.eq.s32.totalorder %s23, 0
      %p232 = por %p230, %p231
      %p233 = scmp.ne.s32.totalorder %s221, %s222
      %p234 = scmp.eq.s32.totalorder %s24, 1
      %p235 = por %p233, %p234
      %p237 = scmp.ne.s32.totalorder %s222, %s236
      %p238 = scmp.eq.s32.totalorder %s24, 0
      %p239 = por %p237, %p238
      %s240 = ssub.s32 %s25, %s44
      %s241 = ssub.s32 %s26, %s40
      %s242 = sor.u32 %s240, %s241
      %p243 = scmp.eq.s32.totalorder %s242, 0
      %s245 = sadd.s32 %s244, 1
      %s246 = scalar_select %p243, %s244, %s245
      %p249 = pneg %p243
      %p250 = scmp.eq.s32.totalorder %s18, 1
      %p251 = por %p249, %p250
      %p252 = scmp.ne.s32.totalorder %s244, %s247
      %p253 = scmp.eq.s32.totalorder %s18, 0
      %p254 = por %p252, %p253
      %p255 = scmp.ne.s32.totalorder %s244, %s247
      %p256 = scmp.eq.s32.totalorder %s23, 1
      %p257 = por %p255, %p256
      %p258 = scmp.ne.s32.totalorder %s247, %s248
      %p259 = scmp.eq.s32.totalorder %s23, 0
      %p260 = por %p258, %p259
      %p261 = scmp.ne.s32.totalorder %s247, %s248
      %p262 = scmp.eq.s32.totalorder %s24, 1
      %p263 = por %p261, %p262
      %p265 = scmp.ne.s32.totalorder %s248, %s264
      %p266 = scmp.eq.s32.totalorder %s24, 0
      %p267 = por %p265, %p266
      %p268 = scmp.le.s32.totalorder 1, %s18
      %p269 = scmp.lt.s32.totalorder %s18, 3
      %p270 = pnand %p268, %p269
      %p271 = pneg %p270
      // Predicated region
      $region9: #{tpu_custom_call.1} parent=5 // pred_check
        _
      $region10: #{tpu_custom_call.1} parent=5 // pred_check_branch
        %273 = sbr.rel (%p270) target = $region12
      $region11: #{tpu_custom_call.1} parent=5 // pred_region
        %s274 = ssub.s32 %s18, 1
        // Predicated region
        $region13: #{tpu_custom_call.1} parent=11 // pred_check
          %p275 = pneg %p148
        $region14: #{tpu_custom_call.1} parent=11 // pred_check_branch
          %277 = sbr.rel (%p275) target = $region16
        $region15: #{tpu_custom_call.1} parent=11 // pred_region
          %s279 = ssub.s32 1536, 1536
          %280 = vsyncadd [#allocation6], %s279
          %s281 = sshll.u32 [#allocation5], 4
          %s282 = int_to_ptr.vmem [resolvable:$true] %s281
          %287 = dma.hbm_to_vmem [thread:$0]  %s3, 1536, %s282, [#allocation6], 128, 128, 8
        $region16: #{tpu_custom_call.1} parent=11 // pred_fallthru
          _
        // Predicated region
        $region17: #{tpu_custom_call.1} parent=11 // pred_check
          %p288 = pneg %p169
        $region18: #{tpu_custom_call.1} parent=11 // pred_check_branch
          %290 = sbr.rel (%p288) target = $region20
        $region19: #{tpu_custom_call.1} parent=11 // pred_region
          _
        $region20: #{tpu_custom_call.1} parent=11 // pred_fallthru
          _
        // Predicated region
        $region21: #{tpu_custom_call.1} parent=11 // pred_check
          %p291 = pneg %p190
        $region22: #{tpu_custom_call.1} parent=11 // pred_check_branch
          %293 = sbr.rel (%p291) target = $region24
        $region23: #{tpu_custom_call.1} parent=11 // pred_region
          _
        $region24: #{tpu_custom_call.1} parent=11 // pred_fallthru
          _
        // Predicated region
        $region25: #{tpu_custom_call.1} parent=11 // pred_check
          %p294 = pneg %p211
        $region26: #{tpu_custom_call.1} parent=11 // pred_check_branch
          %296 = sbr.rel (%p294) target = $region28
        $region27: #{tpu_custom_call.1} parent=11 // pred_region
          _
        $region28: #{tpu_custom_call.1} parent=11 // pred_fallthru
          _
        // Predicated region
        $region29: #{tpu_custom_call.1} parent=11 // pred_check
          %p297 = pneg %p232
        $region30: #{tpu_custom_call.1} parent=11 // pred_check_branch
          %299 = sbr.rel (%p297) target = $region32
        $region31: #{tpu_custom_call.1} parent=11 // pred_region
          _
        $region32: #{tpu_custom_call.1} parent=11 // pred_fallthru
          _
      $region12: #{tpu_custom_call.1} parent=5 // pred_fallthru
        _
      %p300 = scmp.lt.s32.totalorder %s18, 2
      // Predicated region
      $region33: #{tpu_custom_call.1} parent=5 // pred_check
        %p301 = pneg %p300
      $region34: #{tpu_custom_call.1} parent=5 // pred_check_branch
        %303 = sbr.rel (%p301) target = $region36
      $region35: #{tpu_custom_call.1} parent=5 // pred_region
        // Predicated region
        $region37: #{tpu_custom_call.1} parent=35 // pred_check
          %p304 = pneg %p61
        $region38: #{tpu_custom_call.1} parent=35 // pred_check_branch
          %306 = sbr.rel (%p304) target = $region40
        $region39: #{tpu_custom_call.1} parent=35 // pred_region
          %p307 = scmp.lt.s32.totalorder %s25, 1
          %s308 = scalar_select %p307, %s25, 1
          %p309 = scmp.lt.s32.totalorder %s26, 0
          %s310 = scalar_select %p309, %s26, 0
          %p311 = scmp.lt.s32.totalorder %s27, 0
          %s312 = scalar_select %p311, %s27, 0
          %s313 = sadd.s32 %s312, %s310
          %s314 = sadd.s32 %s313, %s308
          %s315 = smul.addr %s314, 8
          %s316 = scalar_lea.vmem %s0, %s315
        $region40: #{tpu_custom_call.1} parent=35 // pred_fallthru
          _
        // Predicated region
        $region41: #{tpu_custom_call.1} parent=35 // pred_check
          %p317 = pneg %p91
        $region42: #{tpu_custom_call.1} parent=35 // pred_check_branch
          %319 = sbr.rel (%p317) target = $region44
        $region43: #{tpu_custom_call.1} parent=35 // pred_region
          %p320 = scmp.lt.s32.totalorder %s25, 1
          %s321 = scalar_select %p320, %s25, 1
          %p322 = scmp.lt.s32.totalorder %s26, 0
          %s323 = scalar_select %p322, %s26, 0
          %p324 = scmp.lt.s32.totalorder %s27, 0
          %s325 = scalar_select %p324, %s27, 0
          %s326 = sadd.s32 %s325, %s323
          %s327 = sadd.s32 %s326, %s321
          %s328 = smul.addr %s327, 8
          %s329 = scalar_lea.vmem %s1, %s328
        $region44: #{tpu_custom_call.1} parent=35 // pred_fallthru
          _
        // Predicated region
        $region45: #{tpu_custom_call.1} parent=35 // pred_check
          %p330 = pneg %p121
        $region46: #{tpu_custom_call.1} parent=35 // pred_check_branch
          %332 = sbr.rel (%p330) target = $region48
        $region47: #{tpu_custom_call.1} parent=35 // pred_region
          %p333 = scmp.lt.s32.totalorder %s25, 1
          %s334 = scalar_select %p333, %s25, 1
          %p335 = scmp.lt.s32.totalorder %s26, 0
          %s336 = scalar_select %p335, %s26, 0
          %p337 = scmp.lt.s32.totalorder %s27, 0
          %s338 = scalar_select %p337, %s27, 0
          %s339 = sadd.s32 %s338, %s336
          %s340 = sadd.s32 %s339, %s334
          %s341 = smul.addr %s340, 8
          %s342 = scalar_lea.vmem %s2, %s341
        $region48: #{tpu_custom_call.1} parent=35 // pred_fallthru
          _
      $region36: #{tpu_custom_call.1} parent=5 // pred_fallthru
        _
      %p343 = scmp.le.s32.totalorder 1, %s18
      %p344 = scmp.lt.s32.totalorder %s18, 3
      %p345 = pnand %p343, %p344
      %p346 = pneg %p345
      // Predicated region
      $region49: #{tpu_custom_call.1} parent=5 // pred_check
        _
      $region50: #{tpu_custom_call.1} parent=5 // pred_check_branch
        %348 = sbr.rel (%p345) target = $region52
      $region51: #{tpu_custom_call.1} parent=5 // pred_region
        %s349 = ssub.s32 %s18, 1
        // Predicated region
        $region53: #{tpu_custom_call.1} parent=51 // pred_check
          %p350 = pneg %p148
        $region54: #{tpu_custom_call.1} parent=51 // pred_check_branch
          %352 = sbr.rel (%p350) target = $region56
        $region55: #{tpu_custom_call.1} parent=51 // pred_region
          %353 = dma.done [#allocation6], 1536
        $region56: #{tpu_custom_call.1} parent=51 // pred_fallthru
          _
        %p354 = scmp.lt.s32.totalorder %s28, 1
        %s355 = scalar_select %p354, %s28, 1
        %p356 = scmp.lt.s32.totalorder %s29, 0
        %s357 = scalar_select %p356, %s29, 0
        %p358 = scmp.lt.s32.totalorder %s30, 0
        %s359 = scalar_select %p358, %s30, 0
        %s360 = sadd.s32 %s359, %s357
        %s361 = sadd.s32 %s360, %s355
        %s362 = smul.addr %s361, 8
        %s363 = scalar_lea.vmem %s0, %s362
        %p364 = pneg %p67
        %p365 = pneg %p64
        %p366 = scmp.lt.s32.totalorder %s28, 1
        %s367 = scalar_select %p366, %s28, 1
        %p368 = scmp.lt.s32.totalorder %s29, 0
        %s369 = scalar_select %p368, %s29, 0
        %p370 = scmp.lt.s32.totalorder %s30, 0
        %s371 = scalar_select %p370, %s30, 0
        %s372 = sadd.s32 %s371, %s369
        %s373 = sadd.s32 %s372, %s367
        %s374 = smul.addr %s373, 8
        %s375 = scalar_lea.vmem %s1, %s374
        %p376 = pneg %p97
        %p377 = pneg %p94
        %p378 = scmp.lt.s32.totalorder %s28, 1
        %s379 = scalar_select %p378, %s28, 1
        %p380 = scmp.lt.s32.totalorder %s29, 0
        %s381 = scalar_select %p380, %s29, 0
        %p382 = scmp.lt.s32.totalorder %s30, 0
        %s383 = scalar_select %p382, %s30, 0
        %s384 = sadd.s32 %s383, %s381
        %s385 = sadd.s32 %s384, %s379
        %s386 = smul.addr %s385, 8
        %s387 = scalar_lea.vmem %s2, %s386
        %p388 = pneg %p127
        %p389 = pneg %p124
        %p390 = pneg %p148
        %p391 = pneg %p145
        %p392 = pneg %p169
        %p393 = pneg %p166
        %p394 = pneg %p190
        %p395 = pneg %p187
        %p396 = pneg %p211
        %p397 = pneg %p208
        %p398 = pneg %p232
        %p399 = pneg %p229
        %p400 = pneg %p260
        %p401 = pneg %p257
        %s402 = sand.u32 %s247, 1
        %s403 = scalar_lea.sflag [#allocation7], %s402
        %s404 = sand.u32 %s247, 1
        %s405 = smul.addr %s404, 32
        %s406 = scalar_lea.vmem [#allocation8], %s405
        %p407 = scmp.lt.s32.totalorder %s28, 1
        %s408 = scalar_select %p407, %s28, 1
        %p409 = scmp.lt.s32.totalorder %s29, 0
        %s410 = scalar_select %p409, %s29, 0
        %p411 = scmp.lt.s32.totalorder %s30, 0
        %s412 = scalar_select %p411, %s30, 0
        %s413 = sadd.s32 %s412, %s410
        %s414 = sadd.s32 %s413, %s408
        %s415 = smul.addr %s414, 8
        %s416 = scalar_lea.vmem %s0, %s415
        %p417 = scmp.lt.s32.totalorder %s28, 1
        %s418 = scalar_select %p417, %s28, 1
        %p419 = scmp.lt.s32.totalorder %s29, 0
        %s420 = scalar_select %p419, %s29, 0
        %p421 = scmp.lt.s32.totalorder %s30, 0
        %s422 = scalar_select %p421, %s30, 0
        %s423 = sadd.s32 %s422, %s420
        %s424 = sadd.s32 %s423, %s418
        %s425 = smul.addr %s424, 8
        %s426 = scalar_lea.vmem %s1, %s425
        %p427 = scmp.lt.s32.totalorder %s28, 1
        %s428 = scalar_select %p427, %s28, 1
        %p429 = scmp.lt.s32.totalorder %s29, 0
        %s430 = scalar_select %p429, %s29, 0
        %p431 = scmp.lt.s32.totalorder %s30, 0
        %s432 = scalar_select %p431, %s30, 0
        %s433 = sadd.s32 %s432, %s430
        %s434 = sadd.s32 %s433, %s428
        %s435 = smul.addr %s434, 8
        %s436 = scalar_lea.vmem %s2, %s435
        %p437 = scmp.eq.s32.totalorder %s30, 0
        // Predicated region
        $region57: #{tpu_custom_call.1} parent=51 // pred_check
          %p438 = pneg %p437
        $region58: #{tpu_custom_call.1} parent=51 // pred_check_branch
          %440 = sbr.rel (%p438) target = $region60
        $region59: #{tpu_custom_call.1} parent=51 // pred_region
          %v441 = vld [vmem:[%s4] sm:$0x1]
          %v442 = vlaneseq
          %v443 = vshrl.u32 %v442, 7
          %v444 = vsub.s32 0, %v443
          %v445 = vrot.slane %v441, %v444
          %vm446 = vcmask 261120
          %447 = vst.msk [vmem:[#allocation2] sm:$0xff] %vm446, %v445
          %v448 = vld [vmem:[%s4 + $0x1] sm:$0x1]
          %v449 = vlaneseq
          %v450 = vshrl.u32 %v449, 7
          %v451 = vsub.s32 0, %v450
          %v452 = vrot.slane %v448, %v451
          %453 = vst.msk [vmem:[#allocation3] sm:$0xff] %vm446, %v452
          %v454 = vld [vmem:[%s4 + $0x2] sm:$0x1]
          %v455 = vlaneseq
          %v456 = vshrl.u32 %v455, 7
          %v457 = vsub.s32 0, %v456
          %v458 = vrot.slane %v454, %v457
          %459 = vst.msk [vmem:[#allocation4] sm:$0xff] %vm446, %v458
        $region60: #{tpu_custom_call.1} parent=51 // pred_fallthru
          _
        %v460 = vld [vmem:[%s416] sm:$0xff]
        %v461 = vld [vmem:[%s426] sm:$0xff]
        %v462 = vld [vmem:[%s436] sm:$0xff]
        %v463 = vld [vmem:[#allocation2] sm:$0xff]
        %v464 = vld [vmem:[#allocation5] sm:$0xff]
        %v465 = vld [vmem:[#allocation5 + $0x8] sm:$0xff]
        %v466 = vld [vmem:[#allocation5 + $0x10] sm:$0xff]
        %v467 = vld [vmem:[#allocation5 + $0x18] sm:$0xff]
        %vm468 = vcmask 261120
        %v470 = vsel %vm468, %v460, 0
        %472 = vmatprep.subr.mxu0 0.0
        %473 = vmatpush1.msra.mxu0 0.0
        %474 = vmatprep.subr.mxu0 0.0
        %475 = vmatpush1.msra.mxu0 0.0
        %476 = vmatprep.subr.mxu0 0.0
        %477 = vmatpush1.msra.mxu0 0.0
        %478 = vmatprep.subr.mxu0 0.0
        %479 = vmatpush1.msra.mxu0 0.0
        %480 = vmatprep.subr.mxu0 0.0
        %481 = vmatpush1.msra.mxu0 0.0
        %482 = vmatprep.subr.mxu0 0.0
        %483 = vmatpush1.msra.mxu0 0.0
        %484 = vmatprep.subr.mxu0 0.0
        %485 = vmatpush1.msra.mxu0 0.0
        %486 = vmatprep.subr.mxu0 0.0
        %487 = vmatpush1.msra.mxu0 0.0
        %488 = vmatprep.subr.mxu0 0.0
        %489 = vmatpush1.msra.mxu0 0.0
        %490 = vmatprep.subr.mxu0 0.0
        %491 = vmatpush1.msra.mxu0 0.0
        %492 = vmatprep.subr.mxu0 0.0
        %493 = vmatpush1.msra.mxu0 0.0
        %494 = vmatprep.subr.mxu0 0.0
        %495 = vmatpush1.msra.mxu0 0.0
        %496 = vmatprep.subr.mxu0 0.0
        %497 = vmatpush1.msra.mxu0 %v467
        %498 = vmatprep.subr.mxu0 0.0
        %499 = vmatpush1.msra.mxu0 %v466
        %500 = vmatprep.subr.mxu0 0.0
        %501 = vmatpush1.msra.mxu0 %v465
        %502 = vmatprep.subr.mxu0 0.0
        %503 = vmatpush1.msra.mxu0 %v464
        %504 = vmatprep.subr.mxu0 0.0
        %505 = vmatpush2.msra.mxu0 0.0
        %506 = vmatprep.subr.mxu0 0.0
        %507 = vmatpush2.msra.mxu0 0.0
        %508 = vmatprep.subr.mxu0 0.0
        %509 = vmatpush2.msra.mxu0 0.0
        %510 = vmatprep.subr.mxu0 0.0
        %511 = vmatpush2.msra.mxu0 0.0
        %512 = vmatprep.subr.mxu0 0.0
        %513 = vmatpush2.msra.mxu0 0.0
        %514 = vmatprep.subr.mxu0 0.0
        %515 = vmatpush2.msra.mxu0 0.0
        %516 = vmatprep.subr.mxu0 0.0
        %517 = vmatpush2.msra.mxu0 0.0
        %518 = vmatprep.subr.mxu0 0.0
        %519 = vmatpush2.msra.mxu0 0.0
        %520 = vmatprep.subr.mxu0 0.0
        %521 = vmatpush2.msra.mxu0 0.0
        %522 = vmatprep.subr.mxu0 0.0
        %523 = vmatpush2.msra.mxu0 0.0
        %524 = vmatprep.subr.mxu0 0.0
        %525 = vmatpush2.msra.mxu0 0.0
        %526 = vmatprep.subr.mxu0 0.0
        %527 = vmatpush2.msra.mxu0 0.0
        %528 = vmatprep.subr.mxu0 0.0
        %529 = vmatpush2.msra.mxu0 0.0
        %530 = vmatprep.subr.mxu0 0.0
        %531 = vmatpush2.msra.mxu0 0.0
        %532 = vmatprep.subr.mxu0 0.0
        %533 = vmatpush2.msra.mxu0 0.0
        %534 = vmatprep.subr.mxu0 0.0
        %535 = vmatpush2.msra.mxu0 0.0
        %536 = vmatprep.mubr.f32.mxu0 0.0
        %537 = vmatmul.mubr.f32.gmra.mxu0 %v470
        %v538 = vpop.f32.mrf.mxu0
        %v539 = vadd.f32 0.0, %v538
        %v540 = vpop.f32.mrf.mxu0
        %541 = vdwg.mxu0
        %v542 = vadd.f32 %v463, %v539
        %543 = vst.msk [vmem:[#allocation2] sm:$0xff] %vm468, %v542
        %v544 = vld [vmem:[#allocation3] sm:$0xff]
        %s545 = scalar_lea.vmem [#allocation5], 32
        %v546 = vld [vmem:[%s545] sm:$0xff]
        %v547 = vld [vmem:[%s545 + $0x8] sm:$0xff]
        %v548 = vld [vmem:[%s545 + $0x10] sm:$0xff]
        %v549 = vld [vmem:[%s545 + $0x18] sm:$0xff]
        %v551 = vsel %vm468, %v461, 0
        %553 = vmatprep.subr.mxu0 0.0
        %554 = vmatpush1.msra.mxu0 0.0
        %555 = vmatprep.subr.mxu0 0.0
        %556 = vmatpush1.msra.mxu0 0.0
        %557 = vmatprep.subr.mxu0 0.0
        %558 = vmatpush1.msra.mxu0 0.0
        %559 = vmatprep.subr.mxu0 0.0
        %560 = vmatpush1.msra.mxu0 0.0
        %561 = vmatprep.subr.mxu0 0.0
        %562 = vmatpush1.msra.mxu0 0.0
        %563 = vmatprep.subr.mxu0 0.0
        %564 = vmatpush1.msra.mxu0 0.0
        %565 = vmatprep.subr.mxu0 0.0
        %566 = vmatpush1.msra.mxu0 0.0
        %567 = vmatprep.subr.mxu0 0.0
        %568 = vmatpush1.msra.mxu0 0.0
        %569 = vmatprep.subr.mxu0 0.0
        %570 = vmatpush1.msra.mxu0 0.0
        %571 = vmatprep.subr.mxu0 0.0
        %572 = vmatpush1.msra.mxu0 0.0
        %573 = vmatprep.subr.mxu0 0.0
        %574 = vmatpush1.msra.mxu0 0.0
        %575 = vmatprep.subr.mxu0 0.0
        %576 = vmatpush1.msra.mxu0 0.0
        %577 = vmatprep.subr.mxu0 0.0
        %578 = vmatpush1.msra.mxu0 %v549
        %579 = vmatprep.subr.mxu0 0.0
        %580 = vmatpush1.msra.mxu0 %v548
        %581 = vmatprep.subr.mxu0 0.0
        %582 = vmatpush1.msra.mxu0 %v547
        %583 = vmatprep.subr.mxu0 0.0
        %584 = vmatpush1.msra.mxu0 %v546
        %585 = vmatprep.subr.mxu0 0.0
        %586 = vmatpush2.msra.mxu0 0.0
        %587 = vmatprep.subr.mxu0 0.0
        %588 = vmatpush2.msra.mxu0 0.0
        %589 = vmatprep.subr.mxu0 0.0
        %590 = vmatpush2.msra.mxu0 0.0
        %591 = vmatprep.subr.mxu0 0.0
        %592 = vmatpush2.msra.mxu0 0.0
        %593 = vmatprep.subr.mxu0 0.0
        %594 = vmatpush2.msra.mxu0 0.0
        %595 = vmatprep.subr.mxu0 0.0
        %596 = vmatpush2.msra.mxu0 0.0
        %597 = vmatprep.subr.mxu0 0.0
        %598 = vmatpush2.msra.mxu0 0.0
        %599 = vmatprep.subr.mxu0 0.0
        %600 = vmatpush2.msra.mxu0 0.0
        %601 = vmatprep.subr.mxu0 0.0
        %602 = vmatpush2.msra.mxu0 0.0
        %603 = vmatprep.subr.mxu0 0.0
        %604 = vmatpush2.msra.mxu0 0.0
        %605 = vmatprep.subr.mxu0 0.0
        %606 = vmatpush2.msra.mxu0 0.0
        %607 = vmatprep.subr.mxu0 0.0
        %608 = vmatpush2.msra.mxu0 0.0
        %609 = vmatprep.subr.mxu0 0.0
        %610 = vmatpush2.msra.mxu0 0.0
        %611 = vmatprep.subr.mxu0 0.0
        %612 = vmatpush2.msra.mxu0 0.0
        %613 = vmatprep.subr.mxu0 0.0
        %614 = vmatpush2.msra.mxu0 0.0
        %615 = vmatprep.subr.mxu0 0.0
        %616 = vmatpush2.msra.mxu0 0.0
        %617 = vmatprep.mubr.f32.mxu0 0.0
        %618 = vmatmul.mubr.f32.gmra.mxu0 %v551
        %v619 = vpop.f32.mrf.mxu0
        %v620 = vadd.f32 0.0, %v619
        %v621 = vpop.f32.mrf.mxu0
        %622 = vdwg.mxu0
        %v623 = vadd.f32 %v544, %v620
        %624 = vst.msk [vmem:[#allocation3] sm:$0xff] %vm468, %v623
        %v625 = vld [vmem:[#allocation4] sm:$0xff]
        %s626 = scalar_lea.vmem [#allocation5], 64
        %v627 = vld [vmem:[%s626] sm:$0xff]
        %v628 = vld [vmem:[%s626 + $0x8] sm:$0xff]
        %v629 = vld [vmem:[%s626 + $0x10] sm:$0xff]
        %v630 = vld [vmem:[%s626 + $0x18] sm:$0xff]
        %v632 = vsel %vm468, %v462, 0
        %634 = vmatprep.subr.mxu0 0.0
        %635 = vmatpush1.msra.mxu0 0.0
        %636 = vmatprep.subr.mxu0 0.0
        %637 = vmatpush1.msra.mxu0 0.0
        %638 = vmatprep.subr.mxu0 0.0
        %639 = vmatpush1.msra.mxu0 0.0
        %640 = vmatprep.subr.mxu0 0.0
        %641 = vmatpush1.msra.mxu0 0.0
        %642 = vmatprep.subr.mxu0 0.0
        %643 = vmatpush1.msra.mxu0 0.0
        %644 = vmatprep.subr.mxu0 0.0
        %645 = vmatpush1.msra.mxu0 0.0
        %646 = vmatprep.subr.mxu0 0.0
        %647 = vmatpush1.msra.mxu0 0.0
        %648 = vmatprep.subr.mxu0 0.0
        %649 = vmatpush1.msra.mxu0 0.0
        %650 = vmatprep.subr.mxu0 0.0
        %651 = vmatpush1.msra.mxu0 0.0
        %652 = vmatprep.subr.mxu0 0.0
        %653 = vmatpush1.msra.mxu0 0.0
        %654 = vmatprep.subr.mxu0 0.0
        %655 = vmatpush1.msra.mxu0 0.0
        %656 = vmatprep.subr.mxu0 0.0
        %657 = vmatpush1.msra.mxu0 0.0
        %658 = vmatprep.subr.mxu0 0.0
        %659 = vmatpush1.msra.mxu0 %v630
        %660 = vmatprep.subr.mxu0 0.0
        %661 = vmatpush1.msra.mxu0 %v629
        %662 = vmatprep.subr.mxu0 0.0
        %663 = vmatpush1.msra.mxu0 %v628
        %664 = vmatprep.subr.mxu0 0.0
        %665 = vmatpush1.msra.mxu0 %v627
        %666 = vmatprep.subr.mxu0 0.0
        %667 = vmatpush2.msra.mxu0 0.0
        %668 = vmatprep.subr.mxu0 0.0
        %669 = vmatpush2.msra.mxu0 0.0
        %670 = vmatprep.subr.mxu0 0.0
        %671 = vmatpush2.msra.mxu0 0.0
        %672 = vmatprep.subr.mxu0 0.0
        %673 = vmatpush2.msra.mxu0 0.0
        %674 = vmatprep.subr.mxu0 0.0
        %675 = vmatpush2.msra.mxu0 0.0
        %676 = vmatprep.subr.mxu0 0.0
        %677 = vmatpush2.msra.mxu0 0.0
        %678 = vmatprep.subr.mxu0 0.0
        %679 = vmatpush2.msra.mxu0 0.0
        %680 = vmatprep.subr.mxu0 0.0
        %681 = vmatpush2.msra.mxu0 0.0
        %682 = vmatprep.subr.mxu0 0.0
        %683 = vmatpush2.msra.mxu0 0.0
        %684 = vmatprep.subr.mxu0 0.0
        %685 = vmatpush2.msra.mxu0 0.0
        %686 = vmatprep.subr.mxu0 0.0
        %687 = vmatpush2.msra.mxu0 0.0
        %688 = vmatprep.subr.mxu0 0.0
        %689 = vmatpush2.msra.mxu0 0.0
        %690 = vmatprep.subr.mxu0 0.0
        %691 = vmatpush2.msra.mxu0 0.0
        %692 = vmatprep.subr.mxu0 0.0
        %693 = vmatpush2.msra.mxu0 0.0
        %694 = vmatprep.subr.mxu0 0.0
        %695 = vmatpush2.msra.mxu0 0.0
        %696 = vmatprep.subr.mxu0 0.0
        %697 = vmatpush2.msra.mxu0 0.0
        %698 = vmatprep.mubr.f32.mxu0 0.0
        %699 = vmatmul.mubr.f32.gmra.mxu0 %v632
        %v700 = vpop.f32.mrf.mxu0
        %v701 = vadd.f32 0.0, %v700
        %v702 = vpop.f32.mrf.mxu0
        %703 = vdwg.mxu0
        %v704 = vadd.f32 %v625, %v701
        %705 = vst.msk [vmem:[#allocation4] sm:$0xff] %vm468, %v704
        // Predicated region
        $region61: #{tpu_custom_call.1} parent=51 // pred_check
          %p706 = pneg %p437
        $region62: #{tpu_custom_call.1} parent=51 // pred_check_branch
          %708 = sbr.rel (%p706) target = $region64
        $region63: #{tpu_custom_call.1} parent=51 // pred_region
          %v709 = vld [vmem:[#allocation2] sm:$0xff]
          %v710 = vld [vmem:[#allocation3] sm:$0xff]
          %v711 = vld [vmem:[#allocation4] sm:$0xff]
          %v712 = vld [vmem:[%s5] sm:$0xff]
          %v713 = vld [vmem:[%s5 + $0x8] sm:$0xff]
          %v714 = vld [vmem:[%s5 + $0x10] sm:$0xff]
          %v715 = vld [vmem:[%s5 + $0x18] sm:$0xff]
          %v716 = vld [vmem:[%s6] sm:$0xf]
          %v717 = vld [vmem:[%s7] sm:$0xff]
          %v718 = vld [vmem:[%s7 + $0x8] sm:$0xff]
          %v719 = vld [vmem:[%s7 + $0x10] sm:$0xff]
          %v720 = vld [vmem:[%s7 + $0x18] sm:$0xff]
          %722 = vrot.lane.b32.xlu0 %v709, 8
          %v723 = vpop.permute.xlu0 %722
          %725 = vrot.lane.b32.xlu0 %v709, 16
          %v726 = vpop.permute.xlu0 %725
          %728 = vrot.lane.b32.xlu0 %v709, 24
          %v729 = vpop.permute.xlu0 %728
          %vm731 = vcmask 64512
          %v732 = vsel %vm731, %v709, %v723
          %vm733 = vcmask 130048
          %v734 = vsel %vm733, %v732, %v726
          %vm735 = vcmask 195584
          %v736 = vsel %vm735, %v734, %v729
          %v737 = vmul.f32 %v736, %v710
          %v739 = vsel %vm468, %v737, 0
          %741 = vmatprep.subr.mxu0 0.0
          %742 = vmatpush1.msra.mxu0 0.0
          %743 = vmatprep.subr.mxu0 0.0
          %744 = vmatpush1.msra.mxu0 0.0
          %745 = vmatprep.subr.mxu0 0.0
          %746 = vmatpush1.msra.mxu0 0.0
          %747 = vmatprep.subr.mxu0 0.0
          %748 = vmatpush1.msra.mxu0 0.0
          %749 = vmatprep.subr.mxu0 0.0
          %750 = vmatpush1.msra.mxu0 0.0
          %751 = vmatprep.subr.mxu0 0.0
          %752 = vmatpush1.msra.mxu0 0.0
          %753 = vmatprep.subr.mxu0 0.0
          %754 = vmatpush1.msra.mxu0 0.0
          %755 = vmatprep.subr.mxu0 0.0
          %756 = vmatpush1.msra.mxu0 0.0
          %757 = vmatprep.subr.mxu0 0.0
          %758 = vmatpush1.msra.mxu0 0.0
          %759 = vmatprep.subr.mxu0 0.0
          %760 = vmatpush1.msra.mxu0 0.0
          %761 = vmatprep.subr.mxu0 0.0
          %762 = vmatpush1.msra.mxu0 0.0
          %763 = vmatprep.subr.mxu0 0.0
          %764 = vmatpush1.msra.mxu0 0.0
          %765 = vmatprep.subr.mxu0 0.0
          %766 = vmatpush1.msra.mxu0 %v715
          %767 = vmatprep.subr.mxu0 0.0
          %768 = vmatpush1.msra.mxu0 %v714
          %769 = vmatprep.subr.mxu0 0.0
          %770 = vmatpush1.msra.mxu0 %v713
          %771 = vmatprep.subr.mxu0 0.0
          %772 = vmatpush1.msra.mxu0 %v712
          %773 = vmatprep.subr.mxu0 0.0
          %774 = vmatpush2.msra.mxu0 0.0
          %775 = vmatprep.subr.mxu0 0.0
          %776 = vmatpush2.msra.mxu0 0.0
          %777 = vmatprep.subr.mxu0 0.0
          %778 = vmatpush2.msra.mxu0 0.0
          %779 = vmatprep.subr.mxu0 0.0
          %780 = vmatpush2.msra.mxu0 0.0
          %781 = vmatprep.subr.mxu0 0.0
          %782 = vmatpush2.msra.mxu0 0.0
          %783 = vmatprep.subr.mxu0 0.0
          %784 = vmatpush2.msra.mxu0 0.0
          %785 = vmatprep.subr.mxu0 0.0
          %786 = vmatpush2.msra.mxu0 0.0
          %787 = vmatprep.subr.mxu0 0.0
          %788 = vmatpush2.msra.mxu0 0.0
          %789 = vmatprep.subr.mxu0 0.0
          %790 = vmatpush2.msra.mxu0 0.0
          %791 = vmatprep.subr.mxu0 0.0
          %792 = vmatpush2.msra.mxu0 0.0
          %793 = vmatprep.subr.mxu0 0.0
          %794 = vmatpush2.msra.mxu0 0.0
          %795 = vmatprep.subr.mxu0 0.0
          %796 = vmatpush2.msra.mxu0 0.0
          %797 = vmatprep.subr.mxu0 0.0
          %798 = vmatpush2.msra.mxu0 0.0
          %799 = vmatprep.subr.mxu0 0.0
          %800 = vmatpush2.msra.mxu0 0.0
          %801 = vmatprep.subr.mxu0 0.0
          %802 = vmatpush2.msra.mxu0 0.0
          %803 = vmatprep.subr.mxu0 0.0
          %804 = vmatpush2.msra.mxu0 0.0
          %805 = vmatprep.mubr.f32.mxu0 0.0
          %806 = vmatmul.mubr.f32.gmra.mxu0 %v739
          %v807 = vpop.f32.mrf.mxu0
          %v808 = vadd.f32 0.0, %v807
          %v809 = vpop.f32.mrf.mxu0
          %810 = vdwg.mxu0
          %vm811 = vcmask 31744
          %v812 = vsel %vm811, %v808, -inf
          %813 = vmax.xlane.f32.xlu0 %v812
          %v814 = vpop.xlane.xlu0 %813
          %v815 = vsub.f32 %v808, %v814
          %v816 = vmul.f32 %v815, 1.442695
          %v817 = vpow.pop %v816
          %v818 = vsel %vm811, %v817, 0.0
          %819 = vadd.xlane.f32.xlu0 %v818
          %v820 = vpop.xlane.xlu0 %819
          %v821 = vrcp.pop %v820
          %v822 = vmul.f32 %v817, %v821
          %v824 = vsel %vm811, %v822, 0
          %vm826 = vcmask 1043456
          %v828 = vsel %vm826, %v716, 0
          %830 = vmatprep.subr.mxu0 0.0
          %831 = vmatpush1.msra.mxu0 0.0
          %832 = vmatprep.subr.mxu0 0.0
          %833 = vmatpush1.msra.mxu0 0.0
          %834 = vmatprep.subr.mxu0 0.0
          %835 = vmatpush1.msra.mxu0 0.0
          %836 = vmatprep.subr.mxu0 0.0
          %837 = vmatpush1.msra.mxu0 0.0
          %838 = vmatprep.subr.mxu0 0.0
          %839 = vmatpush1.msra.mxu0 0.0
          %840 = vmatprep.subr.mxu0 0.0
          %841 = vmatpush1.msra.mxu0 0.0
          %842 = vmatprep.subr.mxu0 0.0
          %843 = vmatpush1.msra.mxu0 0.0
          %844 = vmatprep.subr.mxu0 0.0
          %845 = vmatpush1.msra.mxu0 0.0
          %846 = vmatprep.subr.mxu0 0.0
          %847 = vmatpush1.msra.mxu0 0.0
          %848 = vmatprep.subr.mxu0 0.0
          %849 = vmatpush1.msra.mxu0 0.0
          %850 = vmatprep.subr.mxu0 0.0
          %851 = vmatpush1.msra.mxu0 0.0
          %852 = vmatprep.subr.mxu0 0.0
          %853 = vmatpush1.msra.mxu0 0.0
          %854 = vmatprep.subr.mxu0 0.0
          %855 = vmatpush1.msra.mxu0 0.0
          %856 = vmatprep.subr.mxu0 0.0
          %857 = vmatpush1.msra.mxu0 0.0
          %858 = vmatprep.subr.mxu0 0.0
          %859 = vmatpush1.msra.mxu0 0.0
          %860 = vmatprep.subr.mxu0 0.0
          %861 = vmatpush1.msra.mxu0 %v828
          %862 = vmatprep.subr.mxu0 0.0
          %863 = vmatpush2.msra.mxu0 0.0
          %864 = vmatprep.subr.mxu0 0.0
          %865 = vmatpush2.msra.mxu0 0.0
          %866 = vmatprep.subr.mxu0 0.0
          %867 = vmatpush2.msra.mxu0 0.0
          %868 = vmatprep.subr.mxu0 0.0
          %869 = vmatpush2.msra.mxu0 0.0
          %870 = vmatprep.subr.mxu0 0.0
          %871 = vmatpush2.msra.mxu0 0.0
          %872 = vmatprep.subr.mxu0 0.0
          %873 = vmatpush2.msra.mxu0 0.0
          %874 = vmatprep.subr.mxu0 0.0
          %875 = vmatpush2.msra.mxu0 0.0
          %876 = vmatprep.subr.mxu0 0.0
          %877 = vmatpush2.msra.mxu0 0.0
          %878 = vmatprep.subr.mxu0 0.0
          %879 = vmatpush2.msra.mxu0 0.0
          %880 = vmatprep.subr.mxu0 0.0
          %881 = vmatpush2.msra.mxu0 0.0
          %882 = vmatprep.subr.mxu0 0.0
          %883 = vmatpush2.msra.mxu0 0.0
          %884 = vmatprep.subr.mxu0 0.0
          %885 = vmatpush2.msra.mxu0 0.0
          %886 = vmatprep.subr.mxu0 0.0
          %887 = vmatpush2.msra.mxu0 0.0
          %888 = vmatprep.subr.mxu0 0.0
          %889 = vmatpush2.msra.mxu0 0.0
          %890 = vmatprep.subr.mxu0 0.0
          %891 = vmatpush2.msra.mxu0 0.0
          %892 = vmatprep.subr.mxu0 0.0
          %893 = vmatpush2.msra.mxu0 0.0
          %894 = vmatprep.mubr.f32.mxu0 0.0
          %895 = vmatmul.mubr.f32.gmra.mxu0 %v824
          %v896 = vpop.f32.mrf.mxu0
          %v897 = vadd.f32 0.0, %v896
          %v898 = vpop.f32.mrf.mxu0
          %899 = vdwg.mxu0
          %v900 = vmul.f32 %v897, %v711
          %v902 = vsel %vm468, %v900, 0
          %904 = vmatprep.subr.mxu0 0.0
          %905 = vmatpush1.msra.mxu0 0.0
          %906 = vmatprep.subr.mxu0 0.0
          %907 = vmatpush1.msra.mxu0 0.0
          %908 = vmatprep.subr.mxu0 0.0
          %909 = vmatpush1.msra.mxu0 0.0
          %910 = vmatprep.subr.mxu0 0.0
          %911 = vmatpush1.msra.mxu0 0.0
          %912 = vmatprep.subr.mxu0 0.0
          %913 = vmatpush1.msra.mxu0 0.0
          %914 = vmatprep.subr.mxu0 0.0
          %915 = vmatpush1.msra.mxu0 0.0
          %916 = vmatprep.subr.mxu0 0.0
          %917 = vmatpush1.msra.mxu0 0.0
          %918 = vmatprep.subr.mxu0 0.0
          %919 = vmatpush1.msra.mxu0 0.0
          %920 = vmatprep.subr.mxu0 0.0
          %921 = vmatpush1.msra.mxu0 0.0
          %922 = vmatprep.subr.mxu0 0.0
          %923 = vmatpush1.msra.mxu0 0.0
          %924 = vmatprep.subr.mxu0 0.0
          %925 = vmatpush1.msra.mxu0 0.0
          %926 = vmatprep.subr.mxu0 0.0
          %927 = vmatpush1.msra.mxu0 0.0
          %928 = vmatprep.subr.mxu0 0.0
          %929 = vmatpush1.msra.mxu0 %v720
          %930 = vmatprep.subr.mxu0 0.0
          %931 = vmatpush1.msra.mxu0 %v719
          %932 = vmatprep.subr.mxu0 0.0
          %933 = vmatpush1.msra.mxu0 %v718
          %934 = vmatprep.subr.mxu0 0.0
          %935 = vmatpush1.msra.mxu0 %v717
          %936 = vmatprep.subr.mxu0 0.0
          %937 = vmatpush2.msra.mxu0 0.0
          %938 = vmatprep.subr.mxu0 0.0
          %939 = vmatpush2.msra.mxu0 0.0
          %940 = vmatprep.subr.mxu0 0.0
          %941 = vmatpush2.msra.mxu0 0.0
          %942 = vmatprep.subr.mxu0 0.0
          %943 = vmatpush2.msra.mxu0 0.0
          %944 = vmatprep.subr.mxu0 0.0
          %945 = vmatpush2.msra.mxu0 0.0
          %946 = vmatprep.subr.mxu0 0.0
          %947 = vmatpush2.msra.mxu0 0.0
          %948 = vmatprep.subr.mxu0 0.0
          %949 = vmatpush2.msra.mxu0 0.0
          %950 = vmatprep.subr.mxu0 0.0
          %951 = vmatpush2.msra.mxu0 0.0
          %952 = vmatprep.subr.mxu0 0.0
          %953 = vmatpush2.msra.mxu0 0.0
          %954 = vmatprep.subr.mxu0 0.0
          %955 = vmatpush2.msra.mxu0 0.0
          %956 = vmatprep.subr.mxu0 0.0
          %957 = vmatpush2.msra.mxu0 0.0
          %958 = vmatprep.subr.mxu0 0.0
          %959 = vmatpush2.msra.mxu0 0.0
          %960 = vmatprep.subr.mxu0 0.0
          %961 = vmatpush2.msra.mxu0 0.0
          %962 = vmatprep.subr.mxu0 0.0
          %963 = vmatpush2.msra.mxu0 0.0
          %964 = vmatprep.subr.mxu0 0.0
          %965 = vmatpush2.msra.mxu0 0.0
          %966 = vmatprep.subr.mxu0 0.0
          %967 = vmatpush2.msra.mxu0 0.0
          %968 = vmatprep.mubr.f32.mxu0 0.0
          %969 = vmatmul.mubr.f32.gmra.mxu0 %v902
          %v970 = vpop.f32.mrf.mxu0
          %v971 = vadd.f32 0.0, %v970
          %v972 = vpop.f32.mrf.mxu0
          %973 = vdwg.mxu0
          %974 = vrot.lane.b32.xlu0 %v709, 120
          %v975 = vpop.permute.xlu0 %974
          %v977 = vsel %vm731, %v975, %v709
          %v978 = vsel %vm733, %v977, %v723
          %v979 = vsel %vm735, %v978, %v726
          %v980 = vmul.f32 %v979, %v710
          %v982 = vsel %vm468, %v980, 0
          %984 = vmatprep.subr.mxu0 0.0
          %985 = vmatpush1.msra.mxu0 0.0
          %986 = vmatprep.subr.mxu0 0.0
          %987 = vmatpush1.msra.mxu0 0.0
          %988 = vmatprep.subr.mxu0 0.0
          %989 = vmatpush1.msra.mxu0 0.0
          %990 = vmatprep.subr.mxu0 0.0
          %991 = vmatpush1.msra.mxu0 0.0
          %992 = vmatprep.subr.mxu0 0.0
          %993 = vmatpush1.msra.mxu0 0.0
          %994 = vmatprep.subr.mxu0 0.0
          %995 = vmatpush1.msra.mxu0 0.0
          %996 = vmatprep.subr.mxu0 0.0
          %997 = vmatpush1.msra.mxu0 0.0
          %998 = vmatprep.subr.mxu0 0.0
          %999 = vmatpush1.msra.mxu0 0.0
          %1000 = vmatprep.subr.mxu0 0.0
          %1001 = vmatpush1.msra.mxu0 0.0
          %1002 = vmatprep.subr.mxu0 0.0
          %1003 = vmatpush1.msra.mxu0 0.0
          %1004 = vmatprep.subr.mxu0 0.0
          %1005 = vmatpush1.msra.mxu0 0.0
          %1006 = vmatprep.subr.mxu0 0.0
          %1007 = vmatpush1.msra.mxu0 0.0
          %1008 = vmatprep.subr.mxu0 0.0
          %1009 = vmatpush1.msra.mxu0 %v715
          %1010 = vmatprep.subr.mxu0 0.0
          %1011 = vmatpush1.msra.mxu0 %v714
          %1012 = vmatprep.subr.mxu0 0.0
          %1013 = vmatpush1.msra.mxu0 %v713
          %1014 = vmatprep.subr.mxu0 0.0
          %1015 = vmatpush1.msra.mxu0 %v712
          %1016 = vmatprep.subr.mxu0 0.0
          %1017 = vmatpush2.msra.mxu0 0.0
          %1018 = vmatprep.subr.mxu0 0.0
          %1019 = vmatpush2.msra.mxu0 0.0
          %1020 = vmatprep.subr.mxu0 0.0
          %1021 = vmatpush2.msra.mxu0 0.0
          %1022 = vmatprep.subr.mxu0 0.0
          %1023 = vmatpush2.msra.mxu0 0.0
          %1024 = vmatprep.subr.mxu0 0.0
          %1025 = vmatpush2.msra.mxu0 0.0
          %1026 = vmatprep.subr.mxu0 0.0
          %1027 = vmatpush2.msra.mxu0 0.0
          %1028 = vmatprep.subr.mxu0 0.0
          %1029 = vmatpush2.msra.mxu0 0.0
          %1030 = vmatprep.subr.mxu0 0.0
          %1031 = vmatpush2.msra.mxu0 0.0
          %1032 = vmatprep.subr.mxu0 0.0
          %1033 = vmatpush2.msra.mxu0 0.0
          %1034 = vmatprep.subr.mxu0 0.0
          %1035 = vmatpush2.msra.mxu0 0.0
          %1036 = vmatprep.subr.mxu0 0.0
          %1037 = vmatpush2.msra.mxu0 0.0
          %1038 = vmatprep.subr.mxu0 0.0
          %1039 = vmatpush2.msra.mxu0 0.0
          %1040 = vmatprep.subr.mxu0 0.0
          %1041 = vmatpush2.msra.mxu0 0.0
          %1042 = vmatprep.subr.mxu0 0.0
          %1043 = vmatpush2.msra.mxu0 0.0
          %1044 = vmatprep.subr.mxu0 0.0
          %1045 = vmatpush2.msra.mxu0 0.0
          %1046 = vmatprep.subr.mxu0 0.0
          %1047 = vmatpush2.msra.mxu0 0.0
          %1048 = vmatprep.mubr.f32.mxu0 0.0
          %1049 = vmatmul.mubr.f32.gmra.mxu0 %v982
          %v1050 = vpop.f32.mrf.mxu0
          %v1051 = vadd.f32 0.0, %v1050
          %v1052 = vpop.f32.mrf.mxu0
          %1053 = vdwg.mxu0
          %v1054 = vsel %vm811, %v1051, -inf
          %1055 = vmax.xlane.f32.xlu0 %v1054
          %v1056 = vpop.xlane.xlu0 %1055
          %v1057 = vsub.f32 %v1051, %v1056
          %v1058 = vmul.f32 %v1057, 1.442695
          %v1059 = vpow.pop %v1058
          %v1060 = vsel %vm811, %v1059, 0.0
          %1061 = vadd.xlane.f32.xlu0 %v1060
          %v1062 = vpop.xlane.xlu0 %1061
          %v1063 = vrcp.pop %v1062
          %v1064 = vmul.f32 %v1059, %v1063
          %v1066 = vsel %vm811, %v1064, 0
          %1068 = vmatprep.subr.mxu0 0.0
          %1069 = vmatpush1.msra.mxu0 0.0
          %1070 = vmatprep.subr.mxu0 0.0
          %1071 = vmatpush1.msra.mxu0 0.0
          %1072 = vmatprep.subr.mxu0 0.0
          %1073 = vmatpush1.msra.mxu0 0.0
          %1074 = vmatprep.subr.mxu0 0.0
          %1075 = vmatpush1.msra.mxu0 0.0
          %1076 = vmatprep.subr.mxu0 0.0
          %1077 = vmatpush1.msra.mxu0 0.0
          %1078 = vmatprep.subr.mxu0 0.0
          %1079 = vmatpush1.msra.mxu0 0.0
          %1080 = vmatprep.subr.mxu0 0.0
          %1081 = vmatpush1.msra.mxu0 0.0
          %1082 = vmatprep.subr.mxu0 0.0
          %1083 = vmatpush1.msra.mxu0 0.0
          %1084 = vmatprep.subr.mxu0 0.0
          %1085 = vmatpush1.msra.mxu0 0.0
          %1086 = vmatprep.subr.mxu0 0.0
          %1087 = vmatpush1.msra.mxu0 0.0
          %1088 = vmatprep.subr.mxu0 0.0
          %1089 = vmatpush1.msra.mxu0 0.0
          %1090 = vmatprep.subr.mxu0 0.0
          %1091 = vmatpush1.msra.mxu0 0.0
          %1092 = vmatprep.subr.mxu0 0.0
          %1093 = vmatpush1.msra.mxu0 0.0
          %1094 = vmatprep.subr.mxu0 0.0
          %1095 = vmatpush1.msra.mxu0 0.0
          %1096 = vmatprep.subr.mxu0 0.0
          %1097 = vmatpush1.msra.mxu0 0.0
          %1098 = vmatprep.subr.mxu0 0.0
          %1099 = vmatpush1.msra.mxu0 %v828
          %1100 = vmatprep.subr.mxu0 0.0
          %1101 = vmatpush2.msra.mxu0 0.0
          %1102 = vmatprep.subr.mxu0 0.0
          %1103 = vmatpush2.msra.mxu0 0.0
          %1104 = vmatprep.subr.mxu0 0.0
          %1105 = vmatpush2.msra.mxu0 0.0
          %1106 = vmatprep.subr.mxu0 0.0
          %1107 = vmatpush2.msra.mxu0 0.0
          %1108 = vmatprep.subr.mxu0 0.0
          %1109 = vmatpush2.msra.mxu0 0.0
          %1110 = vmatprep.subr.mxu0 0.0
          %1111 = vmatpush2.msra.mxu0 0.0
          %1112 = vmatprep.subr.mxu0 0.0
          %1113 = vmatpush2.msra.mxu0 0.0
          %1114 = vmatprep.subr.mxu0 0.0
          %1115 = vmatpush2.msra.mxu0 0.0
          %1116 = vmatprep.subr.mxu0 0.0
          %1117 = vmatpush2.msra.mxu0 0.0
          %1118 = vmatprep.subr.mxu0 0.0
          %1119 = vmatpush2.msra.mxu0 0.0
          %1120 = vmatprep.subr.mxu0 0.0
          %1121 = vmatpush2.msra.mxu0 0.0
          %1122 = vmatprep.subr.mxu0 0.0
          %1123 = vmatpush2.msra.mxu0 0.0
          %1124 = vmatprep.subr.mxu0 0.0
          %1125 = vmatpush2.msra.mxu0 0.0
          %1126 = vmatprep.subr.mxu0 0.0
          %1127 = vmatpush2.msra.mxu0 0.0
          %1128 = vmatprep.subr.mxu0 0.0
          %1129 = vmatpush2.msra.mxu0 0.0
          %1130 = vmatprep.subr.mxu0 0.0
          %1131 = vmatpush2.msra.mxu0 0.0
          %1132 = vmatprep.mubr.f32.mxu0 0.0
          %1133 = vmatmul.mubr.f32.gmra.mxu0 %v1066
          %v1134 = vpop.f32.mrf.mxu0
          %v1135 = vadd.f32 0.0, %v1134
          %v1136 = vpop.f32.mrf.mxu0
          %1137 = vdwg.mxu0
          %v1138 = vmul.f32 %v1135, %v711
          %v1140 = vsel %vm468, %v1138, 0
          %1142 = vmatprep.subr.mxu0 0.0
          %1143 = vmatpush1.msra.mxu0 0.0
          %1144 = vmatprep.subr.mxu0 0.0
          %1145 = vmatpush1.msra.mxu0 0.0
          %1146 = vmatprep.subr.mxu0 0.0
          %1147 = vmatpush1.msra.mxu0 0.0
          %1148 = vmatprep.subr.mxu0 0.0
          %1149 = vmatpush1.msra.mxu0 0.0
          %1150 = vmatprep.subr.mxu0 0.0
          %1151 = vmatpush1.msra.mxu0 0.0
          %1152 = vmatprep.subr.mxu0 0.0
          %1153 = vmatpush1.msra.mxu0 0.0
          %1154 = vmatprep.subr.mxu0 0.0
          %1155 = vmatpush1.msra.mxu0 0.0
          %1156 = vmatprep.subr.mxu0 0.0
          %1157 = vmatpush1.msra.mxu0 0.0
          %1158 = vmatprep.subr.mxu0 0.0
          %1159 = vmatpush1.msra.mxu0 0.0
          %1160 = vmatprep.subr.mxu0 0.0
          %1161 = vmatpush1.msra.mxu0 0.0
          %1162 = vmatprep.subr.mxu0 0.0
          %1163 = vmatpush1.msra.mxu0 0.0
          %1164 = vmatprep.subr.mxu0 0.0
          %1165 = vmatpush1.msra.mxu0 0.0
          %1166 = vmatprep.subr.mxu0 0.0
          %1167 = vmatpush1.msra.mxu0 %v720
          %1168 = vmatprep.subr.mxu0 0.0
          %1169 = vmatpush1.msra.mxu0 %v719
          %1170 = vmatprep.subr.mxu0 0.0
          %1171 = vmatpush1.msra.mxu0 %v718
          %1172 = vmatprep.subr.mxu0 0.0
          %1173 = vmatpush1.msra.mxu0 %v717
          %1174 = vmatprep.subr.mxu0 0.0
          %1175 = vmatpush2.msra.mxu0 0.0
          %1176 = vmatprep.subr.mxu0 0.0
          %1177 = vmatpush2.msra.mxu0 0.0
          %1178 = vmatprep.subr.mxu0 0.0
          %1179 = vmatpush2.msra.mxu0 0.0
          %1180 = vmatprep.subr.mxu0 0.0
          %1181 = vmatpush2.msra.mxu0 0.0
          %1182 = vmatprep.subr.mxu0 0.0
          %1183 = vmatpush2.msra.mxu0 0.0
          %1184 = vmatprep.subr.mxu0 0.0
          %1185 = vmatpush2.msra.mxu0 0.0
          %1186 = vmatprep.subr.mxu0 0.0
          %1187 = vmatpush2.msra.mxu0 0.0
          %1188 = vmatprep.subr.mxu0 0.0
          %1189 = vmatpush2.msra.mxu0 0.0
          %1190 = vmatprep.subr.mxu0 0.0
          %1191 = vmatpush2.msra.mxu0 0.0
          %1192 = vmatprep.subr.mxu0 0.0
          %1193 = vmatpush2.msra.mxu0 0.0
          %1194 = vmatprep.subr.mxu0 0.0
          %1195 = vmatpush2.msra.mxu0 0.0
          %1196 = vmatprep.subr.mxu0 0.0
          %1197 = vmatpush2.msra.mxu0 0.0
          %1198 = vmatprep.subr.mxu0 0.0
          %1199 = vmatpush2.msra.mxu0 0.0
          %1200 = vmatprep.subr.mxu0 0.0
          %1201 = vmatpush2.msra.mxu0 0.0
          %1202 = vmatprep.subr.mxu0 0.0
          %1203 = vmatpush2.msra.mxu0 0.0
          %1204 = vmatprep.subr.mxu0 0.0
          %1205 = vmatpush2.msra.mxu0 0.0
          %1206 = vmatprep.mubr.f32.mxu0 0.0
          %1207 = vmatmul.mubr.f32.gmra.mxu0 %v1140
          %v1208 = vpop.f32.mrf.mxu0
          %v1209 = vadd.f32 0.0, %v1208
          %v1210 = vpop.f32.mrf.mxu0
          %1211 = vdwg.mxu0
          %1212 = vrot.lane.b32.xlu0 %v709, 112
          %v1213 = vpop.permute.xlu0 %1212
          %v1215 = vsel %vm731, %v1213, %v975
          %v1216 = vsel %vm733, %v1215, %v709
          %v1217 = vsel %vm735, %v1216, %v723
          %v1218 = vmul.f32 %v1217, %v710
          %v1220 = vsel %vm468, %v1218, 0
          %1222 = vmatprep.subr.mxu0 0.0
          %1223 = vmatpush1.msra.mxu0 0.0
          %1224 = vmatprep.subr.mxu0 0.0
          %1225 = vmatpush1.msra.mxu0 0.0
          %1226 = vmatprep.subr.mxu0 0.0
          %1227 = vmatpush1.msra.mxu0 0.0
          %1228 = vmatprep.subr.mxu0 0.0
          %1229 = vmatpush1.msra.mxu0 0.0
          %1230 = vmatprep.subr.mxu0 0.0
          %1231 = vmatpush1.msra.mxu0 0.0
          %1232 = vmatprep.subr.mxu0 0.0
          %1233 = vmatpush1.msra.mxu0 0.0
          %1234 = vmatprep.subr.mxu0 0.0
          %1235 = vmatpush1.msra.mxu0 0.0
          %1236 = vmatprep.subr.mxu0 0.0
          %1237 = vmatpush1.msra.mxu0 0.0
          %1238 = vmatprep.subr.mxu0 0.0
          %1239 = vmatpush1.msra.mxu0 0.0
          %1240 = vmatprep.subr.mxu0 0.0
          %1241 = vmatpush1.msra.mxu0 0.0
          %1242 = vmatprep.subr.mxu0 0.0
          %1243 = vmatpush1.msra.mxu0 0.0
          %1244 = vmatprep.subr.mxu0 0.0
          %1245 = vmatpush1.msra.mxu0 0.0
          %1246 = vmatprep.subr.mxu0 0.0
          %1247 = vmatpush1.msra.mxu0 %v715
          %1248 = vmatprep.subr.mxu0 0.0
          %1249 = vmatpush1.msra.mxu0 %v714
          %1250 = vmatprep.subr.mxu0 0.0
          %1251 = vmatpush1.msra.mxu0 %v713
          %1252 = vmatprep.subr.mxu0 0.0
          %1253 = vmatpush1.msra.mxu0 %v712
          %1254 = vmatprep.subr.mxu0 0.0
          %1255 = vmatpush2.msra.mxu0 0.0
          %1256 = vmatprep.subr.mxu0 0.0
          %1257 = vmatpush2.msra.mxu0 0.0
          %1258 = vmatprep.subr.mxu0 0.0
          %1259 = vmatpush2.msra.mxu0 0.0
          %1260 = vmatprep.subr.mxu0 0.0
          %1261 = vmatpush2.msra.mxu0 0.0
          %1262 = vmatprep.subr.mxu0 0.0
          %1263 = vmatpush2.msra.mxu0 0.0
          %1264 = vmatprep.subr.mxu0 0.0
          %1265 = vmatpush2.msra.mxu0 0.0
          %1266 = vmatprep.subr.mxu0 0.0
          %1267 = vmatpush2.msra.mxu0 0.0
          %1268 = vmatprep.subr.mxu0 0.0
          %1269 = vmatpush2.msra.mxu0 0.0
          %1270 = vmatprep.subr.mxu0 0.0
          %1271 = vmatpush2.msra.mxu0 0.0
          %1272 = vmatprep.subr.mxu0 0.0
          %1273 = vmatpush2.msra.mxu0 0.0
          %1274 = vmatprep.subr.mxu0 0.0
          %1275 = vmatpush2.msra.mxu0 0.0
          %1276 = vmatprep.subr.mxu0 0.0
          %1277 = vmatpush2.msra.mxu0 0.0
          %1278 = vmatprep.subr.mxu0 0.0
          %1279 = vmatpush2.msra.mxu0 0.0
          %1280 = vmatprep.subr.mxu0 0.0
          %1281 = vmatpush2.msra.mxu0 0.0
          %1282 = vmatprep.subr.mxu0 0.0
          %1283 = vmatpush2.msra.mxu0 0.0
          %1284 = vmatprep.subr.mxu0 0.0
          %1285 = vmatpush2.msra.mxu0 0.0
          %1286 = vmatprep.mubr.f32.mxu0 0.0
          %1287 = vmatmul.mubr.f32.gmra.mxu0 %v1220
          %v1288 = vpop.f32.mrf.mxu0
          %v1289 = vadd.f32 0.0, %v1288
          %v1290 = vpop.f32.mrf.mxu0
          %1291 = vdwg.mxu0
          %v1292 = vsel %vm811, %v1289, -inf
          %1293 = vmax.xlane.f32.xlu0 %v1292
          %v1294 = vpop.xlane.xlu0 %1293
          %v1295 = vsub.f32 %v1289, %v1294
          %v1296 = vmul.f32 %v1295, 1.442695
          %v1297 = vpow.pop %v1296
          %v1298 = vsel %vm811, %v1297, 0.0
          %1299 = vadd.xlane.f32.xlu0 %v1298
          %v1300 = vpop.xlane.xlu0 %1299
          %v1301 = vrcp.pop %v1300
          %v1302 = vmul.f32 %v1297, %v1301
          %v1304 = vsel %vm811, %v1302, 0
          %1306 = vmatprep.subr.mxu0 0.0
          %1307 = vmatpush1.msra.mxu0 0.0
          %1308 = vmatprep.subr.mxu0 0.0
          %1309 = vmatpush1.msra.mxu0 0.0
          %1310 = vmatprep.subr.mxu0 0.0
          %1311 = vmatpush1.msra.mxu0 0.0
          %1312 = vmatprep.subr.mxu0 0.0
          %1313 = vmatpush1.msra.mxu0 0.0
          %1314 = vmatprep.subr.mxu0 0.0
          %1315 = vmatpush1.msra.mxu0 0.0
          %1316 = vmatprep.subr.mxu0 0.0
          %1317 = vmatpush1.msra.mxu0 0.0
          %1318 = vmatprep.subr.mxu0 0.0
          %1319 = vmatpush1.msra.mxu0 0.0
          %1320 = vmatprep.subr.mxu0 0.0
          %1321 = vmatpush1.msra.mxu0 0.0
          %1322 = vmatprep.subr.mxu0 0.0
          %1323 = vmatpush1.msra.mxu0 0.0
          %1324 = vmatprep.subr.mxu0 0.0
          %1325 = vmatpush1.msra.mxu0 0.0
          %1326 = vmatprep.subr.mxu0 0.0
          %1327 = vmatpush1.msra.mxu0 0.0
          %1328 = vmatprep.subr.mxu0 0.0
          %1329 = vmatpush1.msra.mxu0 0.0
          %1330 = vmatprep.subr.mxu0 0.0
          %1331 = vmatpush1.msra.mxu0 0.0
          %1332 = vmatprep.subr.mxu0 0.0
          %1333 = vmatpush1.msra.mxu0 0.0
          %1334 = vmatprep.subr.mxu0 0.0
          %1335 = vmatpush1.msra.mxu0 0.0
          %1336 = vmatprep.subr.mxu0 0.0
          %1337 = vmatpush1.msra.mxu0 %v828
          %1338 = vmatprep.subr.mxu0 0.0
          %1339 = vmatpush2.msra.mxu0 0.0
          %1340 = vmatprep.subr.mxu0 0.0
          %1341 = vmatpush2.msra.mxu0 0.0
          %1342 = vmatprep.subr.mxu0 0.0
          %1343 = vmatpush2.msra.mxu0 0.0
          %1344 = vmatprep.subr.mxu0 0.0
          %1345 = vmatpush2.msra.mxu0 0.0
          %1346 = vmatprep.subr.mxu0 0.0
          %1347 = vmatpush2.msra.mxu0 0.0
          %1348 = vmatprep.subr.mxu0 0.0
          %1349 = vmatpush2.msra.mxu0 0.0
          %1350 = vmatprep.subr.mxu0 0.0
          %1351 = vmatpush2.msra.mxu0 0.0
          %1352 = vmatprep.subr.mxu0 0.0
          %1353 = vmatpush2.msra.mxu0 0.0
          %1354 = vmatprep.subr.mxu0 0.0
          %1355 = vmatpush2.msra.mxu0 0.0
          %1356 = vmatprep.subr.mxu0 0.0
          %1357 = vmatpush2.msra.mxu0 0.0
          %1358 = vmatprep.subr.mxu0 0.0
          %1359 = vmatpush2.msra.mxu0 0.0
          %1360 = vmatprep.subr.mxu0 0.0
          %1361 = vmatpush2.msra.mxu0 0.0
          %1362 = vmatprep.subr.mxu0 0.0
          %1363 = vmatpush2.msra.mxu0 0.0
          %1364 = vmatprep.subr.mxu0 0.0
          %1365 = vmatpush2.msra.mxu0 0.0
          %1366 = vmatprep.subr.mxu0 0.0
          %1367 = vmatpush2.msra.mxu0 0.0
          %1368 = vmatprep.subr.mxu0 0.0
          %1369 = vmatpush2.msra.mxu0 0.0
          %1370 = vmatprep.mubr.f32.mxu0 0.0
          %1371 = vmatmul.mubr.f32.gmra.mxu0 %v1304
          %v1372 = vpop.f32.mrf.mxu0
          %v1373 = vadd.f32 0.0, %v1372
          %v1374 = vpop.f32.mrf.mxu0
          %1375 = vdwg.mxu0
          %v1376 = vmul.f32 %v1373, %v711
          %v1378 = vsel %vm468, %v1376, 0
          %1380 = vmatprep.subr.mxu0 0.0
          %1381 = vmatpush1.msra.mxu0 0.0
          %1382 = vmatprep.subr.mxu0 0.0
          %1383 = vmatpush1.msra.mxu0 0.0
          %1384 = vmatprep.subr.mxu0 0.0
          %1385 = vmatpush1.msra.mxu0 0.0
          %1386 = vmatprep.subr.mxu0 0.0
          %1387 = vmatpush1.msra.mxu0 0.0
          %1388 = vmatprep.subr.mxu0 0.0
          %1389 = vmatpush1.msra.mxu0 0.0
          %1390 = vmatprep.subr.mxu0 0.0
          %1391 = vmatpush1.msra.mxu0 0.0
          %1392 = vmatprep.subr.mxu0 0.0
          %1393 = vmatpush1.msra.mxu0 0.0
          %1394 = vmatprep.subr.mxu0 0.0
          %1395 = vmatpush1.msra.mxu0 0.0
          %1396 = vmatprep.subr.mxu0 0.0
          %1397 = vmatpush1.msra.mxu0 0.0
          %1398 = vmatprep.subr.mxu0 0.0
          %1399 = vmatpush1.msra.mxu0 0.0
          %1400 = vmatprep.subr.mxu0 0.0
          %1401 = vmatpush1.msra.mxu0 0.0
          %1402 = vmatprep.subr.mxu0 0.0
          %1403 = vmatpush1.msra.mxu0 0.0
          %1404 = vmatprep.subr.mxu0 0.0
          %1405 = vmatpush1.msra.mxu0 %v720
          %1406 = vmatprep.subr.mxu0 0.0
          %1407 = vmatpush1.msra.mxu0 %v719
          %1408 = vmatprep.subr.mxu0 0.0
          %1409 = vmatpush1.msra.mxu0 %v718
          %1410 = vmatprep.subr.mxu0 0.0
          %1411 = vmatpush1.msra.mxu0 %v717
          %1412 = vmatprep.subr.mxu0 0.0
          %1413 = vmatpush2.msra.mxu0 0.0
          %1414 = vmatprep.subr.mxu0 0.0
          %1415 = vmatpush2.msra.mxu0 0.0
          %1416 = vmatprep.subr.mxu0 0.0
          %1417 = vmatpush2.msra.mxu0 0.0
          %1418 = vmatprep.subr.mxu0 0.0
          %1419 = vmatpush2.msra.mxu0 0.0
          %1420 = vmatprep.subr.mxu0 0.0
          %1421 = vmatpush2.msra.mxu0 0.0
          %1422 = vmatprep.subr.mxu0 0.0
          %1423 = vmatpush2.msra.mxu0 0.0
          %1424 = vmatprep.subr.mxu0 0.0
          %1425 = vmatpush2.msra.mxu0 0.0
          %1426 = vmatprep.subr.mxu0 0.0
          %1427 = vmatpush2.msra.mxu0 0.0
          %1428 = vmatprep.subr.mxu0 0.0
          %1429 = vmatpush2.msra.mxu0 0.0
          %1430 = vmatprep.subr.mxu0 0.0
          %1431 = vmatpush2.msra.mxu0 0.0
          %1432 = vmatprep.subr.mxu0 0.0
          %1433 = vmatpush2.msra.mxu0 0.0
          %1434 = vmatprep.subr.mxu0 0.0
          %1435 = vmatpush2.msra.mxu0 0.0
          %1436 = vmatprep.subr.mxu0 0.0
          %1437 = vmatpush2.msra.mxu0 0.0
          %1438 = vmatprep.subr.mxu0 0.0
          %1439 = vmatpush2.msra.mxu0 0.0
          %1440 = vmatprep.subr.mxu0 0.0
          %1441 = vmatpush2.msra.mxu0 0.0
          %1442 = vmatprep.subr.mxu0 0.0
          %1443 = vmatpush2.msra.mxu0 0.0
          %1444 = vmatprep.mubr.f32.mxu0 0.0
          %1445 = vmatmul.mubr.f32.gmra.mxu0 %v1378
          %v1446 = vpop.f32.mrf.mxu0
          %v1447 = vadd.f32 0.0, %v1446
          %v1448 = vpop.f32.mrf.mxu0
          %1449 = vdwg.mxu0
          %1450 = vrot.lane.b32.xlu0 %v709, 104
          %v1451 = vpop.permute.xlu0 %1450
          %v1453 = vsel %vm731, %v1451, %v1213
          %v1454 = vsel %vm733, %v1453, %v975
          %v1455 = vsel %vm735, %v1454, %v709
          %v1456 = vmul.f32 %v1455, %v710
          %v1458 = vsel %vm468, %v1456, 0
          %1460 = vmatprep.subr.mxu0 0.0
          %1461 = vmatpush1.msra.mxu0 0.0
          %1462 = vmatprep.subr.mxu0 0.0
          %1463 = vmatpush1.msra.mxu0 0.0
          %1464 = vmatprep.subr.mxu0 0.0
          %1465 = vmatpush1.msra.mxu0 0.0
          %1466 = vmatprep.subr.mxu0 0.0
          %1467 = vmatpush1.msra.mxu0 0.0
          %1468 = vmatprep.subr.mxu0 0.0
          %1469 = vmatpush1.msra.mxu0 0.0
          %1470 = vmatprep.subr.mxu0 0.0
          %1471 = vmatpush1.msra.mxu0 0.0
          %1472 = vmatprep.subr.mxu0 0.0
          %1473 = vmatpush1.msra.mxu0 0.0
          %1474 = vmatprep.subr.mxu0 0.0
          %1475 = vmatpush1.msra.mxu0 0.0
          %1476 = vmatprep.subr.mxu0 0.0
          %1477 = vmatpush1.msra.mxu0 0.0
          %1478 = vmatprep.subr.mxu0 0.0
          %1479 = vmatpush1.msra.mxu0 0.0
          %1480 = vmatprep.subr.mxu0 0.0
          %1481 = vmatpush1.msra.mxu0 0.0
          %1482 = vmatprep.subr.mxu0 0.0
          %1483 = vmatpush1.msra.mxu0 0.0
          %1484 = vmatprep.subr.mxu0 0.0
          %1485 = vmatpush1.msra.mxu0 %v715
          %1486 = vmatprep.subr.mxu0 0.0
          %1487 = vmatpush1.msra.mxu0 %v714
          %1488 = vmatprep.subr.mxu0 0.0
          %1489 = vmatpush1.msra.mxu0 %v713
          %1490 = vmatprep.subr.mxu0 0.0
          %1491 = vmatpush1.msra.mxu0 %v712
          %1492 = vmatprep.subr.mxu0 0.0
          %1493 = vmatpush2.msra.mxu0 0.0
          %1494 = vmatprep.subr.mxu0 0.0
          %1495 = vmatpush2.msra.mxu0 0.0
          %1496 = vmatprep.subr.mxu0 0.0
          %1497 = vmatpush2.msra.mxu0 0.0
          %1498 = vmatprep.subr.mxu0 0.0
          %1499 = vmatpush2.msra.mxu0 0.0
          %1500 = vmatprep.subr.mxu0 0.0
          %1501 = vmatpush2.msra.mxu0 0.0
          %1502 = vmatprep.subr.mxu0 0.0
          %1503 = vmatpush2.msra.mxu0 0.0
          %1504 = vmatprep.subr.mxu0 0.0
          %1505 = vmatpush2.msra.mxu0 0.0
          %1506 = vmatprep.subr.mxu0 0.0
          %1507 = vmatpush2.msra.mxu0 0.0
          %1508 = vmatprep.subr.mxu0 0.0
          %1509 = vmatpush2.msra.mxu0 0.0
          %1510 = vmatprep.subr.mxu0 0.0
          %1511 = vmatpush2.msra.mxu0 0.0
          %1512 = vmatprep.subr.mxu0 0.0
          %1513 = vmatpush2.msra.mxu0 0.0
          %1514 = vmatprep.subr.mxu0 0.0
          %1515 = vmatpush2.msra.mxu0 0.0
          %1516 = vmatprep.subr.mxu0 0.0
          %1517 = vmatpush2.msra.mxu0 0.0
          %1518 = vmatprep.subr.mxu0 0.0
          %1519 = vmatpush2.msra.mxu0 0.0
          %1520 = vmatprep.subr.mxu0 0.0
          %1521 = vmatpush2.msra.mxu0 0.0
          %1522 = vmatprep.subr.mxu0 0.0
          %1523 = vmatpush2.msra.mxu0 0.0
          %1524 = vmatprep.mubr.f32.mxu0 0.0
          %1525 = vmatmul.mubr.f32.gmra.mxu0 %v1458
          %v1526 = vpop.f32.mrf.mxu0
          %v1527 = vadd.f32 0.0, %v1526
          %v1528 = vpop.f32.mrf.mxu0
          %1529 = vdwg.mxu0
          %v1530 = vsel %vm811, %v1527, -inf
          %1531 = vmax.xlane.f32.xlu0 %v1530
          %v1532 = vpop.xlane.xlu0 %1531
          %v1533 = vsub.f32 %v1527, %v1532
          %v1534 = vmul.f32 %v1533, 1.442695
          %v1535 = vpow.pop %v1534
          %v1536 = vsel %vm811, %v1535, 0.0
          %1537 = vadd.xlane.f32.xlu0 %v1536
          %v1538 = vpop.xlane.xlu0 %1537
          %v1539 = vrcp.pop %v1538
          %v1540 = vmul.f32 %v1535, %v1539
          %v1542 = vsel %vm811, %v1540, 0
          %1544 = vmatprep.subr.mxu0 0.0
          %1545 = vmatpush1.msra.mxu0 0.0
          %1546 = vmatprep.subr.mxu0 0.0
          %1547 = vmatpush1.msra.mxu0 0.0
          %1548 = vmatprep.subr.mxu0 0.0
          %1549 = vmatpush1.msra.mxu0 0.0
          %1550 = vmatprep.subr.mxu0 0.0
          %1551 = vmatpush1.msra.mxu0 0.0
          %1552 = vmatprep.subr.mxu0 0.0
          %1553 = vmatpush1.msra.mxu0 0.0
          %1554 = vmatprep.subr.mxu0 0.0
          %1555 = vmatpush1.msra.mxu0 0.0
          %1556 = vmatprep.subr.mxu0 0.0
          %1557 = vmatpush1.msra.mxu0 0.0
          %1558 = vmatprep.subr.mxu0 0.0
          %1559 = vmatpush1.msra.mxu0 0.0
          %1560 = vmatprep.subr.mxu0 0.0
          %1561 = vmatpush1.msra.mxu0 0.0
          %1562 = vmatprep.subr.mxu0 0.0
          %1563 = vmatpush1.msra.mxu0 0.0
          %1564 = vmatprep.subr.mxu0 0.0
          %1565 = vmatpush1.msra.mxu0 0.0
          %1566 = vmatprep.subr.mxu0 0.0
          %1567 = vmatpush1.msra.mxu0 0.0
          %1568 = vmatprep.subr.mxu0 0.0
          %1569 = vmatpush1.msra.mxu0 0.0
          %1570 = vmatprep.subr.mxu0 0.0
          %1571 = vmatpush1.msra.mxu0 0.0
          %1572 = vmatprep.subr.mxu0 0.0
          %1573 = vmatpush1.msra.mxu0 0.0
          %1574 = vmatprep.subr.mxu0 0.0
          %1575 = vmatpush1.msra.mxu0 %v828
          %1576 = vmatprep.subr.mxu0 0.0
          %1577 = vmatpush2.msra.mxu0 0.0
          %1578 = vmatprep.subr.mxu0 0.0
          %1579 = vmatpush2.msra.mxu0 0.0
          %1580 = vmatprep.subr.mxu0 0.0
          %1581 = vmatpush2.msra.mxu0 0.0
          %1582 = vmatprep.subr.mxu0 0.0
          %1583 = vmatpush2.msra.mxu0 0.0
          %1584 = vmatprep.subr.mxu0 0.0
          %1585 = vmatpush2.msra.mxu0 0.0
          %1586 = vmatprep.subr.mxu0 0.0
          %1587 = vmatpush2.msra.mxu0 0.0
          %1588 = vmatprep.subr.mxu0 0.0
          %1589 = vmatpush2.msra.mxu0 0.0
          %1590 = vmatprep.subr.mxu0 0.0
          %1591 = vmatpush2.msra.mxu0 0.0
          %1592 = vmatprep.subr.mxu0 0.0
          %1593 = vmatpush2.msra.mxu0 0.0
          %1594 = vmatprep.subr.mxu0 0.0
          %1595 = vmatpush2.msra.mxu0 0.0
          %1596 = vmatprep.subr.mxu0 0.0
          %1597 = vmatpush2.msra.mxu0 0.0
          %1598 = vmatprep.subr.mxu0 0.0
          %1599 = vmatpush2.msra.mxu0 0.0
          %1600 = vmatprep.subr.mxu0 0.0
          %1601 = vmatpush2.msra.mxu0 0.0
          %1602 = vmatprep.subr.mxu0 0.0
          %1603 = vmatpush2.msra.mxu0 0.0
          %1604 = vmatprep.subr.mxu0 0.0
          %1605 = vmatpush2.msra.mxu0 0.0
          %1606 = vmatprep.subr.mxu0 0.0
          %1607 = vmatpush2.msra.mxu0 0.0
          %1608 = vmatprep.mubr.f32.mxu0 0.0
          %1609 = vmatmul.mubr.f32.gmra.mxu0 %v1542
          %v1610 = vpop.f32.mrf.mxu0
          %v1611 = vadd.f32 0.0, %v1610
          %v1612 = vpop.f32.mrf.mxu0
          %1613 = vdwg.mxu0
          %v1614 = vmul.f32 %v1611, %v711
          %v1616 = vsel %vm468, %v1614, 0
          %1618 = vmatprep.subr.mxu0 0.0
          %1619 = vmatpush1.msra.mxu0 0.0
          %1620 = vmatprep.subr.mxu0 0.0
          %1621 = vmatpush1.msra.mxu0 0.0
          %1622 = vmatprep.subr.mxu0 0.0
          %1623 = vmatpush1.msra.mxu0 0.0
          %1624 = vmatprep.subr.mxu0 0.0
          %1625 = vmatpush1.msra.mxu0 0.0
          %1626 = vmatprep.subr.mxu0 0.0
          %1627 = vmatpush1.msra.mxu0 0.0
          %1628 = vmatprep.subr.mxu0 0.0
          %1629 = vmatpush1.msra.mxu0 0.0
          %1630 = vmatprep.subr.mxu0 0.0
          %1631 = vmatpush1.msra.mxu0 0.0
          %1632 = vmatprep.subr.mxu0 0.0
          %1633 = vmatpush1.msra.mxu0 0.0
          %1634 = vmatprep.subr.mxu0 0.0
          %1635 = vmatpush1.msra.mxu0 0.0
          %1636 = vmatprep.subr.mxu0 0.0
          %1637 = vmatpush1.msra.mxu0 0.0
          %1638 = vmatprep.subr.mxu0 0.0
          %1639 = vmatpush1.msra.mxu0 0.0
          %1640 = vmatprep.subr.mxu0 0.0
          %1641 = vmatpush1.msra.mxu0 0.0
          %1642 = vmatprep.subr.mxu0 0.0
          %1643 = vmatpush1.msra.mxu0 %v720
          %1644 = vmatprep.subr.mxu0 0.0
          %1645 = vmatpush1.msra.mxu0 %v719
          %1646 = vmatprep.subr.mxu0 0.0
          %1647 = vmatpush1.msra.mxu0 %v718
          %1648 = vmatprep.subr.mxu0 0.0
          %1649 = vmatpush1.msra.mxu0 %v717
          %1650 = vmatprep.subr.mxu0 0.0
          %1651 = vmatpush2.msra.mxu0 0.0
          %1652 = vmatprep.subr.mxu0 0.0
          %1653 = vmatpush2.msra.mxu0 0.0
          %1654 = vmatprep.subr.mxu0 0.0
          %1655 = vmatpush2.msra.mxu0 0.0
          %1656 = vmatprep.subr.mxu0 0.0
          %1657 = vmatpush2.msra.mxu0 0.0
          %1658 = vmatprep.subr.mxu0 0.0
          %1659 = vmatpush2.msra.mxu0 0.0
          %1660 = vmatprep.subr.mxu0 0.0
          %1661 = vmatpush2.msra.mxu0 0.0
          %1662 = vmatprep.subr.mxu0 0.0
          %1663 = vmatpush2.msra.mxu0 0.0
          %1664 = vmatprep.subr.mxu0 0.0
          %1665 = vmatpush2.msra.mxu0 0.0
          %1666 = vmatprep.subr.mxu0 0.0
          %1667 = vmatpush2.msra.mxu0 0.0
          %1668 = vmatprep.subr.mxu0 0.0
          %1669 = vmatpush2.msra.mxu0 0.0
          %1670 = vmatprep.subr.mxu0 0.0
          %1671 = vmatpush2.msra.mxu0 0.0
          %1672 = vmatprep.subr.mxu0 0.0
          %1673 = vmatpush2.msra.mxu0 0.0
          %1674 = vmatprep.subr.mxu0 0.0
          %1675 = vmatpush2.msra.mxu0 0.0
          %1676 = vmatprep.subr.mxu0 0.0
          %1677 = vmatpush2.msra.mxu0 0.0
          %1678 = vmatprep.subr.mxu0 0.0
          %1679 = vmatpush2.msra.mxu0 0.0
          %1680 = vmatprep.subr.mxu0 0.0
          %1681 = vmatpush2.msra.mxu0 0.0
          %1682 = vmatprep.mubr.f32.mxu0 0.0
          %1683 = vmatmul.mubr.f32.gmra.mxu0 %v1616
          %v1684 = vpop.f32.mrf.mxu0
          %v1685 = vadd.f32 0.0, %v1684
          %v1686 = vpop.f32.mrf.mxu0
          %1687 = vdwg.mxu0
          %1688 = vst.msk [vmem:[%s406] sm:$0xff] %vm731, %v971
          %1689 = vst.msk [vmem:[%s406 + $0x8] sm:$0xff] %vm731, %v1209
          %1690 = vst.msk [vmem:[%s406 + $0x10] sm:$0xff] %vm731, %v1447
          %1691 = vst.msk [vmem:[%s406 + $0x18] sm:$0xff] %vm731, %v1685
        $region64: #{tpu_custom_call.1} parent=51 // pred_fallthru
          _
        %s1692 = sand.u32 %s247, 1
        %s1693 = scalar_lea.sflag [#allocation7], %s1692
        %s1694 = sand.u32 %s247, 1
        %s1695 = smul.addr %s1694, 32
        %s1696 = scalar_lea.vmem [#allocation8], %s1695
        // Predicated region
        $region65: #{tpu_custom_call.1} parent=51 // pred_check
          %p1697 = pneg %p257
        $region66: #{tpu_custom_call.1} parent=51 // pred_check_branch
          %1699 = sbr.rel (%p1697) target = $region68
        $region67: #{tpu_custom_call.1} parent=51 // pred_region
          %s1701 = ssub.s32 512, 512
          %1702 = vsyncadd %s1693, %s1701
          %s1703 = smul.addr %s28, 4
          %s1704 = sadd.s32 %s29, %s1703
          %s1705 = smul.addr %s1704, 128
          %s1706 = scalar_lea.hbm %s8, %s1705
          %s1707 = sshll.u32 %s1696, 4
          %s1708 = int_to_ptr.vmem [resolvable:$true] %s1707
          %1713 = dma.vmem_to_hbm [thread:$0]  %s1708, 512, %s1706, %s1693, 128, 128, 8
        $region68: #{tpu_custom_call.1} parent=51 // pred_fallthru
          _
      $region52: #{tpu_custom_call.1} parent=5 // pred_fallthru
        _
      %p1714 = scmp.le.s32.totalorder 2, %s18
      // Predicated region
      $region69: #{tpu_custom_call.1} parent=5 // pred_check
        %p1715 = pneg %p1714
      $region70: #{tpu_custom_call.1} parent=5 // pred_check_branch
        %1717 = sbr.rel (%p1715) target = $region72
      $region71: #{tpu_custom_call.1} parent=5 // pred_region
        %s1718 = ssub.s32 %s18, 2
        // Predicated region
        $region73: #{tpu_custom_call.1} parent=71 // pred_check
          %p1719 = pneg %p263
        $region74: #{tpu_custom_call.1} parent=71 // pred_check_branch
          %1721 = sbr.rel (%p1719) target = $region76
        $region75: #{tpu_custom_call.1} parent=71 // pred_region
          %s1722 = sand.u32 %s248, 1
          %s1723 = scalar_lea.sflag [#allocation7], %s1722
          %s1724 = sand.u32 %s248, 1
          %s1725 = smul.addr %s1724, 32
          %s1726 = scalar_lea.vmem [#allocation8], %s1725
          %1727 = dma.done %s1723, 512
        $region76: #{tpu_custom_call.1} parent=71 // pred_fallthru
          _
      $region72: #{tpu_custom_call.1} parent=5 // pred_fallthru
        _
    $region6: #{tpu_custom_call.1} parent=1 // loop_footer
      %s22 = sadd.s32 1, %s18
    $region7: #{tpu_custom_call.1} parent=1 // loop_footer_branch
      %17 = sbr.rel target = $region3
    $region8: #{tpu_custom_call.1} parent=1 // loop_exit
      _
    %1728 = vsyncpa [#allocation6], 1
    %s1729 = scalar_lea.sflag [#allocation6], 1
    %1730 = vsyncpa %s1729, 1
    %1731 = vsyncpa [#allocation7], 1
    %s1732 = scalar_lea.sflag [#allocation7], 1
    %1733 = vsyncpa %s1732, 1

// kernel: tpu_custom_call.1
$region0: #{tpu_custom_call.1}
  #allocation0 [shape = 'u32[]', space=smem, size = 0x4, offset = 0x4, fixed_abs, tag = 'smem constant byte address 0x4 - core index']
  #allocation1 [shape = 'u32[144,128]{1,0:T(1,128)}', space=vmem, size = 0x12000, scoped, tag = 'internal scratch']
  #allocation2 [shape = 'f32[8,32]{1,0:T(8,128)}', space=vmem, size = 0x1000, scoped, tag = 'scratch operand']
  #allocation3 [shape = 'f32[8,32]{1,0:T(8,128)}', space=vmem, size = 0x1000, scoped, tag = 'scratch operand']
  #allocation4 [shape = 'f32[8,32]{1,0:T(8,128)}', space=vmem, size = 0x1000, scoped, tag = 'scratch operand']
  %s0 = inlined_call_operand.vmem [shape: f32[2,8,32], index: 0, kind: input, shape index: {}]
  %s1 = inlined_call_operand.vmem [shape: f32[2,8,32], index: 1, kind: input, shape index: {}]
  %s2 = inlined_call_operand.vmem [shape: f32[2,8,32], index: 2, kind: input, shape index: {}]
  %s3 = inlined_call_operand.hbm [shape: f32[3,32,32], index: 3, kind: input, shape index: {}]
  %s4 = inlined_call_operand.vmem [shape: f32[3,32], index: 4, kind: input, shape index: {}]
  %s5 = inlined_call_operand.vmem [shape: f32[32,4], index: 5, kind: input, shape index: {}]
  %s6 = inlined_call_operand.vmem [shape: f32[4,32], index: 6, kind: input, shape index: {}]
  %s7 = inlined_call_operand.vmem [shape: f32[32,8], index: 7, kind: input, shape index: {}]
  %s8 = inlined_call_operand.hbm [shape: f32[2,4,8,8], index: 8, kind: output, shape index: {}]
  %s9 = sld [smem:[#allocation0]]
  $region77: #{tpu_custom_call.1} parent=0
    _
  %s11 = ssub.s32 1, %s9
  %s12 = scalar_select 0, %s11, %s9
  $region1: #{tpu_custom_call.1} parent=0
    #allocation5 [shape = 'u8[49152]{0}', space=vmem, size = 0xc000, scoped, tag = 'input window, operand 3, single buffered']
    #allocation6 [shape = 's32[2]{0}', space=sflag, size = 0x8, scoped, tag = 'scoped memory for tpu_custom_call.1']
    #allocation7 [shape = 's32[2]{0}', space=sflag, size = 0x8, scoped, tag = 'scoped memory for tpu_custom_call.1']
    #allocation8 [shape = 'u8[32768]{0}', space=vmem, size = 0x8000, scoped, tag = 'output window, operand 0']
    %13 = vsyncpa [#allocation6], 0
    %14 = vsyncpa [#allocation7], 0
    %s15 = scalar_lea.sflag [#allocation7], 1
    %16 = vsyncpa %s15, 0
    loop: start=0, step=1, limit=4
    $region2: #{tpu_custom_call.1} parent=1 // loop_pre_header
      _
    $region3: #{tpu_custom_call.1} parent=1 // loop_header
      %s18 = sphi 0, %s22
      %p19 = scmp.ge.s32.totalorder %s18, 4
      %s25 = sphi 0, %s44
      %s26 = sphi 0, %s40
      %s27 = sphi 0, %s36
      %s28 = sphi 0, %s25
      %s29 = sphi 0, %s26
      %s30 = sphi 0, %s27
      %s31 = sphi 0, %s28
      %s32 = sphi 0, %s29
      %s33 = sphi 0, %s30
      %s51 = sphi 0, %s53
      %s54 = sphi 0, %s51
      %s55 = sphi 0, %s54
      %s71 = sphi 0, %s55
      %s81 = sphi 0, %s83
      %s84 = sphi 0, %s81
      %s85 = sphi 0, %s84
      %s101 = sphi 0, %s85
      %s111 = sphi 0, %s113
      %s114 = sphi 0, %s111
      %s115 = sphi 0, %s114
      %s131 = sphi 0, %s115
      %s135 = sphi 0, %s135
      %s137 = sphi 0, %s135
      %s138 = sphi 0, %s137
      %s152 = sphi 0, %s138
      %s156 = sphi 0, %s156
      %s158 = sphi 0, %s156
      %s159 = sphi 0, %s158
      %s173 = sphi 0, %s159
      %s177 = sphi 0, %s177
      %s179 = sphi 0, %s177
      %s180 = sphi 0, %s179
      %s194 = sphi 0, %s180
      %s198 = sphi 0, %s198
      %s200 = sphi 0, %s198
      %s201 = sphi 0, %s200
      %s215 = sphi 0, %s201
      %s219 = sphi 0, %s219
      %s221 = sphi 0, %s219
      %s222 = sphi 0, %s221
      %s236 = sphi 0, %s222
      %s244 = sphi 0, %s246
      %s247 = sphi 0, %s244
      %s248 = sphi 0, %s247
      %s264 = sphi 0, %s248
    $region4: #{tpu_custom_call.1} parent=1 // loop_header_branch
      %21 = sbr.rel (%p19) target = $region8
    $region5: #{tpu_custom_call.1} parent=1 // loop_body
      %s23 = ssub.s32 %s18, 1
      %s24 = ssub.s32 %s18, 2
      %s34 = sadd.s32 1, %s27
      %p35 = scmp.ge.s32.totalorder %s34, 1
      %s36 = scalar_select %p35, 0, %s34
      %s37 = sadd.s32 1, %s26
      %s38 = scalar_select %p35, %s37, %s26
      %p39 = scmp.ge.s32.totalorder %s38, 1
      %s40 = scalar_select %p39, 0, %s38
      %s41 = sadd.s32 1, %s25
      %s42 = scalar_select %p39, %s41, %s25
      %p43 = scmp.ge.s32.totalorder %s42, 2
      %s44 = scalar_select %p43, 0, %s42
      %s45 = ssub.s32 %s25, %s44
      %s46 = ssub.s32 %s26, %s40
      %s47 = sor.u32 %s45, %s46
      %s48 = ssub.s32 %s27, %s36
      %s49 = sor.u32 %s47, %s48
      %p50 = scmp.eq.s32.totalorder %s49, 0
      %s52 = sadd.s32 %s51, 1
      %s53 = scalar_select %p50, %s51, %s52
      %p56 = pneg %p50
      %p57 = scmp.eq.s32.totalorder %s18, 1
      %p58 = por %p56, %p57
      %p59 = scmp.ne.s32.totalorder %s51, %s54
      %p60 = scmp.eq.s32.totalorder %s18, 0
      %p61 = por %p59, %p60
      %p62 = scmp.ne.s32.totalorder %s51, %s54
      %p63 = scmp.eq.s32.totalorder %s23, 1
      %p64 = por %p62, %p63
      %p65 = scmp.ne.s32.totalorder %s54, %s55
      %p66 = scmp.eq.s32.totalorder %s23, 0
      %p67 = por %p65, %p66
      %p68 = scmp.ne.s32.totalorder %s54, %s55
      %p69 = scmp.eq.s32.totalorder %s24, 1
      %p70 = por %p68, %p69
      %p72 = scmp.ne.s32.totalorder %s55, %s71
      %p73 = scmp.eq.s32.totalorder %s24, 0
      %p74 = por %p72, %p73
      %s75 = ssub.s32 %s25, %s44
      %s76 = ssub.s32 %s26, %s40
      %s77 = sor.u32 %s75, %s76
      %s78 = ssub.s32 %s27, %s36
      %s79 = sor.u32 %s77, %s78
      %p80 = scmp.eq.s32.totalorder %s79, 0
      %s82 = sadd.s32 %s81, 1
      %s83 = scalar_select %p80, %s81, %s82
      %p86 = pneg %p80
      %p87 = scmp.eq.s32.totalorder %s18, 1
      %p88 = por %p86, %p87
      %p89 = scmp.ne.s32.totalorder %s81, %s84
      %p90 = scmp.eq.s32.totalorder %s18, 0
      %p91 = por %p89, %p90
      %p92 = scmp.ne.s32.totalorder %s81, %s84
      %p93 = scmp.eq.s32.totalorder %s23, 1
      %p94 = por %p92, %p93
      %p95 = scmp.ne.s32.totalorder %s84, %s85
      %p96 = scmp.eq.s32.totalorder %s23, 0
      %p97 = por %p95, %p96
      %p98 = scmp.ne.s32.totalorder %s84, %s85
      %p99 = scmp.eq.s32.totalorder %s24, 1
      %p100 = por %p98, %p99
      %p102 = scmp.ne.s32.totalorder %s85, %s101
      %p103 = scmp.eq.s32.totalorder %s24, 0
      %p104 = por %p102, %p103
      %s105 = ssub.s32 %s25, %s44
      %s106 = ssub.s32 %s26, %s40
      %s107 = sor.u32 %s105, %s106
      %s108 = ssub.s32 %s27, %s36
      %s109 = sor.u32 %s107, %s108
      %p110 = scmp.eq.s32.totalorder %s109, 0
      %s112 = sadd.s32 %s111, 1
      %s113 = scalar_select %p110, %s111, %s112
      %p116 = pneg %p110
      %p117 = scmp.eq.s32.totalorder %s18, 1
      %p118 = por %p116, %p117
      %p119 = scmp.ne.s32.totalorder %s111, %s114
      %p120 = scmp.eq.s32.totalorder %s18, 0
      %p121 = por %p119, %p120
      %p122 = scmp.ne.s32.totalorder %s111, %s114
      %p123 = scmp.eq.s32.totalorder %s23, 1
      %p124 = por %p122, %p123
      %p125 = scmp.ne.s32.totalorder %s114, %s115
      %p126 = scmp.eq.s32.totalorder %s23, 0
      %p127 = por %p125, %p126
      %p128 = scmp.ne.s32.totalorder %s114, %s115
      %p129 = scmp.eq.s32.totalorder %s24, 1
      %p130 = por %p128, %p129
      %p132 = scmp.ne.s32.totalorder %s115, %s131
      %p133 = scmp.eq.s32.totalorder %s24, 0
      %p134 = por %p132, %p133
      %s136 = sadd.s32 %s135, 1
      %p139 = scmp.eq.s32.totalorder %s18, 1
      %p140 = scmp.ne.s32.totalorder %s135, %s137
      %p141 = scmp.eq.s32.totalorder %s18, 0
      %p142 = por %p140, %p141
      %p143 = scmp.ne.s32.totalorder %s135, %s137
      %p144 = scmp.eq.s32.totalorder %s23, 1
      %p145 = por %p143, %p144
      %p146 = scmp.ne.s32.totalorder %s137, %s138
      %p147 = scmp.eq.s32.totalorder %s23, 0
      %p148 = por %p146, %p147
      %p149 = scmp.ne.s32.totalorder %s137, %s138
      %p150 = scmp.eq.s32.totalorder %s24, 1
      %p151 = por %p149, %p150
      %p153 = scmp.ne.s32.totalorder %s138, %s152
      %p154 = scmp.eq.s32.totalorder %s24, 0
      %p155 = por %p153, %p154
      %s157 = sadd.s32 %s156, 1
      %p160 = scmp.eq.s32.totalorder %s18, 1
      %p161 = scmp.ne.s32.totalorder %s156, %s158
      %p162 = scmp.eq.s32.totalorder %s18, 0
      %p163 = por %p161, %p162
      %p164 = scmp.ne.s32.totalorder %s156, %s158
      %p165 = scmp.eq.s32.totalorder %s23, 1
      %p166 = por %p164, %p165
      %p167 = scmp.ne.s32.totalorder %s158, %s159
      %p168 = scmp.eq.s32.totalorder %s23, 0
      %p169 = por %p167, %p168
      %p170 = scmp.ne.s32.totalorder %s158, %s159
      %p171 = scmp.eq.s32.totalorder %s24, 1
      %p172 = por %p170, %p171
      %p174 = scmp.ne.s32.totalorder %s159, %s173
      %p175 = scmp.eq.s32.totalorder %s24, 0
      %p176 = por %p174, %p175
      %s178 = sadd.s32 %s177, 1
      %p181 = scmp.eq.s32.totalorder %s18, 1
      %p182 = scmp.ne.s32.totalorder %s177, %s179
      %p183 = scmp.eq.s32.totalorder %s18, 0
      %p184 = por %p182, %p183
      %p185 = scmp.ne.s32.totalorder %s177, %s179
      %p186 = scmp.eq.s32.totalorder %s23, 1
      %p187 = por %p185, %p186
      %p188 = scmp.ne.s32.totalorder %s179, %s180
      %p189 = scmp.eq.s32.totalorder %s23, 0
      %p190 = por %p188, %p189
      %p191 = scmp.ne.s32.totalorder %s179, %s180
      %p192 = scmp.eq.s32.totalorder %s24, 1
      %p193 = por %p191, %p192
      %p195 = scmp.ne.s32.totalorder %s180, %s194
      %p196 = scmp.eq.s32.totalorder %s24, 0
      %p197 = por %p195, %p196
      %s199 = sadd.s32 %s198, 1
      %p202 = scmp.eq.s32.totalorder %s18, 1
      %p203 = scmp.ne.s32.totalorder %s198, %s200
      %p204 = scmp.eq.s32.totalorder %s18, 0
      %p205 = por %p203, %p204
      %p206 = scmp.ne.s32.totalorder %s198, %s200
      %p207 = scmp.eq.s32.totalorder %s23, 1
      %p208 = por %p206, %p207
      %p209 = scmp.ne.s32.totalorder %s200, %s201
      %p210 = scmp.eq.s32.totalorder %s23, 0
      %p211 = por %p209, %p210
      %p212 = scmp.ne.s32.totalorder %s200, %s201
      %p213 = scmp.eq.s32.totalorder %s24, 1
      %p214 = por %p212, %p213
      %p216 = scmp.ne.s32.totalorder %s201, %s215
      %p217 = scmp.eq.s32.totalorder %s24, 0
      %p218 = por %p216, %p217
      %s220 = sadd.s32 %s219, 1
      %p223 = scmp.eq.s32.totalorder %s18, 1
      %p224 = scmp.ne.s32.totalorder %s219, %s221
      %p225 = scmp.eq.s32.totalorder %s18, 0
      %p226 = por %p224, %p225
      %p227 = scmp.ne.s32.totalorder %s219, %s221
      %p228 = scmp.eq.s32.totalorder %s23, 1
      %p229 = por %p227, %p228
      %p230 = scmp.ne.s32.totalorder %s221, %s222
      %p231 = scmp.eq.s32.totalorder %s23, 0
      %p232 = por %p230, %p231
      %p233 = scmp.ne.s32.totalorder %s221, %s222
      %p234 = scmp.eq.s32.totalorder %s24, 1
      %p235 = por %p233, %p234
      %p237 = scmp.ne.s32.totalorder %s222, %s236
      %p238 = scmp.eq.s32.totalorder %s24, 0
      %p239 = por %p237, %p238
      %s240 = ssub.s32 %s25, %s44
      %s241 = ssub.s32 %s26, %s40
      %s242 = sor.u32 %s240, %s241
      %p243 = scmp.eq.s32.totalorder %s242, 0
      %s245 = sadd.s32 %s244, 1
      %s246 = scalar_select %p243, %s244, %s245
      %p249 = pneg %p243
      %p250 = scmp.eq.s32.totalorder %s18, 1
      %p251 = por %p249, %p250
      %p252 = scmp.ne.s32.totalorder %s244, %s247
      %p253 = scmp.eq.s32.totalorder %s18, 0
      %p254 = por %p252, %p253
      %p255 = scmp.ne.s32.totalorder %s244, %s247
      %p256 = scmp.eq.s32.totalorder %s23, 1
      %p257 = por %p255, %p256
      %p258 = scmp.ne.s32.totalorder %s247, %s248
      %p259 = scmp.eq.s32.totalorder %s23, 0
      %p260 = por %p258, %p259
      %p261 = scmp.ne.s32.totalorder %s247, %s248
      %p262 = scmp.eq.s32.totalorder %s24, 1
      %p263 = por %p261, %p262
      %p265 = scmp.ne.s32.totalorder %s248, %s264
      %p266 = scmp.eq.s32.totalorder %s24, 0
      %p267 = por %p265, %p266
      %p268 = scmp.le.s32.totalorder 1, %s18
      %p269 = scmp.lt.s32.totalorder %s18, 3
      %p270 = pnand %p268, %p269
      %p271 = pneg %p270
      // Predicated region
      $region9: #{tpu_custom_call.1} parent=5 // pred_check
        _
      $region10: #{tpu_custom_call.1} parent=5 // pred_check_branch
        %273 = sbr.rel (%p270) target = $region12
      $region11: #{tpu_custom_call.1} parent=5 // pred_region
        %s274 = ssub.s32 %s18, 1
        // Predicated region
        $region13: #{tpu_custom_call.1} parent=11 // pred_check
          %p275 = pneg %p148
        $region14: #{tpu_custom_call.1} parent=11 // pred_check_branch
          %277 = sbr.rel (%p275) target = $region16
        $region15: #{tpu_custom_call.1} parent=11 // pred_region
          %s279 = ssub.s32 1536, 1536
          %280 = vsyncadd [#allocation6], %s279
          %s281 = sshll.u32 [#allocation5], 4
          %s282 = int_to_ptr.vmem [resolvable:$true] %s281
          %287 = dma.hbm_to_vmem [thread:$0]  %s3, 1536, %s282, [#allocation6], 128, 128, 8
        $region16: #{tpu_custom_call.1} parent=11 // pred_fallthru
          _
        // Predicated region
        $region17: #{tpu_custom_call.1} parent=11 // pred_check
          %p288 = pneg %p169
        $region18: #{tpu_custom_call.1} parent=11 // pred_check_branch
          %290 = sbr.rel (%p288) target = $region20
        $region19: #{tpu_custom_call.1} parent=11 // pred_region
          _
        $region20: #{tpu_custom_call.1} parent=11 // pred_fallthru
          _
        // Predicated region
        $region21: #{tpu_custom_call.1} parent=11 // pred_check
          %p291 = pneg %p190
        $region22: #{tpu_custom_call.1} parent=11 // pred_check_branch
          %293 = sbr.rel (%p291) target = $region24
        $region23: #{tpu_custom_call.1} parent=11 // pred_region
          _
        $region24: #{tpu_custom_call.1} parent=11 // pred_fallthru
          _
        // Predicated region
        $region25: #{tpu_custom_call.1} parent=11 // pred_check
          %p294 = pneg %p211
        $region26: #{tpu_custom_call.1} parent=11 // pred_check_branch
          %296 = sbr.rel (%p294) target = $region28
        $region27: #{tpu_custom_call.1} parent=11 // pred_region
          _
        $region28: #{tpu_custom_call.1} parent=11 // pred_fallthru
          _
        // Predicated region
        $region29: #{tpu_custom_call.1} parent=11 // pred_check
          %p297 = pneg %p232
        $region30: #{tpu_custom_call.1} parent=11 // pred_check_branch
          %299 = sbr.rel (%p297) target = $region32
        $region31: #{tpu_custom_call.1} parent=11 // pred_region
          _
        $region32: #{tpu_custom_call.1} parent=11 // pred_fallthru
          _
      $region12: #{tpu_custom_call.1} parent=5 // pred_fallthru
        _
      %p300 = scmp.lt.s32.totalorder %s18, 2
      // Predicated region
      $region33: #{tpu_custom_call.1} parent=5 // pred_check
        %p301 = pneg %p300
      $region34: #{tpu_custom_call.1} parent=5 // pred_check_branch
        %303 = sbr.rel (%p301) target = $region36
      $region35: #{tpu_custom_call.1} parent=5 // pred_region
        // Predicated region
        $region37: #{tpu_custom_call.1} parent=35 // pred_check
          %p304 = pneg %p61
        $region38: #{tpu_custom_call.1} parent=35 // pred_check_branch
          %306 = sbr.rel (%p304) target = $region40
        $region39: #{tpu_custom_call.1} parent=35 // pred_region
          %p307 = scmp.lt.s32.totalorder %s25, 1
          %s308 = scalar_select %p307, %s25, 1
          %p309 = scmp.lt.s32.totalorder %s26, 0
          %s310 = scalar_select %p309, %s26, 0
          %p311 = scmp.lt.s32.totalorder %s27, 0
          %s312 = scalar_select %p311, %s27, 0
          %s313 = sadd.s32 %s312, %s310
          %s314 = sadd.s32 %s313, %s308
          %s315 = smul.addr %s314, 8
          %s316 = scalar_lea.vmem %s0, %s315
        $region40: #{tpu_custom_call.1} parent=35 // pred_fallthru
          _
        // Predicated region
        $region41: #{tpu_custom_call.1} parent=35 // pred_check
          %p317 = pneg %p91
        $region42: #{tpu_custom_call.1} parent=35 // pred_check_branch
          %319 = sbr.rel (%p317) target = $region44
        $region43: #{tpu_custom_call.1} parent=35 // pred_region
          %p320 = scmp.lt.s32.totalorder %s25, 1
          %s321 = scalar_select %p320, %s25, 1
          %p322 = scmp.lt.s32.totalorder %s26, 0
          %s323 = scalar_select %p322, %s26, 0
          %p324 = scmp.lt.s32.totalorder %s27, 0
          %s325 = scalar_select %p324, %s27, 0
          %s326 = sadd.s32 %s325, %s323
          %s327 = sadd.s32 %s326, %s321
          %s328 = smul.addr %s327, 8
          %s329 = scalar_lea.vmem %s1, %s328
        $region44: #{tpu_custom_call.1} parent=35 // pred_fallthru
          _
        // Predicated region
        $region45: #{tpu_custom_call.1} parent=35 // pred_check
          %p330 = pneg %p121
        $region46: #{tpu_custom_call.1} parent=35 // pred_check_branch
          %332 = sbr.rel (%p330) target = $region48
        $region47: #{tpu_custom_call.1} parent=35 // pred_region
          %p333 = scmp.lt.s32.totalorder %s25, 1
          %s334 = scalar_select %p333, %s25, 1
          %p335 = scmp.lt.s32.totalorder %s26, 0
          %s336 = scalar_select %p335, %s26, 0
          %p337 = scmp.lt.s32.totalorder %s27, 0
          %s338 = scalar_select %p337, %s27, 0
          %s339 = sadd.s32 %s338, %s336
          %s340 = sadd.s32 %s339, %s334
          %s341 = smul.addr %s340, 8
          %s342 = scalar_lea.vmem %s2, %s341
        $region48: #{tpu_custom_call.1} parent=35 // pred_fallthru
          _
      $region36: #{tpu_custom_call.1} parent=5 // pred_fallthru
        _
      %p343 = scmp.le.s32.totalorder 1, %s18
      %p344 = scmp.lt.s32.totalorder %s18, 3
      %p345 = pnand %p343, %p344
      %p346 = pneg %p345
      // Predicated region
      $region49: #{tpu_custom_call.1} parent=5 // pred_check
        _
      $region50: #{tpu_custom_call.1} parent=5 // pred_check_branch
        %348 = sbr.rel (%p345) target = $region52
      $region51: #{tpu_custom_call.1} parent=5 // pred_region
        %s349 = ssub.s32 %s18, 1
        // Predicated region
        $region53: #{tpu_custom_call.1} parent=51 // pred_check
          %p350 = pneg %p148
        $region54: #{tpu_custom_call.1} parent=51 // pred_check_branch
          %352 = sbr.rel (%p350) target = $region56
        $region55: #{tpu_custom_call.1} parent=51 // pred_region
          %353 = dma.done [#allocation6], 1536
        $region56: #{tpu_custom_call.1} parent=51 // pred_fallthru
          _
        %p354 = scmp.lt.s32.totalorder %s28, 1
        %s355 = scalar_select %p354, %s28, 1
        %p356 = scmp.lt.s32.totalorder %s29, 0
        %s357 = scalar_select %p356, %s29, 0
        %p358 = scmp.lt.s32.totalorder %s30, 0
        %s359 = scalar_select %p358, %s30, 0
        %s360 = sadd.s32 %s359, %s357
        %s361 = sadd.s32 %s360, %s355
        %s362 = smul.addr %s361, 8
        %s363 = scalar_lea.vmem %s0, %s362
        %p364 = pneg %p67
        %p365 = pneg %p64
        %p366 = scmp.lt.s32.totalorder %s28, 1
        %s367 = scalar_select %p366, %s28, 1
        %p368 = scmp.lt.s32.totalorder %s29, 0
        %s369 = scalar_select %p368, %s29, 0
        %p370 = scmp.lt.s32.totalorder %s30, 0
        %s371 = scalar_select %p370, %s30, 0
        %s372 = sadd.s32 %s371, %s369
        %s373 = sadd.s32 %s372, %s367
        %s374 = smul.addr %s373, 8
        %s375 = scalar_lea.vmem %s1, %s374
        %p376 = pneg %p97
        %p377 = pneg %p94
        %p378 = scmp.lt.s32.totalorder %s28, 1
        %s379 = scalar_select %p378, %s28, 1
        %p380 = scmp.lt.s32.totalorder %s29, 0
        %s381 = scalar_select %p380, %s29, 0
        %p382 = scmp.lt.s32.totalorder %s30, 0
        %s383 = scalar_select %p382, %s30, 0
        %s384 = sadd.s32 %s383, %s381
        %s385 = sadd.s32 %s384, %s379
        %s386 = smul.addr %s385, 8
        %s387 = scalar_lea.vmem %s2, %s386
        %p388 = pneg %p127
        %p389 = pneg %p124
        %p390 = pneg %p148
        %p391 = pneg %p145
        %p392 = pneg %p169
        %p393 = pneg %p166
        %p394 = pneg %p190
        %p395 = pneg %p187
        %p396 = pneg %p211
        %p397 = pneg %p208
        %p398 = pneg %p232
        %p399 = pneg %p229
        %p400 = pneg %p260
        %p401 = pneg %p257
        %s402 = sand.u32 %s247, 1
        %s403 = scalar_lea.sflag [#allocation7], %s402
        %s404 = sand.u32 %s247, 1
        %s405 = smul.addr %s404, 32
        %s406 = scalar_lea.vmem [#allocation8], %s405
        %p407 = scmp.lt.s32.totalorder %s28, 1
        %s408 = scalar_select %p407, %s28, 1
        %p409 = scmp.lt.s32.totalorder %s29, 0
        %s410 = scalar_select %p409, %s29, 0
        %p411 = scmp.lt.s32.totalorder %s30, 0
        %s412 = scalar_select %p411, %s30, 0
        %s413 = sadd.s32 %s412, %s410
        %s414 = sadd.s32 %s413, %s408
        %s415 = smul.addr %s414, 8
        %s416 = scalar_lea.vmem %s0, %s415
        %p417 = scmp.lt.s32.totalorder %s28, 1
        %s418 = scalar_select %p417, %s28, 1
        %p419 = scmp.lt.s32.totalorder %s29, 0
        %s420 = scalar_select %p419, %s29, 0
        %p421 = scmp.lt.s32.totalorder %s30, 0
        %s422 = scalar_select %p421, %s30, 0
        %s423 = sadd.s32 %s422, %s420
        %s424 = sadd.s32 %s423, %s418
        %s425 = smul.addr %s424, 8
        %s426 = scalar_lea.vmem %s1, %s425
        %p427 = scmp.lt.s32.totalorder %s28, 1
        %s428 = scalar_select %p427, %s28, 1
        %p429 = scmp.lt.s32.totalorder %s29, 0
        %s430 = scalar_select %p429, %s29, 0
        %p431 = scmp.lt.s32.totalorder %s30, 0
        %s432 = scalar_select %p431, %s30, 0
        %s433 = sadd.s32 %s432, %s430
        %s434 = sadd.s32 %s433, %s428
        %s435 = smul.addr %s434, 8
        %s436 = scalar_lea.vmem %s2, %s435
        %p437 = scmp.eq.s32.totalorder %s30, 0
        // Predicated region
        $region57: #{tpu_custom_call.1} parent=51 // pred_check
          %p438 = pneg %p437
        $region58: #{tpu_custom_call.1} parent=51 // pred_check_branch
          %440 = sbr.rel (%p438) target = $region60
        $region59: #{tpu_custom_call.1} parent=51 // pred_region
          %v441 = vld [vmem:[%s4] sm:$0x1]
          %v442 = vlaneseq
          %v443 = vshrl.u32 %v442, 7
          %v444 = vsub.s32 0, %v443
          %v445 = vrot.slane %v441, %v444
          %vm446 = vcmask 261120
          %447 = vst.msk [vmem:[#allocation2] sm:$0xff] %vm446, %v445
          %v448 = vld [vmem:[%s4 + $0x1] sm:$0x1]
          %v449 = vlaneseq
          %v450 = vshrl.u32 %v449, 7
          %v451 = vsub.s32 0, %v450
          %v452 = vrot.slane %v448, %v451
          %453 = vst.msk [vmem:[#allocation3] sm:$0xff] %vm446, %v452
          %v454 = vld [vmem:[%s4 + $0x2] sm:$0x1]
          %v455 = vlaneseq
          %v456 = vshrl.u32 %v455, 7
          %v457 = vsub.s32 0, %v456
          %v458 = vrot.slane %v454, %v457
          %459 = vst.msk [vmem:[#allocation4] sm:$0xff] %vm446, %v458
        $region60: #{tpu_custom_call.1} parent=51 // pred_fallthru
          _
        %v460 = vld [vmem:[%s416] sm:$0xff]
        %v461 = vld [vmem:[%s426] sm:$0xff]
        %v462 = vld [vmem:[%s436] sm:$0xff]
        %v463 = vld [vmem:[#allocation2] sm:$0xff]
        %v464 = vld [vmem:[#allocation5] sm:$0xff]
        %v465 = vld [vmem:[#allocation5 + $0x8] sm:$0xff]
        %v466 = vld [vmem:[#allocation5 + $0x10] sm:$0xff]
        %v467 = vld [vmem:[#allocation5 + $0x18] sm:$0xff]
        %vm468 = vcmask 261120
        %v470 = vsel %vm468, %v460, 0
        %472 = vmatprep.subr.mxu0 0.0
        %473 = vmatpush1.msra.mxu0 0.0
        %474 = vmatprep.subr.mxu0 0.0
        %475 = vmatpush1.msra.mxu0 0.0
        %476 = vmatprep.subr.mxu0 0.0
        %477 = vmatpush1.msra.mxu0 0.0
        %478 = vmatprep.subr.mxu0 0.0
        %479 = vmatpush1.msra.mxu0 0.0
        %480 = vmatprep.subr.mxu0 0.0
        %481 = vmatpush1.msra.mxu0 0.0
        %482 = vmatprep.subr.mxu0 0.0
        %483 = vmatpush1.msra.mxu0 0.0
        %484 = vmatprep.subr.mxu0 0.0
        %485 = vmatpush1.msra.mxu0 0.0
        %486 = vmatprep.subr.mxu0 0.0
        %487 = vmatpush1.msra.mxu0 0.0
        %488 = vmatprep.subr.mxu0 0.0
        %489 = vmatpush1.msra.mxu0 0.0
        %490 = vmatprep.subr.mxu0 0.0
        %491 = vmatpush1.msra.mxu0 0.0
        %492 = vmatprep.subr.mxu0 0.0
        %493 = vmatpush1.msra.mxu0 0.0
        %494 = vmatprep.subr.mxu0 0.0
        %495 = vmatpush1.msra.mxu0 0.0
        %496 = vmatprep.subr.mxu0 0.0
        %497 = vmatpush1.msra.mxu0 %v467
        %498 = vmatprep.subr.mxu0 0.0
        %499 = vmatpush1.msra.mxu0 %v466
        %500 = vmatprep.subr.mxu0 0.0
        %501 = vmatpush1.msra.mxu0 %v465
        %502 = vmatprep.subr.mxu0 0.0
        %503 = vmatpush1.msra.mxu0 %v464
        %504 = vmatprep.subr.mxu0 0.0
        %505 = vmatpush2.msra.mxu0 0.0
        %506 = vmatprep.subr.mxu0 0.0
        %507 = vmatpush2.msra.mxu0 0.0
        %508 = vmatprep.subr.mxu0 0.0
        %509 = vmatpush2.msra.mxu0 0.0
        %510 = vmatprep.subr.mxu0 0.0
        %511 = vmatpush2.msra.mxu0 0.0
        %512 = vmatprep.subr.mxu0 0.0
        %513 = vmatpush2.msra.mxu0 0.0
        %514 = vmatprep.subr.mxu0 0.0
        %515 = vmatpush2.msra.mxu0 0.0
        %516 = vmatprep.subr.mxu0 0.0
        %517 = vmatpush2.msra.mxu0 0.0
        %518 = vmatprep.subr.mxu0 0.0
        %519 = vmatpush2.msra.mxu0 0.0
        %520 = vmatprep.subr.mxu0 0.0
        %521 = vmatpush2.msra.mxu0 0.0
        %522 = vmatprep.subr.mxu0 0.0
        %523 = vmatpush2.msra.mxu0 0.0
        %524 = vmatprep.subr.mxu0 0.0
        %525 = vmatpush2.msra.mxu0 0.0
        %526 = vmatprep.subr.mxu0 0.0
        %527 = vmatpush2.msra.mxu0 0.0
        %528 = vmatprep.subr.mxu0 0.0
        %529 = vmatpush2.msra.mxu0 0.0
        %530 = vmatprep.subr.mxu0 0.0
        %531 = vmatpush2.msra.mxu0 0.0
        %532 = vmatprep.subr.mxu0 0.0
        %533 = vmatpush2.msra.mxu0 0.0
        %534 = vmatprep.subr.mxu0 0.0
        %535 = vmatpush2.msra.mxu0 0.0
        %536 = vmatprep.mubr.f32.mxu0 0.0
        %537 = vmatmul.mubr.f32.gmra.mxu0 %v470
        %v538 = vpop.f32.mrf.mxu0
        %v539 = vadd.f32 0.0, %v538
        %v540 = vpop.f32.mrf.mxu0
        %541 = vdwg.mxu0
        %v542 = vadd.f32 %v463, %v539
        %543 = vst.msk [vmem:[#allocation2] sm:$0xff] %vm468, %v542
        %v544 = vld [vmem:[#allocation3] sm:$0xff]
        %s545 = scalar_lea.vmem [#allocation5], 32
        %v546 = vld [vmem:[%s545] sm:$0xff]
        %v547 = vld [vmem:[%s545 + $0x8] sm:$0xff]
        %v548 = vld [vmem:[%s545 + $0x10] sm:$0xff]
        %v549 = vld [vmem:[%s545 + $0x18] sm:$0xff]
        %v551 = vsel %vm468, %v461, 0
        %553 = vmatprep.subr.mxu0 0.0
        %554 = vmatpush1.msra.mxu0 0.0
        %555 = vmatprep.subr.mxu0 0.0
        %556 = vmatpush1.msra.mxu0 0.0
        %557 = vmatprep.subr.mxu0 0.0
        %558 = vmatpush1.msra.mxu0 0.0
        %559 = vmatprep.subr.mxu0 0.0
        %560 = vmatpush1.msra.mxu0 0.0
        %561 = vmatprep.subr.mxu0 0.0
        %562 = vmatpush1.msra.mxu0 0.0
        %563 = vmatprep.subr.mxu0 0.0
        %564 = vmatpush1.msra.mxu0 0.0
        %565 = vmatprep.subr.mxu0 0.0
        %566 = vmatpush1.msra.mxu0 0.0
        %567 = vmatprep.subr.mxu0 0.0
        %568 = vmatpush1.msra.mxu0 0.0
        %569 = vmatprep.subr.mxu0 0.0
        %570 = vmatpush1.msra.mxu0 0.0
        %571 = vmatprep.subr.mxu0 0.0
        %572 = vmatpush1.msra.mxu0 0.0
        %573 = vmatprep.subr.mxu0 0.0
        %574 = vmatpush1.msra.mxu0 0.0
        %575 = vmatprep.subr.mxu0 0.0
        %576 = vmatpush1.msra.mxu0 0.0
        %577 = vmatprep.subr.mxu0 0.0
        %578 = vmatpush1.msra.mxu0 %v549
        %579 = vmatprep.subr.mxu0 0.0
        %580 = vmatpush1.msra.mxu0 %v548
        %581 = vmatprep.subr.mxu0 0.0
        %582 = vmatpush1.msra.mxu0 %v547
        %583 = vmatprep.subr.mxu0 0.0
        %584 = vmatpush1.msra.mxu0 %v546
        %585 = vmatprep.subr.mxu0 0.0
        %586 = vmatpush2.msra.mxu0 0.0
        %587 = vmatprep.subr.mxu0 0.0
        %588 = vmatpush2.msra.mxu0 0.0
        %589 = vmatprep.subr.mxu0 0.0
        %590 = vmatpush2.msra.mxu0 0.0
        %591 = vmatprep.subr.mxu0 0.0
        %592 = vmatpush2.msra.mxu0 0.0
        %593 = vmatprep.subr.mxu0 0.0
        %594 = vmatpush2.msra.mxu0 0.0
        %595 = vmatprep.subr.mxu0 0.0
        %596 = vmatpush2.msra.mxu0 0.0
        %597 = vmatprep.subr.mxu0 0.0
        %598 = vmatpush2.msra.mxu0 0.0
        %599 = vmatprep.subr.mxu0 0.0
        %600 = vmatpush2.msra.mxu0 0.0
        %601 = vmatprep.subr.mxu0 0.0
        %602 = vmatpush2.msra.mxu0 0.0
        %603 = vmatprep.subr.mxu0 0.0
        %604 = vmatpush2.msra.mxu0 0.0
        %605 = vmatprep.subr.mxu0 0.0
        %606 = vmatpush2.msra.mxu0 0.0
        %607 = vmatprep.subr.mxu0 0.0
        %608 = vmatpush2.msra.mxu0 0.0
        %609 = vmatprep.subr.mxu0 0.0
        %610 = vmatpush2.msra.mxu0 0.0
        %611 = vmatprep.subr.mxu0 0.0
        %612 = vmatpush2.msra.mxu0 0.0
        %613 = vmatprep.subr.mxu0 0.0
        %614 = vmatpush2.msra.mxu0 0.0
        %615 = vmatprep.subr.mxu0 0.0
        %616 = vmatpush2.msra.mxu0 0.0
        %617 = vmatprep.mubr.f32.mxu0 0.0
        %618 = vmatmul.mubr.f32.gmra.mxu0 %v551
        %v619 = vpop.f32.mrf.mxu0
        %v620 = vadd.f32 0.0, %v619
        %v621 = vpop.f32.mrf.mxu0
        %622 = vdwg.mxu0
        %v623 = vadd.f32 %v544, %v620
        %624 = vst.msk [vmem:[#allocation3] sm:$0xff] %vm468, %v623
        %v625 = vld [vmem:[#allocation4] sm:$0xff]
        %s626 = scalar_lea.vmem [#allocation5], 64
        %v627 = vld [vmem:[%s626] sm:$0xff]
        %v628 = vld [vmem:[%s626 + $0x8] sm:$0xff]
        %v629 = vld [vmem:[%s626 + $0x10] sm:$0xff]
        %v630 = vld [vmem:[%s626 + $0x18] sm:$0xff]
        %v632 = vsel %vm468, %v462, 0
        %634 = vmatprep.subr.mxu0 0.0
        %635 = vmatpush1.msra.mxu0 0.0
        %636 = vmatprep.subr.mxu0 0.0
        %637 = vmatpush1.msra.mxu0 0.0
        %638 = vmatprep.subr.mxu0 0.0
        %639 = vmatpush1.msra.mxu0 0.0
        %640 = vmatprep.subr.mxu0 0.0
        %641 = vmatpush1.msra.mxu0 0.0
        %642 = vmatprep.subr.mxu0 0.0
        %643 = vmatpush1.msra.mxu0 0.0
        %644 = vmatprep.subr.mxu0 0.0
        %645 = vmatpush1.msra.mxu0 0.0
        %646 = vmatprep.subr.mxu0 0.0
        %647 = vmatpush1.msra.mxu0 0.0
        %648 = vmatprep.subr.mxu0 0.0
        %649 = vmatpush1.msra.mxu0 0.0
        %650 = vmatprep.subr.mxu0 0.0
        %651 = vmatpush1.msra.mxu0 0.0
        %652 = vmatprep.subr.mxu0 0.0
        %653 = vmatpush1.msra.mxu0 0.0
        %654 = vmatprep.subr.mxu0 0.0
        %655 = vmatpush1.msra.mxu0 0.0
        %656 = vmatprep.subr.mxu0 0.0
        %657 = vmatpush1.msra.mxu0 0.0
        %658 = vmatprep.subr.mxu0 0.0
        %659 = vmatpush1.msra.mxu0 %v630
        %660 = vmatprep.subr.mxu0 0.0
        %661 = vmatpush1.msra.mxu0 %v629
        %662 = vmatprep.subr.mxu0 0.0
        %663 = vmatpush1.msra.mxu0 %v628
        %664 = vmatprep.subr.mxu0 0.0
        %665 = vmatpush1.msra.mxu0 %v627
        %666 = vmatprep.subr.mxu0 0.0
        %667 = vmatpush2.msra.mxu0 0.0
        %668 = vmatprep.subr.mxu0 0.0
        %669 = vmatpush2.msra.mxu0 0.0
        %670 = vmatprep.subr.mxu0 0.0
        %671 = vmatpush2.msra.mxu0 0.0
        %672 = vmatprep.subr.mxu0 0.0
        %673 = vmatpush2.msra.mxu0 0.0
        %674 = vmatprep.subr.mxu0 0.0
        %675 = vmatpush2.msra.mxu0 0.0
        %676 = vmatprep.subr.mxu0 0.0
        %677 = vmatpush2.msra.mxu0 0.0
        %678 = vmatprep.subr.mxu0 0.0
        %679 = vmatpush2.msra.mxu0 0.0
        %680 = vmatprep.subr.mxu0 0.0
        %681 = vmatpush2.msra.mxu0 0.0
        %682 = vmatprep.subr.mxu0 0.0
        %683 = vmatpush2.msra.mxu0 0.0
        %684 = vmatprep.subr.mxu0 0.0
        %685 = vmatpush2.msra.mxu0 0.0
        %686 = vmatprep.subr.mxu0 0.0
        %687 = vmatpush2.msra.mxu0 0.0
        %688 = vmatprep.subr.mxu0 0.0
        %689 = vmatpush2.msra.mxu0 0.0
        %690 = vmatprep.subr.mxu0 0.0
        %691 = vmatpush2.msra.mxu0 0.0
        %692 = vmatprep.subr.mxu0 0.0
        %693 = vmatpush2.msra.mxu0 0.0
        %694 = vmatprep.subr.mxu0 0.0
        %695 = vmatpush2.msra.mxu0 0.0
        %696 = vmatprep.subr.mxu0 0.0
        %697 = vmatpush2.msra.mxu0 0.0
        %698 = vmatprep.mubr.f32.mxu0 0.0
        %699 = vmatmul.mubr.f32.gmra.mxu0 %v632
        %v700 = vpop.f32.mrf.mxu0
        %v701 = vadd.f32 0.0, %v700
        %v702 = vpop.f32.mrf.mxu0
        %703 = vdwg.mxu0
        %v704 = vadd.f32 %v625, %v701
        %705 = vst.msk [vmem:[#allocation4] sm:$0xff] %vm468, %v704
        // Predicated region
        $region61: #{tpu_custom_call.1} parent=51 // pred_check
          %p706 = pneg %p437
        $region62: #{tpu_custom_call.1} parent=51 // pred_check_branch
          %708 = sbr.rel (%p706) target = $region64
        $region63: #{tpu_custom_call.1} parent=51 // pred_region
          %v709 = vld [vmem:[#allocation2] sm:$0xff]
          %v710 = vld [vmem:[#allocation3] sm:$0xff]
          %v711 = vld [vmem:[#allocation4] sm:$0xff]
          %v712 = vld [vmem:[%s5] sm:$0xff]
          %v713 = vld [vmem:[%s5 + $0x8] sm:$0xff]
          %v714 = vld [vmem:[%s5 + $0x10] sm:$0xff]
          %v715 = vld [vmem:[%s5 + $0x18] sm:$0xff]
          %v716 = vld [vmem:[%s6] sm:$0xf]
          %v717 = vld [vmem:[%s7] sm:$0xff]
          %v718 = vld [vmem:[%s7 + $0x8] sm:$0xff]
          %v719 = vld [vmem:[%s7 + $0x10] sm:$0xff]
          %v720 = vld [vmem:[%s7 + $0x18] sm:$0xff]
          %722 = vrot.lane.b32.xlu0 %v709, 8
          %v723 = vpop.permute.xlu0 %722
          %725 = vrot.lane.b32.xlu0 %v709, 16
          %v726 = vpop.permute.xlu0 %725
          %728 = vrot.lane.b32.xlu0 %v709, 24
          %v729 = vpop.permute.xlu0 %728
          %vm731 = vcmask 64512
          %v732 = vsel %vm731, %v709, %v723
          %vm733 = vcmask 130048
          %v734 = vsel %vm733, %v732, %v726
          %vm735 = vcmask 195584
          %v736 = vsel %vm735, %v734, %v729
          %v737 = vmul.f32 %v736, %v710
          %v739 = vsel %vm468, %v737, 0
          %741 = vmatprep.subr.mxu0 0.0
          %742 = vmatpush1.msra.mxu0 0.0
          %743 = vmatprep.subr.mxu0 0.0
          %744 = vmatpush1.msra.mxu0 0.0
          %745 = vmatprep.subr.mxu0 0.0
          %746 = vmatpush1.msra.mxu0 0.0
          %747 = vmatprep.subr.mxu0 0.0
          %748 = vmatpush1.msra.mxu0 0.0
          %749 = vmatprep.subr.mxu0 0.0
          %750 = vmatpush1.msra.mxu0 0.0
          %751 = vmatprep.subr.mxu0 0.0
          %752 = vmatpush1.msra.mxu0 0.0
          %753 = vmatprep.subr.mxu0 0.0
          %754 = vmatpush1.msra.mxu0 0.0
          %755 = vmatprep.subr.mxu0 0.0
          %756 = vmatpush1.msra.mxu0 0.0
          %757 = vmatprep.subr.mxu0 0.0
          %758 = vmatpush1.msra.mxu0 0.0
          %759 = vmatprep.subr.mxu0 0.0
          %760 = vmatpush1.msra.mxu0 0.0
          %761 = vmatprep.subr.mxu0 0.0
          %762 = vmatpush1.msra.mxu0 0.0
          %763 = vmatprep.subr.mxu0 0.0
          %764 = vmatpush1.msra.mxu0 0.0
          %765 = vmatprep.subr.mxu0 0.0
          %766 = vmatpush1.msra.mxu0 %v715
          %767 = vmatprep.subr.mxu0 0.0
          %768 = vmatpush1.msra.mxu0 %v714
          %769 = vmatprep.subr.mxu0 0.0
          %770 = vmatpush1.msra.mxu0 %v713
          %771 = vmatprep.subr.mxu0 0.0
          %772 = vmatpush1.msra.mxu0 %v712
          %773 = vmatprep.subr.mxu0 0.0
          %774 = vmatpush2.msra.mxu0 0.0
          %775 = vmatprep.subr.mxu0 0.0
          %776 = vmatpush2.msra.mxu0 0.0
          %777 = vmatprep.subr.mxu0 0.0
          %778 = vmatpush2.msra.mxu0 0.0
          %779 = vmatprep.subr.mxu0 0.0
          %780 = vmatpush2.msra.mxu0 0.0
          %781 = vmatprep.subr.mxu0 0.0
          %782 = vmatpush2.msra.mxu0 0.0
          %783 = vmatprep.subr.mxu0 0.0
          %784 = vmatpush2.msra.mxu0 0.0
          %785 = vmatprep.subr.mxu0 0.0
          %786 = vmatpush2.msra.mxu0 0.0
          %787 = vmatprep.subr.mxu0 0.0
          %788 = vmatpush2.msra.mxu0 0.0
          %789 = vmatprep.subr.mxu0 0.0
          %790 = vmatpush2.msra.mxu0 0.0
          %791 = vmatprep.subr.mxu0 0.0
          %792 = vmatpush2.msra.mxu0 0.0
          %793 = vmatprep.subr.mxu0 0.0
          %794 = vmatpush2.msra.mxu0 0.0
          %795 = vmatprep.subr.mxu0 0.0
          %796 = vmatpush2.msra.mxu0 0.0
          %797 = vmatprep.subr.mxu0 0.0
          %798 = vmatpush2.msra.mxu0 0.0
          %799 = vmatprep.subr.mxu0 0.0
          %800 = vmatpush2.msra.mxu0 0.0
          %801 = vmatprep.subr.mxu0 0.0
          %802 = vmatpush2.msra.mxu0 0.0
          %803 = vmatprep.subr.mxu0 0.0
          %804 = vmatpush2.msra.mxu0 0.0
          %805 = vmatprep.mubr.f32.mxu0 0.0
          %806 = vmatmul.mubr.f32.gmra.mxu0 %v739
          %v807 = vpop.f32.mrf.mxu0
          %v808 = vadd.f32 0.0, %v807
          %v809 = vpop.f32.mrf.mxu0
          %810 = vdwg.mxu0
          %vm811 = vcmask 31744
          %v812 = vsel %vm811, %v808, -inf
          %813 = vmax.xlane.f32.xlu0 %v812
          %v814 = vpop.xlane.xlu0 %813
          %v815 = vsub.f32 %v808, %v814
          %v816 = vmul.f32 %v815, 1.442695
          %v817 = vpow.pop %v816
          %v818 = vsel %vm811, %v817, 0.0
          %819 = vadd.xlane.f32.xlu0 %v818
          %v820 = vpop.xlane.xlu0 %819
          %v821 = vrcp.pop %v820
          %v822 = vmul.f32 %v817, %v821
          %v824 = vsel %vm811, %v822, 0
          %vm826 = vcmask 1043456
          %v828 = vsel %vm826, %v716, 0
          %830 = vmatprep.subr.mxu0 0.0
          %831 = vmatpush1.msra.mxu0 0.0
          %832 = vmatprep.subr.mxu0 0.0
          %833 = vmatpush1.msra.mxu0 0.0
          %834 = vmatprep.subr.mxu0 0.0
          %835 = vmatpush1.msra.mxu0 0.0
          %836 = vmatprep.subr.mxu0 0.0
          %837 = vmatpush1.msra.mxu0 0.0
          %838 = vmatprep.subr.mxu0 0.0
          %839 = vmatpush1.msra.mxu0 0.0
          %840 = vmatprep.subr.mxu0 0.0
          %841 = vmatpush1.msra.mxu0 0.0
          %842 = vmatprep.subr.mxu0 0.0
          %843 = vmatpush1.msra.mxu0 0.0
          %844 = vmatprep.subr.mxu0 0.0
          %845 = vmatpush1.msra.mxu0 0.0
          %846 = vmatprep.subr.mxu0 0.0
          %847 = vmatpush1.msra.mxu0 0.0
          %848 = vmatprep.subr.mxu0 0.0
          %849 = vmatpush1.msra.mxu0 0.0
          %850 = vmatprep.subr.mxu0 0.0
          %851 = vmatpush1.msra.mxu0 0.0
          %852 = vmatprep.subr.mxu0 0.0
          %853 = vmatpush1.msra.mxu0 0.0
          %854 = vmatprep.subr.mxu0 0.0
          %855 = vmatpush1.msra.mxu0 0.0
          %856 = vmatprep.subr.mxu0 0.0
          %857 = vmatpush1.msra.mxu0 0.0
          %858 = vmatprep.subr.mxu0 0.0
          %859 = vmatpush1.msra.mxu0 0.0
          %860 = vmatprep.subr.mxu0 0.0
          %861 = vmatpush1.msra.mxu0 %v828
          %862 = vmatprep.subr.mxu0 0.0
          %863 = vmatpush2.msra.mxu0 0.0
          %864 = vmatprep.subr.mxu0 0.0
          %865 = vmatpush2.msra.mxu0 0.0
          %866 = vmatprep.subr.mxu0 0.0
          %867 = vmatpush2.msra.mxu0 0.0
          %868 = vmatprep.subr.mxu0 0.0
          %869 = vmatpush2.msra.mxu0 0.0
          %870 = vmatprep.subr.mxu0 0.0
          %871 = vmatpush2.msra.mxu0 0.0
          %872 = vmatprep.subr.mxu0 0.0
          %873 = vmatpush2.msra.mxu0 0.0
          %874 = vmatprep.subr.mxu0 0.0
          %875 = vmatpush2.msra.mxu0 0.0
          %876 = vmatprep.subr.mxu0 0.0
          %877 = vmatpush2.msra.mxu0 0.0
          %878 = vmatprep.subr.mxu0 0.0
          %879 = vmatpush2.msra.mxu0 0.0
          %880 = vmatprep.subr.mxu0 0.0
          %881 = vmatpush2.msra.mxu0 0.0
          %882 = vmatprep.subr.mxu0 0.0
          %883 = vmatpush2.msra.mxu0 0.0
          %884 = vmatprep.subr.mxu0 0.0
          %885 = vmatpush2.msra.mxu0 0.0
          %886 = vmatprep.subr.mxu0 0.0
          %887 = vmatpush2.msra.mxu0 0.0
          %888 = vmatprep.subr.mxu0 0.0
          %889 = vmatpush2.msra.mxu0 0.0
          %890 = vmatprep.subr.mxu0 0.0
          %891 = vmatpush2.msra.mxu0 0.0
          %892 = vmatprep.subr.mxu0 0.0
          %893 = vmatpush2.msra.mxu0 0.0
          %894 = vmatprep.mubr.f32.mxu0 0.0
          %895 = vmatmul.mubr.f32.gmra.mxu0 %v824
          %v896 = vpop.f32.mrf.mxu0
          %v897 = vadd.f32 0.0, %v896
          %v898 = vpop.f32.mrf.mxu0
          %899 = vdwg.mxu0
          %v900 = vmul.f32 %v897, %v711
          %v902 = vsel %vm468, %v900, 0
          %904 = vmatprep.subr.mxu0 0.0
          %905 = vmatpush1.msra.mxu0 0.0
          %906 = vmatprep.subr.mxu0 0.0
          %907 = vmatpush1.msra.mxu0 0.0
          %908 = vmatprep.subr.mxu0 0.0
          %909 = vmatpush1.msra.mxu0 0.0
          %910 = vmatprep.subr.mxu0 0.0
          %911 = vmatpush1.msra.mxu0 0.0
          %912 = vmatprep.subr.mxu0 0.0
          %913 = vmatpush1.msra.mxu0 0.0
          %914 = vmatprep.subr.mxu0 0.0
          %915 = vmatpush1.msra.mxu0 0.0
          %916 = vmatprep.subr.mxu0 0.0
          %917 = vmatpush1.msra.mxu0 0.0
          %918 = vmatprep.subr.mxu0 0.0
          %919 = vmatpush1.msra.mxu0 0.0
          %920 = vmatprep.subr.mxu0 0.0
          %921 = vmatpush1.msra.mxu0 0.0
          %922 = vmatprep.subr.mxu0 0.0
          %923 = vmatpush1.msra.mxu0 0.0
          %924 = vmatprep.subr.mxu0 0.0
          %925 = vmatpush1.msra.mxu0 0.0
          %926 = vmatprep.subr.mxu0 0.0
          %927 = vmatpush1.msra.mxu0 0.0
          %928 = vmatprep.subr.mxu0 0.0
          %929 = vmatpush1.msra.mxu0 %v720
          %930 = vmatprep.subr.mxu0 0.0
          %931 = vmatpush1.msra.mxu0 %v719
          %932 = vmatprep.subr.mxu0 0.0
          %933 = vmatpush1.msra.mxu0 %v718
          %934 = vmatprep.subr.mxu0 0.0
          %935 = vmatpush1.msra.mxu0 %v717
          %936 = vmatprep.subr.mxu0 0.0
          %937 = vmatpush2.msra.mxu0 0.0
          %938 = vmatprep.subr.mxu0 0.0
          %939 = vmatpush2.msra.mxu0 0.0
          %940 = vmatprep.subr.mxu0 0.0
          %941 = vmatpush2.msra.mxu0 0.0
          %942 = vmatprep.subr.mxu0 0.0
          %943 = vmatpush2.msra.mxu0 0.0
          %944 = vmatprep.subr.mxu0 0.0
          %945 = vmatpush2.msra.mxu0 0.0
          %946 = vmatprep.subr.mxu0 0.0
          %947 = vmatpush2.msra.mxu0 0.0
          %948 = vmatprep.subr.mxu0 0.0
          %949 = vmatpush2.msra.mxu0 0.0
          %950 = vmatprep.subr.mxu0 0.0
          %951 = vmatpush2.msra.mxu0 0.0
          %952 = vmatprep.subr.mxu0 0.0
          %953 = vmatpush2.msra.mxu0 0.0
          %954 = vmatprep.subr.mxu0 0.0
          %955 = vmatpush2.msra.mxu0 0.0
          %956 = vmatprep.subr.mxu0 0.0
          %957 = vmatpush2.msra.mxu0 0.0
          %958 = vmatprep.subr.mxu0 0.0
          %959 = vmatpush2.msra.mxu0 0.0
          %960 = vmatprep.subr.mxu0 0.0
          %961 = vmatpush2.msra.mxu0 0.0
          %962 = vmatprep.subr.mxu0 0.0
          %963 = vmatpush2.msra.mxu0 0.0
          %964 = vmatprep.subr.mxu0 0.0
          %965 = vmatpush2.msra.mxu0 0.0
          %966 = vmatprep.subr.mxu0 0.0
          %967 = vmatpush2.msra.mxu0 0.0
          %968 = vmatprep.mubr.f32.mxu0 0.0
          %969 = vmatmul.mubr.f32.gmra.mxu0 %v902
          %v970 = vpop.f32.mrf.mxu0
          %v971 = vadd.f32 0.0, %v970
          %v972 = vpop.f32.mrf.mxu0
          %973 = vdwg.mxu0
          %974 = vrot.lane.b32.xlu0 %v709, 120
          %v975 = vpop.permute.xlu0 %974
          %v977 = vsel %vm731, %v975, %v709
          %v978 = vsel %vm733, %v977, %v723
          %v979 = vsel %vm735, %v978, %v726
          %v980 = vmul.f32 %v979, %v710
          %v982 = vsel %vm468, %v980, 0
          %984 = vmatprep.subr.mxu0 0.0
          %985 = vmatpush1.msra.mxu0 0.0
          %986 = vmatprep.subr.mxu0 0.0
          %987 = vmatpush1.msra.mxu0 0.0
          %988 = vmatprep.subr.mxu0 0.0
          %989 = vmatpush1.msra.mxu0 0.0
          %990 = vmatprep.subr.mxu0 0.0
          %991 = vmatpush1.msra.mxu0 0.0
          %992 = vmatprep.subr.mxu0 0.0
          %993 = vmatpush1.msra.mxu0 0.0
          %994 = vmatprep.subr.mxu0 0.0
          %995 = vmatpush1.msra.mxu0 0.0
          %996 = vmatprep.subr.mxu0 0.0
          %997 = vmatpush1.msra.mxu0 0.0
          %998 = vmatprep.subr.mxu0 0.0
          %999 = vmatpush1.msra.mxu0 0.0
          %1000 = vmatprep.subr.mxu0 0.0
          %1001 = vmatpush1.msra.mxu0 0.0
          %1002 = vmatprep.subr.mxu0 0.0
          %1003 = vmatpush1.msra.mxu0 0.0
          %1004 = vmatprep.subr.mxu0 0.0
          %1005 = vmatpush1.msra.mxu0 0.0
          %1006 = vmatprep.subr.mxu0 0.0
          %1007 = vmatpush1.msra.mxu0 0.0
          %1008 = vmatprep.subr.mxu0 0.0
          %1009 = vmatpush1.msra.mxu0 %v715
          %1010 = vmatprep.subr.mxu0 0.0
          %1011 = vmatpush1.msra.mxu0 %v714
          %1012 = vmatprep.subr.mxu0 0.0
          %1013 = vmatpush1.msra.mxu0 %v713
          %1014 = vmatprep.subr.mxu0 0.0
          %1015 = vmatpush1.msra.mxu0 %v712
          %1016 = vmatprep.subr.mxu0 0.0
          %1017 = vmatpush2.msra.mxu0 0.0
          %1018 = vmatprep.subr.mxu0 0.0
          %1019 = vmatpush2.msra.mxu0 0.0
          %1020 = vmatprep.subr.mxu0 0.0
          %1021 = vmatpush2.msra.mxu0 0.0
          %1022 = vmatprep.subr.mxu0 0.0
          %1023 = vmatpush2.msra.mxu0 0.0
          %1024 = vmatprep.subr.mxu0 0.0
          %1025 = vmatpush2.msra.mxu0 0.0
          %1026 = vmatprep.subr.mxu0 0.0
          %1027 = vmatpush2.msra.mxu0 0.0
          %1028 = vmatprep.subr.mxu0 0.0
          %1029 = vmatpush2.msra.mxu0 0.0
          %1030 = vmatprep.subr.mxu0 0.0
          %1031 = vmatpush2.msra.mxu0 0.0
          %1032 = vmatprep.subr.mxu0 0.0
          %1033 = vmatpush2.msra.mxu0 0.0
          %1034 = vmatprep.subr.mxu0 0.0
          %1035 = vmatpush2.msra.mxu0 0.0
          %1036 = vmatprep.subr.mxu0 0.0
          %1037 = vmatpush2.msra.mxu0 0.0
          %1038 = vmatprep.subr.mxu0 0.0
          %1039 = vmatpush2.msra.mxu0 0.0
          %1040 = vmatprep.subr.mxu0 0.0
          %1041 = vmatpush2.msra.mxu0 0.0
          %1042 = vmatprep.subr.mxu0 0.0
          %1043 = vmatpush2.msra.mxu0 0.0
          %1044 = vmatprep.subr.mxu0 0.0
          %1045 = vmatpush2.msra.mxu0 0.0
          %1046 = vmatprep.subr.mxu0 0.0
          %1047 = vmatpush2.msra.mxu0 0.0
          %1048 = vmatprep.mubr.f32.mxu0 0.0
          %1049 = vmatmul.mubr.f32.gmra.mxu0 %v982
          %v1050 = vpop.f32.mrf.mxu0
          %v1051 = vadd.f32 0.0, %v1050
          %v1052 = vpop.f32.mrf.mxu0
          %1053 = vdwg.mxu0
          %v1054 = vsel %vm811, %v1051, -inf
          %1055 = vmax.xlane.f32.xlu0 %v1054
          %v1056 = vpop.xlane.xlu0 %1055
          %v1057 = vsub.f32 %v1051, %v1056
          %v1058 = vmul.f32 %v1057, 1.442695
          %v1059 = vpow.pop %v1058
          %v1060 = vsel %vm811, %v1059, 0.0
          %1061 = vadd.xlane.f32.xlu0 %v1060
          %v1062 = vpop.xlane.xlu0 %1061
          %v1063 = vrcp.pop %v1062
          %v1064 = vmul.f32 %v1059, %v1063
          %v1066 = vsel %vm811, %v1064, 0
          %1068 = vmatprep.subr.mxu0 0.0
          %1069 = vmatpush1.msra.mxu0 0.0
          %1070 = vmatprep.subr.mxu0 0.0
          %1071 = vmatpush1.msra.mxu0 0.0
          %1072 = vmatprep.subr.mxu0 0.0
          %1073 = vmatpush1.msra.mxu0 0.0
          %1074 = vmatprep.subr.mxu0 0.0
          %1075 = vmatpush1.msra.mxu0 0.0
          %1076 = vmatprep.subr.mxu0 0.0
          %1077 = vmatpush1.msra.mxu0 0.0
          %1078 = vmatprep.subr.mxu0 0.0
          %1079 = vmatpush1.msra.mxu0 0.0
          %1080 = vmatprep.subr.mxu0 0.0
          %1081 = vmatpush1.msra.mxu0 0.0
          %1082 = vmatprep.subr.mxu0 0.0
          %1083 = vmatpush1.msra.mxu0 0.0
          %1084 = vmatprep.subr.mxu0 0.0
          %1085 = vmatpush1.msra.mxu0 0.0
          %1086 = vmatprep.subr.mxu0 0.0
          %1087 = vmatpush1.msra.mxu0 0.0
          %1088 = vmatprep.subr.mxu0 0.0
          %1089 = vmatpush1.msra.mxu0 0.0
          %1090 = vmatprep.subr.mxu0 0.0
          %1091 = vmatpush1.msra.mxu0 0.0
          %1092 = vmatprep.subr.mxu0 0.0
          %1093 = vmatpush1.msra.mxu0 0.0
          %1094 = vmatprep.subr.mxu0 0.0
          %1095 = vmatpush1.msra.mxu0 0.0
          %1096 = vmatprep.subr.mxu0 0.0
          %1097 = vmatpush1.msra.mxu0 0.0
          %1098 = vmatprep.subr.mxu0 0.0
          %1099 = vmatpush1.msra.mxu0 %v828
          %1100 = vmatprep.subr.mxu0 0.0
          %1101 = vmatpush2.msra.mxu0 0.0
          %1102 = vmatprep.subr.mxu0 0.0
          %1103 = vmatpush2.msra.mxu0 0.0
          %1104 = vmatprep.subr.mxu0 0.0
          %1105 = vmatpush2.msra.mxu0 0.0
          %1106 = vmatprep.subr.mxu0 0.0
          %1107 = vmatpush2.msra.mxu0 0.0
          %1108 = vmatprep.subr.mxu0 0.0
          %1109 = vmatpush2.msra.mxu0 0.0
          %1110 = vmatprep.subr.mxu0 0.0
          %1111 = vmatpush2.msra.mxu0 0.0
          %1112 = vmatprep.subr.mxu0 0.0
          %1113 = vmatpush2.msra.mxu0 0.0
          %1114 = vmatprep.subr.mxu0 0.0
          %1115 = vmatpush2.msra.mxu0 0.0
          %1116 = vmatprep.subr.mxu0 0.0
          %1117 = vmatpush2.msra.mxu0 0.0
          %1118 = vmatprep.subr.mxu0 0.0
          %1119 = vmatpush2.msra.mxu0 0.0
          %1120 = vmatprep.subr.mxu0 0.0
          %1121 = vmatpush2.msra.mxu0 0.0
          %1122 = vmatprep.subr.mxu0 0.0
          %1123 = vmatpush2.msra.mxu0 0.0
          %1124 = vmatprep.subr.mxu0 0.0
          %1125 = vmatpush2.msra.mxu0 0.0
          %1126 = vmatprep.subr.mxu0 0.0
          %1127 = vmatpush2.msra.mxu0 0.0
          %1128 = vmatprep.subr.mxu0 0.0
          %1129 = vmatpush2.msra.mxu0 0.0
          %1130 = vmatprep.subr.mxu0 0.0
          %1131 = vmatpush2.msra.mxu0 0.0
          %1132 = vmatprep.mubr.f32.mxu0 0.0
          %1133 = vmatmul.mubr.f32.gmra.mxu0 %v1066
          %v1134 = vpop.f32.mrf.mxu0
          %v1135 = vadd.f32 0.0, %v1134
          %v1136 = vpop.f32.mrf.mxu0
          %1137 = vdwg.mxu0
          %v1138 = vmul.f32 %v1135, %v711
          %v1140 = vsel %vm468, %v1138, 0
          %1142 = vmatprep.subr.mxu0 0.0
          %1143 = vmatpush1.msra.mxu0 0.0
          %1144 = vmatprep.subr.mxu0 0.0
          %1145 = vmatpush1.msra.mxu0 0.0
          %1146 = vmatprep.subr.mxu0 0.0
          %1147 = vmatpush1.msra.mxu0 0.0
          %1148 = vmatprep.subr.mxu0 0.0
          %1149 = vmatpush1.msra.mxu0 0.0
          %1150 = vmatprep.subr.mxu0 0.0
          %1151 = vmatpush1.msra.mxu0 0.0
          %1152 = vmatprep.subr.mxu0 0.0
          %1153 = vmatpush1.msra.mxu0 0.0
          %1154 = vmatprep.subr.mxu0 0.0
          %1155 = vmatpush1.msra.mxu0 0.0
          %1156 = vmatprep.subr.mxu0 0.0
          %1157 = vmatpush1.msra.mxu0 0.0
          %1158 = vmatprep.subr.mxu0 0.0
          %1159 = vmatpush1.msra.mxu0 0.0
          %1160 = vmatprep.subr.mxu0 0.0
          %1161 = vmatpush1.msra.mxu0 0.0
          %1162 = vmatprep.subr.mxu0 0.0
          %1163 = vmatpush1.msra.mxu0 0.0
          %1164 = vmatprep.subr.mxu0 0.0
          %1165 = vmatpush1.msra.mxu0 0.0
          %1166 = vmatprep.subr.mxu0 0.0
          %1167 = vmatpush1.msra.mxu0 %v720
          %1168 = vmatprep.subr.mxu0 0.0
          %1169 = vmatpush1.msra.mxu0 %v719
          %1170 = vmatprep.subr.mxu0 0.0
          %1171 = vmatpush1.msra.mxu0 %v718
          %1172 = vmatprep.subr.mxu0 0.0
          %1173 = vmatpush1.msra.mxu0 %v717
          %1174 = vmatprep.subr.mxu0 0.0
          %1175 = vmatpush2.msra.mxu0 0.0
          %1176 = vmatprep.subr.mxu0 0.0
          %1177 = vmatpush2.msra.mxu0 0.0
          %1178 = vmatprep.subr.mxu0 0.0
          %1179 = vmatpush2.msra.mxu0 0.0
          %1180 = vmatprep.subr.mxu0 0.0
          %1181 = vmatpush2.msra.mxu0 0.0
          %1182 = vmatprep.subr.mxu0 0.0
          %1183 = vmatpush2.msra.mxu0 0.0
          %1184 = vmatprep.subr.mxu0 0.0
          %1185 = vmatpush2.msra.mxu0 0.0
          %1186 = vmatprep.subr.mxu0 0.0
          %1187 = vmatpush2.msra.mxu0 0.0
          %1188 = vmatprep.subr.mxu0 0.0
          %1189 = vmatpush2.msra.mxu0 0.0
          %1190 = vmatprep.subr.mxu0 0.0
          %1191 = vmatpush2.msra.mxu0 0.0
          %1192 = vmatprep.subr.mxu0 0.0
          %1193 = vmatpush2.msra.mxu0 0.0
          %1194 = vmatprep.subr.mxu0 0.0
          %1195 = vmatpush2.msra.mxu0 0.0
          %1196 = vmatprep.subr.mxu0 0.0
          %1197 = vmatpush2.msra.mxu0 0.0
          %1198 = vmatprep.subr.mxu0 0.0
          %1199 = vmatpush2.msra.mxu0 0.0
          %1200 = vmatprep.subr.mxu0 0.0
          %1201 = vmatpush2.msra.mxu0 0.0
          %1202 = vmatprep.subr.mxu0 0.0
          %1203 = vmatpush2.msra.mxu0 0.0
          %1204 = vmatprep.subr.mxu0 0.0
          %1205 = vmatpush2.msra.mxu0 0.0
          %1206 = vmatprep.mubr.f32.mxu0 0.0
          %1207 = vmatmul.mubr.f32.gmra.mxu0 %v1140
          %v1208 = vpop.f32.mrf.mxu0
          %v1209 = vadd.f32 0.0, %v1208
          %v1210 = vpop.f32.mrf.mxu0
          %1211 = vdwg.mxu0
          %1212 = vrot.lane.b32.xlu0 %v709, 112
          %v1213 = vpop.permute.xlu0 %1212
          %v1215 = vsel %vm731, %v1213, %v975
          %v1216 = vsel %vm733, %v1215, %v709
          %v1217 = vsel %vm735, %v1216, %v723
          %v1218 = vmul.f32 %v1217, %v710
          %v1220 = vsel %vm468, %v1218, 0
          %1222 = vmatprep.subr.mxu0 0.0
          %1223 = vmatpush1.msra.mxu0 0.0
          %1224 = vmatprep.subr.mxu0 0.0
          %1225 = vmatpush1.msra.mxu0 0.0
          %1226 = vmatprep.subr.mxu0 0.0
          %1227 = vmatpush1.msra.mxu0 0.0
          %1228 = vmatprep.subr.mxu0 0.0
          %1229 = vmatpush1.msra.mxu0 0.0
          %1230 = vmatprep.subr.mxu0 0.0
          %1231 = vmatpush1.msra.mxu0 0.0
          %1232 = vmatprep.subr.mxu0 0.0
          %1233 = vmatpush1.msra.mxu0 0.0
          %1234 = vmatprep.subr.mxu0 0.0
          %1235 = vmatpush1.msra.mxu0 0.0
          %1236 = vmatprep.subr.mxu0 0.0
          %1237 = vmatpush1.msra.mxu0 0.0
          %1238 = vmatprep.subr.mxu0 0.0
          %1239 = vmatpush1.msra.mxu0 0.0
          %1240 = vmatprep.subr.mxu0 0.0
          %1241 = vmatpush1.msra.mxu0 0.0
          %1242 = vmatprep.subr.mxu0 0.0
          %1243 = vmatpush1.msra.mxu0 0.0
          %1244 = vmatprep.subr.mxu0 0.0
          %1245 = vmatpush1.msra.mxu0 0.0
          %1246 = vmatprep.subr.mxu0 0.0
          %1247 = vmatpush1.msra.mxu0 %v715
          %1248 = vmatprep.subr.mxu0 0.0
          %1249 = vmatpush1.msra.mxu0 %v714
          %1250 = vmatprep.subr.mxu0 0.0
          %1251 = vmatpush1.msra.mxu0 %v713
          %1252 = vmatprep.subr.mxu0 0.0
          %1253 = vmatpush1.msra.mxu0 %v712
          %1254 = vmatprep.subr.mxu0 0.0
          %1255 = vmatpush2.msra.mxu0 0.0
          %1256 = vmatprep.subr.mxu0 0.0
          %1257 = vmatpush2.msra.mxu0 0.0
          %1258 = vmatprep.subr.mxu0 0.0
          %1259 = vmatpush2.msra.mxu0 0.0
          %1260 = vmatprep.subr.mxu0 0.0
          %1261 = vmatpush2.msra.mxu0 0.0
          %1262 = vmatprep.subr.mxu0 0.0
          %1263 = vmatpush2.msra.mxu0 0.0
          %1264 = vmatprep.subr.mxu0 0.0
          %1265 = vmatpush2.msra.mxu0 0.0
          %1266 = vmatprep.subr.mxu0 0.0
          %1267 = vmatpush2.msra.mxu0 0.0
          %1268 = vmatprep.subr.mxu0 0.0
          %1269 = vmatpush2.msra.mxu0 0.0
          %1270 = vmatprep.subr.mxu0 0.0
          %1271 = vmatpush2.msra.mxu0 0.0
          %1272 = vmatprep.subr.mxu0 0.0
          %1273 = vmatpush2.msra.mxu0 0.0
          %1274 = vmatprep.subr.mxu0 0.0
          %1275 = vmatpush2.msra.mxu0 0.0
          %1276 = vmatprep.subr.mxu0 0.0
          %1277 = vmatpush2.msra.mxu0 0.0
          %1278 = vmatprep.subr.mxu0 0.0
          %1279 = vmatpush2.msra.mxu0 0.0
          %1280 = vmatprep.subr.mxu0 0.0
          %1281 = vmatpush2.msra.mxu0 0.0
          %1282 = vmatprep.subr.mxu0 0.0
          %1283 = vmatpush2.msra.mxu0 0.0
          %1284 = vmatprep.subr.mxu0 0.0
          %1285 = vmatpush2.msra.mxu0 0.0
          %1286 = vmatprep.mubr.f32.mxu0 0.0
          %1287 = vmatmul.mubr.f32.gmra.mxu0 %v1220
          %v1288 = vpop.f32.mrf.mxu0
          %v1289 = vadd.f32 0.0, %v1288
          %v1290 = vpop.f32.mrf.mxu0
          %1291 = vdwg.mxu0
          %v1292 = vsel %vm811, %v1289, -inf
          %1293 = vmax.xlane.f32.xlu0 %v1292
          %v1294 = vpop.xlane.xlu0 %1293
          %v1295 = vsub.f32 %v1289, %v1294
          %v1296 = vmul.f32 %v1295, 1.442695
          %v1297 = vpow.pop %v1296
          %v1298 = vsel %vm811, %v1297, 0.0
          %1299 = vadd.xlane.f32.xlu0 %v1298
          %v1300 = vpop.xlane.xlu0 %1299
          %v1301 = vrcp.pop %v1300
          %v1302 = vmul.f32 %v1297, %v1301
          %v1304 = vsel %vm811, %v1302, 0
          %1306 = vmatprep.subr.mxu0 0.0
          %1307 = vmatpush1.msra.mxu0 0.0
          %1308 = vmatprep.subr.mxu0 0.0
          %1309 = vmatpush1.msra.mxu0 0.0
          %1310 = vmatprep.subr.mxu0 0.0
          %1311 = vmatpush1.msra.mxu0 0.0
          %1312 = vmatprep.subr.mxu0 0.0
          %1313 = vmatpush1.msra.mxu0 0.0
          %1314 = vmatprep.subr.mxu0 0.0
          %1315 = vmatpush1.msra.mxu0 0.0
          %1316 = vmatprep.subr.mxu0 0.0
          %1317 = vmatpush1.msra.mxu0 0.0
          %1318 = vmatprep.subr.mxu0 0.0
          %1319 = vmatpush1.msra.mxu0 0.0
          %1320 = vmatprep.subr.mxu0 0.0
          %1321 = vmatpush1.msra.mxu0 0.0
          %1322 = vmatprep.subr.mxu0 0.0
          %1323 = vmatpush1.msra.mxu0 0.0
          %1324 = vmatprep.subr.mxu0 0.0
          %1325 = vmatpush1.msra.mxu0 0.0
          %1326 = vmatprep.subr.mxu0 0.0
          %1327 = vmatpush1.msra.mxu0 0.0
          %1328 = vmatprep.subr.mxu0 0.0
          %1329 = vmatpush1.msra.mxu0 0.0
          %1330 = vmatprep.subr.mxu0 0.0
          %1331 = vmatpush1.msra.mxu0 0.0
          %1332 = vmatprep.subr.mxu0 0.0
          %1333 = vmatpush1.msra.mxu0 0.0
          %1334 = vmatprep.subr.mxu0 0.0
          %1335 = vmatpush1.msra.mxu0 0.0
          %1336 = vmatprep.subr.mxu0 0.0
          %1337 = vmatpush1.msra.mxu0 %v828
          %1338 = vmatprep.subr.mxu0 0.0
          %1339 = vmatpush2.msra.mxu0 0.0
          %1340 = vmatprep.subr.mxu0 0.0
          %1341 = vmatpush2.msra.mxu0 0.0
          %1342 = vmatprep.subr.mxu0 0.0
          %1343 = vmatpush2.msra.mxu0 0.0
          %1344 = vmatprep.subr.mxu0 0.0
          %1345 = vmatpush2.msra.mxu0 0.0
          %1346 = vmatprep.subr.mxu0 0.0
          %1347 = vmatpush2.msra.mxu0 0.0
          %1348 = vmatprep.subr.mxu0 0.0
          %1349 = vmatpush2.msra.mxu0 0.0
          %1350 = vmatprep.subr.mxu0 0.0
          %1351 = vmatpush2.msra.mxu0 0.0
          %1352 = vmatprep.subr.mxu0 0.0
          %1353 = vmatpush2.msra.mxu0 0.0
          %1354 = vmatprep.subr.mxu0 0.0
          %1355 = vmatpush2.msra.mxu0 0.0
          %1356 = vmatprep.subr.mxu0 0.0
          %1357 = vmatpush2.msra.mxu0 0.0
          %1358 = vmatprep.subr.mxu0 0.0
          %1359 = vmatpush2.msra.mxu0 0.0
          %1360 = vmatprep.subr.mxu0 0.0
          %1361 = vmatpush2.msra.mxu0 0.0
          %1362 = vmatprep.subr.mxu0 0.0
          %1363 = vmatpush2.msra.mxu0 0.0
          %1364 = vmatprep.subr.mxu0 0.0
          %1365 = vmatpush2.msra.mxu0 0.0
          %1366 = vmatprep.subr.mxu0 0.0
          %1367 = vmatpush2.msra.mxu0 0.0
          %1368 = vmatprep.subr.mxu0 0.0
          %1369 = vmatpush2.msra.mxu0 0.0
          %1370 = vmatprep.mubr.f32.mxu0 0.0
          %1371 = vmatmul.mubr.f32.gmra.mxu0 %v1304
          %v1372 = vpop.f32.mrf.mxu0
          %v1373 = vadd.f32 0.0, %v1372
          %v1374 = vpop.f32.mrf.mxu0
          %1375 = vdwg.mxu0
          %v1376 = vmul.f32 %v1373, %v711
          %v1378 = vsel %vm468, %v1376, 0
          %1380 = vmatprep.subr.mxu0 0.0
          %1381 = vmatpush1.msra.mxu0 0.0
          %1382 = vmatprep.subr.mxu0 0.0
          %1383 = vmatpush1.msra.mxu0 0.0
          %1384 = vmatprep.subr.mxu0 0.0
          %1385 = vmatpush1.msra.mxu0 0.0
          %1386 = vmatprep.subr.mxu0 0.0
          %1387 = vmatpush1.msra.mxu0 0.0
          %1388 = vmatprep.subr.mxu0 0.0
          %1389 = vmatpush1.msra.mxu0 0.0
          %1390 = vmatprep.subr.mxu0 0.0
          %1391 = vmatpush1.msra.mxu0 0.0
          %1392 = vmatprep.subr.mxu0 0.0
          %1393 = vmatpush1.msra.mxu0 0.0
          %1394 = vmatprep.subr.mxu0 0.0
          %1395 = vmatpush1.msra.mxu0 0.0
          %1396 = vmatprep.subr.mxu0 0.0
          %1397 = vmatpush1.msra.mxu0 0.0
          %1398 = vmatprep.subr.mxu0 0.0
          %1399 = vmatpush1.msra.mxu0 0.0
          %1400 = vmatprep.subr.mxu0 0.0
          %1401 = vmatpush1.msra.mxu0 0.0
          %1402 = vmatprep.subr.mxu0 0.0
          %1403 = vmatpush1.msra.mxu0 0.0
          %1404 = vmatprep.subr.mxu0 0.0
          %1405 = vmatpush1.msra.mxu0 %v720
          %1406 = vmatprep.subr.mxu0 0.0
          %1407 = vmatpush1.msra.mxu0 %v719
          %1408 = vmatprep.subr.mxu0 0.0
          %1409 = vmatpush1.msra.mxu0 %v718
          %1410 = vmatprep.subr.mxu0 0.0
          %1411 = vmatpush1.msra.mxu0 %v717
          %1412 = vmatprep.subr.mxu0 0.0
          %1413 = vmatpush2.msra.mxu0 0.0
          %1414 = vmatprep.subr.mxu0 0.0
          %1415 = vmatpush2.msra.mxu0 0.0
          %1416 = vmatprep.subr.mxu0 0.0
          %1417 = vmatpush2.msra.mxu0 0.0
          %1418 = vmatprep.subr.mxu0 0.0
          %1419 = vmatpush2.msra.mxu0 0.0
          %1420 = vmatprep.subr.mxu0 0.0
          %1421 = vmatpush2.msra.mxu0 0.0
          %1422 = vmatprep.subr.mxu0 0.0
          %1423 = vmatpush2.msra.mxu0 0.0
          %1424 = vmatprep.subr.mxu0 0.0
          %1425 = vmatpush2.msra.mxu0 0.0
          %1426 = vmatprep.subr.mxu0 0.0
          %1427 = vmatpush2.msra.mxu0 0.0
          %1428 = vmatprep.subr.mxu0 0.0
          %1429 = vmatpush2.msra.mxu0 0.0
          %1430 = vmatprep.subr.mxu0 0.0
          %1431 = vmatpush2.msra.mxu0 0.0
          %1432 = vmatprep.subr.mxu0 0.0
          %1433 = vmatpush2.msra.mxu0 0.0
          %1434 = vmatprep.subr.mxu0 0.0
          %1435 = vmatpush2.msra.mxu0 0.0
          %1436 = vmatprep.subr.mxu0 0.0
          %1437 = vmatpush2.msra.mxu0 0.0
          %1438 = vmatprep.subr.mxu0 0.0
          %1439 = vmatpush2.msra.mxu0 0.0
          %1440 = vmatprep.subr.mxu0 0.0
          %1441 = vmatpush2.msra.mxu0 0.0
          %1442 = vmatprep.subr.mxu0 0.0
          %1443 = vmatpush2.msra.mxu0 0.0
          %1444 = vmatprep.mubr.f32.mxu0 0.0
          %1445 = vmatmul.mubr.f32.gmra.mxu0 %v1378
          %v1446 = vpop.f32.mrf.mxu0
          %v1447 = vadd.f32 0.0, %v1446
          %v1448 = vpop.f32.mrf.mxu0
          %1449 = vdwg.mxu0
          %1450 = vrot.lane.b32.xlu0 %v709, 104
          %v1451 = vpop.permute.xlu0 %1450
          %v1453 = vsel %vm731, %v1451, %v1213
          %v1454 = vsel %vm733, %v1453, %v975
          %v1455 = vsel %vm735, %v1454, %v709
          %v1456 = vmul.f32 %v1455, %v710
          %v1458 = vsel %vm468, %v1456, 0
          %1460 = vmatprep.subr.mxu0 0.0
          %1461 = vmatpush1.msra.mxu0 0.0
          %1462 = vmatprep.subr.mxu0 0.0
          %1463 = vmatpush1.msra.mxu0 0.0
          %1464 = vmatprep.subr.mxu0 0.0
          %1465 = vmatpush1.msra.mxu0 0.0
          %1466 = vmatprep.subr.mxu0 0.0
          %1467 = vmatpush1.msra.mxu0 0.0
          %1468 = vmatprep.subr.mxu0 0.0
          %1469 = vmatpush1.msra.mxu0 0.0
          %1470 = vmatprep.subr.mxu0 0.0
          %1471 = vmatpush1.msra.mxu0 0.0
          %1472 = vmatprep.subr.mxu0 0.0
          %1473 = vmatpush1.msra.mxu0 0.0
          %1474 = vmatprep.subr.mxu0 0.0
          %1475 = vmatpush1.msra.mxu0 0.0
          %1476 = vmatprep.subr.mxu0 0.0
          %1477 = vmatpush1.msra.mxu0 0.0
          %1478 = vmatprep.subr.mxu0 0.0
          %1479 = vmatpush1.msra.mxu0 0.0
          %1480 = vmatprep.subr.mxu0 0.0
          %1481 = vmatpush1.msra.mxu0 0.0
          %1482 = vmatprep.subr.mxu0 0.0
          %1483 = vmatpush1.msra.mxu0 0.0
          %1484 = vmatprep.subr.mxu0 0.0
          %1485 = vmatpush1.msra.mxu0 %v715
          %1486 = vmatprep.subr.mxu0 0.0
          %1487 = vmatpush1.msra.mxu0 %v714
          %1488 = vmatprep.subr.mxu0 0.0
          %1489 = vmatpush1.msra.mxu0 %v713
          %1490 = vmatprep.subr.mxu0 0.0
          %1491 = vmatpush1.msra.mxu0 %v712
          %1492 = vmatprep.subr.mxu0 0.0
          %1493 = vmatpush2.msra.mxu0 0.0
          %1494 = vmatprep.subr.mxu0 0.0
          %1495 = vmatpush2.msra.mxu0 0.0
          %1496 = vmatprep.subr.mxu0 0.0
          %1497 = vmatpush2.msra.mxu0 0.0
          %1498 = vmatprep.subr.mxu0 0.0
          %1499 = vmatpush2.msra.mxu0 0.0
          %1500 = vmatprep.subr.mxu0 0.0
          %1501 = vmatpush2.msra.mxu0 0.0
          %1502 = vmatprep.subr.mxu0 0.0
          %1503 = vmatpush2.msra.mxu0 0.0
          %1504 = vmatprep.subr.mxu0 0.0
          %1505 = vmatpush2.msra.mxu0 0.0
          %1506 = vmatprep.subr.mxu0 0.0
          %1507 = vmatpush2.msra.mxu0 0.0
          %1508 = vmatprep.subr.mxu0 0.0
          %1509 = vmatpush2.msra.mxu0 0.0
          %1510 = vmatprep.subr.mxu0 0.0
          %1511 = vmatpush2.msra.mxu0 0.0
          %1512 = vmatprep.subr.mxu0 0.0
          %1513 = vmatpush2.msra.mxu0 0.0
          %1514 = vmatprep.subr.mxu0 0.0
          %1515 = vmatpush2.msra.mxu0 0.0
          %1516 = vmatprep.subr.mxu0 0.0
          %1517 = vmatpush2.msra.mxu0 0.0
          %1518 = vmatprep.subr.mxu0 0.0
          %1519 = vmatpush2.msra.mxu0 0.0
          %1520 = vmatprep.subr.mxu0 0.0
          %1521 = vmatpush2.msra.mxu0 0.0
          %1522 = vmatprep.subr.mxu0 0.0
          %1523 = vmatpush2.msra.mxu0 0.0
          %1524 = vmatprep.mubr.f32.mxu0 0.0
          %1525 = vmatmul.mubr.f32.gmra.mxu0 %v1458
          %v1526 = vpop.f32.mrf.mxu0
          %v1527 = vadd.f32 0.0, %v1526
          %v1528 = vpop.f32.mrf.mxu0
          %1529 = vdwg.mxu0
          %v1530 = vsel %vm811, %v1527, -inf
          %1531 = vmax.xlane.f32.xlu0 %v1530
          %v1532 = vpop.xlane.xlu0 %1531
          %v1533 = vsub.f32 %v1527, %v1532
          %v1534 = vmul.f32 %v1533, 1.442695
          %v1535 = vpow.pop %v1534
          %v1536 = vsel %vm811, %v1535, 0.0
          %1537 = vadd.xlane.f32.xlu0 %v1536
          %v1538 = vpop.xlane.xlu0 %1537
          %v1539 = vrcp.pop %v1538
          %v1540 = vmul.f32 %v1535, %v1539
          %v1542 = vsel %vm811, %v1540, 0
          %1544 = vmatprep.subr.mxu0 0.0
          %1545 = vmatpush1.msra.mxu0 0.0
          %1546 = vmatprep.subr.mxu0 0.0
          %1547 = vmatpush1.msra.mxu0 0.0
          %1548 = vmatprep.subr.mxu0 0.0
          %1549 = vmatpush1.msra.mxu0 0.0
          %1550 = vmatprep.subr.mxu0 0.0
          %1551 = vmatpush1.msra.mxu0 0.0
          %1552 = vmatprep.subr.mxu0 0.0
          %1553 = vmatpush1.msra.mxu0 0.0
          %1554 = vmatprep.subr.mxu0 0.0
          %1555 = vmatpush1.msra.mxu0 0.0
          %1556 = vmatprep.subr.mxu0 0.0
          %1557 = vmatpush1.msra.mxu0 0.0
          %1558 = vmatprep.subr.mxu0 0.0
          %1559 = vmatpush1.msra.mxu0 0.0
          %1560 = vmatprep.subr.mxu0 0.0
          %1561 = vmatpush1.msra.mxu0 0.0
          %1562 = vmatprep.subr.mxu0 0.0
          %1563 = vmatpush1.msra.mxu0 0.0
          %1564 = vmatprep.subr.mxu0 0.0
          %1565 = vmatpush1.msra.mxu0 0.0
          %1566 = vmatprep.subr.mxu0 0.0
          %1567 = vmatpush1.msra.mxu0 0.0
          %1568 = vmatprep.subr.mxu0 0.0
          %1569 = vmatpush1.msra.mxu0 0.0
          %1570 = vmatprep.subr.mxu0 0.0
          %1571 = vmatpush1.msra.mxu0 0.0
          %1572 = vmatprep.subr.mxu0 0.0
          %1573 = vmatpush1.msra.mxu0 0.0
          %1574 = vmatprep.subr.mxu0 0.0
          %1575 = vmatpush1.msra.mxu0 %v828
          %1576 = vmatprep.subr.mxu0 0.0
          %1577 = vmatpush2.msra.mxu0 0.0
          %1578 = vmatprep.subr.mxu0 0.0
          %1579 = vmatpush2.msra.mxu0 0.0
          %1580 = vmatprep.subr.mxu0 0.0
          %1581 = vmatpush2.msra.mxu0 0.0
          %1582 = vmatprep.subr.mxu0 0.0
          %1583 = vmatpush2.msra.mxu0 0.0
          %1584 = vmatprep.subr.mxu0 0.0
          %1585 = vmatpush2.msra.mxu0 0.0
          %1586 = vmatprep.subr.mxu0 0.0
          %1587 = vmatpush2.msra.mxu0 0.0
          %1588 = vmatprep.subr.mxu0 0.0
          %1589 = vmatpush2.msra.mxu0 0.0
          %1590 = vmatprep.subr.mxu0 0.0
          %1591 = vmatpush2.msra.mxu0 0.0
          %1592 = vmatprep.subr.mxu0 0.0
          %1593 = vmatpush2.msra.mxu0 0.0
          %1594 = vmatprep.subr.mxu0 0.0
          %1595 = vmatpush2.msra.mxu0 0.0
          %1596 = vmatprep.subr.mxu0 0.0
          %1597 = vmatpush2.msra.mxu0 0.0
          %1598 = vmatprep.subr.mxu0 0.0
          %1599 = vmatpush2.msra.mxu0 0.0
          %1600 = vmatprep.subr.mxu0 0.0
          %1601 = vmatpush2.msra.mxu0 0.0
          %1602 = vmatprep.subr.mxu0 0.0
          %1603 = vmatpush2.msra.mxu0 0.0
          %1604 = vmatprep.subr.mxu0 0.0
          %1605 = vmatpush2.msra.mxu0 0.0
          %1606 = vmatprep.subr.mxu0 0.0
          %1607 = vmatpush2.msra.mxu0 0.0
          %1608 = vmatprep.mubr.f32.mxu0 0.0
          %1609 = vmatmul.mubr.f32.gmra.mxu0 %v1542
          %v1610 = vpop.f32.mrf.mxu0
          %v1611 = vadd.f32 0.0, %v1610
          %v1612 = vpop.f32.mrf.mxu0
          %1613 = vdwg.mxu0
          %v1614 = vmul.f32 %v1611, %v711
          %v1616 = vsel %vm468, %v1614, 0
          %1618 = vmatprep.subr.mxu0 0.0
          %1619 = vmatpush1.msra.mxu0 0.0
          %1620 = vmatprep.subr.mxu0 0.0
          %1621 = vmatpush1.msra.mxu0 0.0
          %1622 = vmatprep.subr.mxu0 0.0
          %1623 = vmatpush1.msra.mxu0 0.0
          %1624 = vmatprep.subr.mxu0 0.0
          %1625 = vmatpush1.msra.mxu0 0.0
          %1626 = vmatprep.subr.mxu0 0.0
          %1627 = vmatpush1.msra.mxu0 0.0
          %1628 = vmatprep.subr.mxu0 0.0
          %1629 = vmatpush1.msra.mxu0 0.0
          %1630 = vmatprep.subr.mxu0 0.0
          %1631 = vmatpush1.msra.mxu0 0.0
          %1632 = vmatprep.subr.mxu0 0.0
          %1633 = vmatpush1.msra.mxu0 0.0
          %1634 = vmatprep.subr.mxu0 0.0
          %1635 = vmatpush1.msra.mxu0 0.0
          %1636 = vmatprep.subr.mxu0 0.0
          %1637 = vmatpush1.msra.mxu0 0.0
          %1638 = vmatprep.subr.mxu0 0.0
          %1639 = vmatpush1.msra.mxu0 0.0
          %1640 = vmatprep.subr.mxu0 0.0
          %1641 = vmatpush1.msra.mxu0 0.0
          %1642 = vmatprep.subr.mxu0 0.0
          %1643 = vmatpush1.msra.mxu0 %v720
          %1644 = vmatprep.subr.mxu0 0.0
          %1645 = vmatpush1.msra.mxu0 %v719
          %1646 = vmatprep.subr.mxu0 0.0
          %1647 = vmatpush1.msra.mxu0 %v718
          %1648 = vmatprep.subr.mxu0 0.0
          %1649 = vmatpush1.msra.mxu0 %v717
          %1650 = vmatprep.subr.mxu0 0.0
          %1651 = vmatpush2.msra.mxu0 0.0
          %1652 = vmatprep.subr.mxu0 0.0
          %1653 = vmatpush2.msra.mxu0 0.0
          %1654 = vmatprep.subr.mxu0 0.0
          %1655 = vmatpush2.msra.mxu0 0.0
          %1656 = vmatprep.subr.mxu0 0.0
          %1657 = vmatpush2.msra.mxu0 0.0
          %1658 = vmatprep.subr.mxu0 0.0
          %1659 = vmatpush2.msra.mxu0 0.0
          %1660 = vmatprep.subr.mxu0 0.0
          %1661 = vmatpush2.msra.mxu0 0.0
          %1662 = vmatprep.subr.mxu0 0.0
          %1663 = vmatpush2.msra.mxu0 0.0
          %1664 = vmatprep.subr.mxu0 0.0
          %1665 = vmatpush2.msra.mxu0 0.0
          %1666 = vmatprep.subr.mxu0 0.0
          %1667 = vmatpush2.msra.mxu0 0.0
          %1668 = vmatprep.subr.mxu0 0.0
          %1669 = vmatpush2.msra.mxu0 0.0
          %1670 = vmatprep.subr.mxu0 0.0
          %1671 = vmatpush2.msra.mxu0 0.0
          %1672 = vmatprep.subr.mxu0 0.0
          %1673 = vmatpush2.msra.mxu0 0.0
          %1674 = vmatprep.subr.mxu0 0.0
          %1675 = vmatpush2.msra.mxu0 0.0
          %1676 = vmatprep.subr.mxu0 0.0
          %1677 = vmatpush2.msra.mxu0 0.0
          %1678 = vmatprep.subr.mxu0 0.0
          %1679 = vmatpush2.msra.mxu0 0.0
          %1680 = vmatprep.subr.mxu0 0.0
          %1681 = vmatpush2.msra.mxu0 0.0
          %1682 = vmatprep.mubr.f32.mxu0 0.0
          %1683 = vmatmul.mubr.f32.gmra.mxu0 %v1616
          %v1684 = vpop.f32.mrf.mxu0
          %v1685 = vadd.f32 0.0, %v1684
          %v1686 = vpop.f32.mrf.mxu0
          %1687 = vdwg.mxu0
          %1688 = vst.msk [vmem:[%s406] sm:$0xff] %vm731, %v971
          %1689 = vst.msk [vmem:[%s406 + $0x8] sm:$0xff] %vm731, %v1209
          %1690 = vst.msk [vmem:[%s406 + $0x10] sm:$0xff] %vm731, %v1447
          %1691 = vst.msk [vmem:[%s406 + $0x18] sm:$0xff] %vm731, %v1685
        $region64: #{tpu_custom_call.1} parent=51 // pred_fallthru
          _
        %s1692 = sand.u32 %s247, 1
        %s1693 = scalar_lea.sflag [#allocation7], %s1692
        %s1694 = sand.u32 %s247, 1
        %s1695 = smul.addr %s1694, 32
        %s1696 = scalar_lea.vmem [#allocation8], %s1695
        // Predicated region
        $region65: #{tpu_custom_call.1} parent=51 // pred_check
          %p1697 = pneg %p257
        $region66: #{tpu_custom_call.1} parent=51 // pred_check_branch
          %1699 = sbr.rel (%p1697) target = $region68
        $region67: #{tpu_custom_call.1} parent=51 // pred_region
          %s1701 = ssub.s32 512, 512
          %1702 = vsyncadd %s1693, %s1701
          %s1703 = smul.addr %s28, 4
          %s1704 = sadd.s32 %s29, %s1703
          %s1705 = smul.addr %s1704, 128
          %s1706 = scalar_lea.hbm %s8, %s1705
          %s1707 = sshll.u32 %s1696, 4
          %s1708 = int_to_ptr.vmem [resolvable:$true] %s1707
          %1713 = dma.vmem_to_hbm [thread:$0]  %s1708, 512, %s1706, %s1693, 128, 128, 8
        $region68: #{tpu_custom_call.1} parent=51 // pred_fallthru
          _
      $region52: #{tpu_custom_call.1} parent=5 // pred_fallthru
        _
      %p1714 = scmp.le.s32.totalorder 2, %s18
      // Predicated region
      $region69: #{tpu_custom_call.1} parent=5 // pred_check
        %p1715 = pneg %p1714
      $region70: #{tpu_custom_call.1} parent=5 // pred_check_branch
        %1717 = sbr.rel (%p1715) target = $region72
      $region71: #{tpu_custom_call.1} parent=5 // pred_region
        %s1718 = ssub.s32 %s18, 2
        // Predicated region
        $region73: #{tpu_custom_call.1} parent=71 // pred_check
          %p1719 = pneg %p263
        $region74: #{tpu_custom_call.1} parent=71 // pred_check_branch
          %1721 = sbr.rel (%p1719) target = $region76
        $region75: #{tpu_custom_call.1} parent=71 // pred_region
          %s1722 = sand.u32 %s248, 1
          %s1723 = scalar_lea.sflag [#allocation7], %s1722
          %s1724 = sand.u32 %s248, 1
          %s1725 = smul.addr %s1724, 32
          %s1726 = scalar_lea.vmem [#allocation8], %s1725
          %1727 = dma.done %s1723, 512
        $region76: #{tpu_custom_call.1} parent=71 // pred_fallthru
          _
      $region72: #{tpu_custom_call.1} parent=5 // pred_fallthru
        _
    $region6: #{tpu_custom_call.1} parent=1 // loop_footer
      %s22 = sadd.s32 1, %s18
    $region7: #{tpu_custom_call.1} parent=1 // loop_footer_branch
      %17 = sbr.rel target = $region3
    $region8: #{tpu_custom_call.1} parent=1 // loop_exit
      _
    %1728 = vsyncpa [#allocation6], 1
    %s1729 = scalar_lea.sflag [#allocation6], 1
    %1730 = vsyncpa %s1729, 1
    %1731 = vsyncpa [#allocation7], 1
    %s1732 = scalar_lea.sflag [#allocation7], 1
    %1733 = vsyncpa %s1732, 1

</llo_original>
